<compile_context>
chip_gen: v7x
topology: tpu7x:2x2x1
jax: 0.10.0
libtpu: 0.0.40
codegen_flags: <defaults>
</compile_context>

<pallas_src>
import functools

import jax
import jax.numpy as jnp
from jax.experimental import pallas as pl
from jax.experimental.pallas import tpu as pltpu


# ------------------------------ fused kernel --------------------------------

def _fused_forward_kernel(
    # runtime inputs
    x_ref,        # (B, L, Fin)   raw patches
    mcol_ref,     # (B*L, 1)      mask column (float)
    # packed parameters
    tab_ref,      # (rows, D)     row table: biases/LN params + poscls + pe_w
    wqkv_ref,     # (depth, D, 3*I)   fused Q|K|V (bias-free)
    wo_ref,       # (depth, I, D)
    w1b_ref,      # (depth, D+8, Dff) rows 0..D-1 = w1, row D = b1
    w2_ref,       # (depth, Dff, D)
    # output
    o_ref,        # (B, Np, D)    full padded block (sliced outside)
    # scratch
    hpad_ref,     # (B, Np, D)    VMEM scratch for the padded token layout
    *, B, L, Np, D, H, Dh, depth, Fin, pos_row, pew_row, n_keys, scale, eps):
  f32 = jnp.float32
  I = H * Dh                      # attention inner dim (== D here)
  N2 = B * Np

  def row(r):                     # one (1, D) row of the packed table
    return tab_ref[r:r + 1, :]

  def layernorm(x2, g, b):
    mu = jnp.mean(x2, axis=-1, keepdims=True)
    var = jnp.mean(jnp.square(x2 - mu), axis=-1, keepdims=True)
    return (x2 - mu) * jax.lax.rsqrt(var + eps) * g + b

  # ---- patch_embed + mask-token mixing (data rows only) --------------------
  x2 = x_ref[...].reshape(B * L, Fin)
  xe = jnp.dot(x2, tab_ref[pew_row:pew_row + Fin, :],
               preferred_element_type=f32) + row(0)               # + pe_b
  w = mcol_ref[...]                                               # (B*L, 1)
  hd = xe * (1.0 - w) + row(1) * w                                # mask_token mix

  # ---- padded token layout: data rows 0..L-1, cls at row L, zeros after ----
  hpad_ref[:, 0:L, :] = hd.reshape(B, L, D)
  hpad_ref[:, L:Np, :] = jnp.zeros((B, Np - L, D), f32)
  poscls = tab_ref[pos_row:pos_row + Np, :]                       # (Np, D)
  h = (hpad_ref[...] + poscls[None, :, :]).reshape(N2, D)
  # emb_dropout(p=0) -> identity

  # additive key-validity bias over the padded token axis (keys 0..L valid)
  kidx = jax.lax.broadcasted_iota(jnp.int32, (1, Np), 1)
  kbias = jnp.where(kidx < n_keys, jnp.float32(0.0), jnp.float32(-1e30))

  for l in range(depth):          # layer pattern per depth step: ('a', 'f')
    base = 4 + 6 * l
    # ------------------------------ attention ------------------------------
    xn = layernorm(h, row(base + 0), row(base + 1))
    qkv = jnp.dot(xn, wqkv_ref[l], preferred_element_type=f32)    # (N2, 3I)
    wo_l = wo_ref[l]                                              # (I, D)
    attn_out = jnp.zeros((N2, D), f32)
    for hh in range(H):           # heads unrolled; slice straight from 2-D qkv
      q_h = qkv[:, hh * Dh:(hh + 1) * Dh].reshape(B, Np, Dh)
      k_h = qkv[:, I + hh * Dh:I + (hh + 1) * Dh].reshape(B, Np, Dh)
      v_h = qkv[:, 2 * I + hh * Dh:2 * I + (hh + 1) * Dh].reshape(B, Np, Dh)
      # contract last axes directly -> no explicit K transpose
      s = jnp.einsum('bqd,bkd->bqk', q_h, k_h,
                     preferred_element_type=f32) * scale + kbias  # (B, Np, Np)
      m = jnp.max(s, axis=-1, keepdims=True)
      p = jnp.exp(s - m)
      p = p / jnp.sum(p, axis=-1, keepdims=True)                  # softmax
      oh = jnp.einsum('bqk,bkd->bqd', p, v_h,
                      preferred_element_type=f32)                 # (B, Np, Dh)
      # per-head slice of the output projection -> no head concat needed
      attn_out = attn_out + jnp.dot(oh.reshape(N2, Dh),
                                    wo_l[hh * Dh:(hh + 1) * Dh, :],
                                    preferred_element_type=f32)
    attn_out = attn_out + row(base + 2)                           # + bo
    # Reference AttentionLayers reassigns x = norm(x) before the block, so
    # the residual is taken from the *normed* input (verified vs net_A.py).
    h = xn + attn_out

    # ---------------------------- feed-forward -----------------------------
    xn = layernorm(h, row(base + 3), row(base + 4))
    w1b_l = w1b_ref[l]                                            # (D+8, Dff)
    u = jnp.dot(xn, w1b_l[0:D, :], preferred_element_type=f32) + w1b_l[D:D + 1, :]
    u = 0.5 * u * (1.0 + jax.lax.erf(u * 0.7071067811865476))     # exact GELU
    # FeedForward's Dropout(0.2) is identity in inference mode.
    ff = jnp.dot(u, w2_ref[l], preferred_element_type=f32) + row(base + 5)
    h = xn + ff

  # ------------------- final LayerNorm, full padded store -------------------
  h = layernorm(h, row(2), row(3))
  o_ref[...] = h.reshape(B, Np, D).astype(o_ref.dtype)


# ------------------------------- wrapper -------------------------------------

def _full_block_spec(arr):
  nd = arr.ndim
  return pl.BlockSpec(arr.shape, lambda i, nd=nd: (0,) * nd)


def _table_offsets(depth, Np):
  scalar_rows = 4 + 6 * depth                 # pe_b, mtok, fin_g, fin_b + per-layer
  pos_row = ((scalar_rows + 7) // 8) * 8      # keep poscls / pe_w sublane-aligned
  pew_row = pos_row + Np
  return pos_row, pew_row


def dtransformer_for_spatial_forward(x, mask, prep, *, B, L, D, H, Dh, depth,
                                     Np, Fin):
  """Masked forward path of Dtransformer_for_spatial as one fused Pallas call."""
  f32 = jnp.float32
  pos_row, pew_row = _table_offsets(depth, Np)

  # Only trivial host-side prep: cast mask to float and view it as a column.
  mcol = mask.astype(f32).reshape(B * L, 1)
  args = (x.astype(f32), mcol, prep['tab'], prep['wqkv'], prep['wo'],
          prep['w1b'], prep['w2'])

  # Advisory cost estimate (keeps XLA from serializing around a tiny call).
  I = H * Dh
  N2 = B * Np
  Dff = int(prep['w2'].shape[1])
  flops = (2 * B * L * Fin * D
           + depth * (2 * N2 * D * 3 * I          # fused qkv
                      + 2 * 2 * B * Np * Np * I   # scores + attn*V
                      + 2 * N2 * I * D            # out proj
                      + 2 * N2 * D * Dff          # ff1
                      + 2 * N2 * Dff * D))        # ff2
  transcendentals = depth * (B * Np * Np * H + N2 * Dff) + N2 * (2 * depth + 1)
  bytes_accessed = (sum(int(a.size) * a.dtype.itemsize for a in args)
                    + N2 * D * 4)

  kernel = functools.partial(
      _fused_forward_kernel, B=B, L=L, Np=Np, D=D, H=H, Dh=Dh, depth=depth,
      Fin=Fin, pos_row=pos_row, pew_row=pew_row,
      n_keys=L + 1, scale=float(Dh) ** -0.5, eps=1e-5)

  # grid=(1,): at this size per-grid-step overhead exceeds per-batch compute.
  # For large batches, split B over the grid with
  # dimension_semantics=("parallel",) to use both v7x TensorCores.
  full = pl.pallas_call(
      kernel,
      out_shape=jax.ShapeDtypeStruct((B, Np, D), f32),
      grid=(1,),
      in_specs=[_full_block_spec(a) for a in args],
      out_specs=pl.BlockSpec((B, Np, D), lambda i: (0, 0, 0)),
      scratch_shapes=[pltpu.VMEM((B, Np, D), f32)],
      compiler_params=pltpu.CompilerParams(dimension_semantics=("arbitrary",)),
      cost_estimate=pl.CostEstimate(flops=flops,
                                    transcendentals=transcendentals,
                                    bytes_accessed=bytes_accessed),
  )(*args)
  # Data tokens live in padded rows 0..L-1 (cls was placed at row L).
  return full[:, 0:L, :]


# ------------------------------ parameters -----------------------------------

def init_params(key, *, in_feat, dim, heads, dim_head, depth, ff_mult, n_tokens):
  inner = heads * dim_head
  ff_inner = dim * ff_mult
  ks = iter(jax.random.split(key, 16))

  def nrm(shape, std=0.02):
    return jax.random.normal(next(ks), shape, jnp.float32) * std

  return {
      'pe_w': nrm((in_feat, dim)),                       # patch_embed.proj
      'pe_b': jnp.zeros((1, dim), jnp.float32),
      'mask_token': nrm((1, dim)),
      'cls_token': nrm((1, dim)),
      'pos_embedding': nrm((n_tokens, dim)),             # (L+1, D), row 0 = cls pos
      'a_ln_g': jnp.ones((depth, 1, dim), jnp.float32),
      'a_ln_b': jnp.zeros((depth, 1, dim), jnp.float32),
      'wqkv': nrm((depth, dim, 3 * inner)),              # fused to_q|to_k|to_v
      'wo': nrm((depth, inner, dim)),
      'bo': jnp.zeros((depth, 1, dim), jnp.float32),
      'f_ln_g': jnp.ones((depth, 1, dim), jnp.float32),
      'f_ln_b': jnp.zeros((depth, 1, dim), jnp.float32),
      'w1': nrm((depth, dim, ff_inner)),
      'b1': jnp.zeros((depth, 1, ff_inner), jnp.float32),
      'w2': nrm((depth, ff_inner, dim)),
      'b2': jnp.zeros((depth, 1, dim), jnp.float32),
      'fin_g': jnp.ones((1, dim), jnp.float32),
      'fin_b': jnp.zeros((1, dim), jnp.float32),
  }


def prepare_inputs(params, *, L, Np, D, Fin, depth):
  """One-time packing of all parameters into 5 kernel operands:
  a single (rows, D) table (biases, LayerNorm params, pos+cls fold, pe_w),
  the fused qkv / output-proj / ff weight stacks (b1 stacked under w1)."""
  f32 = jnp.float32
  pos_row, pew_row = _table_offsets(depth, Np)
  total_rows = pew_row + Fin

  tab = jnp.zeros((total_rows, D), f32)
  tab = tab.at[0].set(params['pe_b'][0])
  tab = tab.at[1].set(params['mask_token'][0])
  tab = tab.at[2].set(params['fin_g'][0])
  tab = tab.at[3].set(params['fin_b'][0])
  for l in range(depth):
    b = 4 + 6 * l
    tab = tab.at[b + 0].set(params['a_ln_g'][l, 0])
    tab = tab.at[b + 1].set(params['a_ln_b'][l, 0])
    tab = tab.at[b + 2].set(params['bo'][l, 0])
    tab = tab.at[b + 3].set(params['f_ln_g'][l, 0])
    tab = tab.at[b + 4].set(params['f_ln_b'][l, 0])
    tab = tab.at[b + 5].set(params['b2'][l, 0])

  # poscls: data tokens get pos rows 1..L; cls slot (padded row L) gets
  # pos row 0 + cls_token; remaining padded rows stay zero.
  pos = params['pos_embedding']            # (L+1, D)
  cls = params['cls_token']                # (1, D)
  poscls = jnp.zeros((Np, D), f32)
  poscls = poscls.at[0:L].set(pos[1:1 + L])
  poscls = poscls.at[L].set(pos[0] + cls[0])
  tab = tab.at[pos_row:pos_row + Np].set(poscls)
  tab = tab.at[pew_row:pew_row + Fin].set(params['pe_w'])

  # w1 with its bias stacked underneath (row D = b1, rows D+1..D+7 = 0 pad).
  Dff = params['w1'].shape[-1]
  w1b = jnp.zeros((depth, D + 8, Dff), f32)
  w1b = w1b.at[:, 0:D, :].set(params['w1'])
  w1b = w1b.at[:, D, :].set(params['b1'][:, 0, :])

  return {
      'tab': tab,
      'wqkv': params['wqkv'],
      'wo': params['wo'],
      'w1b': w1b,
      'w2': params['w2'],
  }


# --------------------------------- main ---------------------------------------

if __name__ == "__main__":
  B = 2
  in_chans, mask_patch_size, patch_size = 8, 1, 4
  L = in_chans // mask_patch_size            # 8 data tokens
  Fin = patch_size ** 2 * mask_patch_size    # 16 = PatchEmbed in_dim
  D = 32                                     # patch_dim == dim (needed for cls cat)
  heads, dim_head, depth, ff_mult = 2, 16, 2, 4
  Np = 16                                    # token axis padded 9 -> 16

  key = jax.random.PRNGKey(0)
  kx, km, kp = jax.random.split(key, 3)
  x = jax.random.normal(kx, (B, L, Fin), jnp.float32)
  mask = (jax.random.uniform(km, (B, L)) > 0.5).astype(jnp.float32)

  params = init_params(kp, in_feat=Fin, dim=D, heads=heads, dim_head=dim_head,
                       depth=depth, ff_mult=ff_mult, n_tokens=L + 1)
  prep = prepare_inputs(params, L=L, Np=Np, D=D, Fin=Fin, depth=depth)

  fwd = jax.jit(functools.partial(
      dtransformer_for_spatial_forward,
      B=B, L=L, D=D, H=heads, Dh=dim_head, depth=depth, Np=Np, Fin=Fin))

  out = fwd(x, mask, prep)
  jax.block_until_ready(out)
  assert out.shape == (B, L, D), out.shape
  assert bool(jnp.all(jnp.isfinite(out)))
  print("KERNEL_OK")
</pallas_src>

<mosaic_0001>
module attributes {stable_mosaic.version = 11 : i64} {
  func.func @_fused_forward_kernel(%arg0: i32, %arg1: memref<2x8x16xf32, #tpu.memory_space<vmem>>, %arg2: memref<16x1xf32, #tpu.memory_space<vmem>>, %arg3: memref<48x32xf32, #tpu.memory_space<vmem>>, %arg4: memref<2x32x96xf32, #tpu.memory_space<vmem>>, %arg5: memref<2x32x32xf32, #tpu.memory_space<vmem>>, %arg6: memref<2x40x128xf32, #tpu.memory_space<vmem>>, %arg7: memref<2x128x32xf32, #tpu.memory_space<vmem>>, %arg8: memref<2x16x32xf32, #tpu.memory_space<vmem>>, %arg9: memref<2x16x32xf32, #tpu.memory_space<vmem>>) attributes {dimension_semantics = [#tpu.dimension_semantics<arbitrary>], iteration_bounds = array<i64: 1>, scalar_prefetch = 0 : i64, scratch_operands = 1 : i64, tpu.core_type = #tpu.core_type<tc>, window_params = [{pipeline_mode = #tpu.pipeline_mode<synchronous>, transform_indices = @transform_0, window_bounds = array<i64: 2, 8, 16>}, {pipeline_mode = #tpu.pipeline_mode<synchronous>, transform_indices = @transform_1, window_bounds = array<i64: 16, 1>}, {pipeline_mode = #tpu.pipeline_mode<synchronous>, transform_indices = @transform_2, window_bounds = array<i64: 48, 32>}, {pipeline_mode = #tpu.pipeline_mode<synchronous>, transform_indices = @transform_3, window_bounds = array<i64: 2, 32, 96>}, {pipeline_mode = #tpu.pipeline_mode<synchronous>, transform_indices = @transform_4, window_bounds = array<i64: 2, 32, 32>}, {pipeline_mode = #tpu.pipeline_mode<synchronous>, transform_indices = @transform_5, window_bounds = array<i64: 2, 40, 128>}, {pipeline_mode = #tpu.pipeline_mode<synchronous>, transform_indices = @transform_6, window_bounds = array<i64: 2, 128, 32>}, {pipeline_mode = #tpu.pipeline_mode<synchronous>, transform_indices = @transform_7, window_bounds = array<i64: 2, 16, 32>}]} {
    %c0 = arith.constant 0 : index
    %c0_0 = arith.constant 0 : index
    %c0_1 = arith.constant 0 : index
    %0 = vector.load %arg1[%c0, %c0_0, %c0_1] : memref<2x8x16xf32, #tpu.memory_space<vmem>>, vector<2x8x16xf32>
    %1 = vector.shape_cast %0 : vector<2x8x16xf32> to vector<16x16xf32>
    %c32 = arith.constant 32 : index
    %c0_2 = arith.constant 0 : index
    %2 = vector.load %arg3[%c32, %c0_2] : memref<48x32xf32, #tpu.memory_space<vmem>>, vector<16x32xf32>
    %cst = arith.constant dense<0.000000e+00> : vector<16x32xf32>
    %3 = tpu.matmul %1, %2, %cst {dimension_numbers = #tpu.dot_dimension_numbers<[1], [0], [0], [1], [0, 0, 1, 1], [], []>} : vector<16x16xf32>, vector<16x32xf32>, vector<16x32xf32> -> vector<16x32xf32>
    %c0_3 = arith.constant 0 : index
    %c0_4 = arith.constant 0 : index
    %4 = vector.load %arg3[%c0_3, %c0_4] : memref<48x32xf32, #tpu.memory_space<vmem>>, vector<1x32xf32>
    %5 = vector.broadcast %4 : vector<1x32xf32> to vector<16x32xf32>
    %6 = arith.addf %3, %5 : vector<16x32xf32>
    %c0_5 = arith.constant 0 : index
    %c0_6 = arith.constant 0 : index
    %7 = vector.load %arg2[%c0_5, %c0_6] : memref<16x1xf32, #tpu.memory_space<vmem>>, vector<16x1xf32>
    %cst_7 = arith.constant 1.000000e+00 : f32
    %8 = vector.broadcast %cst_7 : f32 to vector<16x1xf32>
    %9 = arith.subf %8, %7 : vector<16x1xf32>
    %10 = vector.broadcast %9 : vector<16x1xf32> to vector<16x32xf32>
    %11 = arith.mulf %6, %10 : vector<16x32xf32>
    %c1 = arith.constant 1 : index
    %c0_8 = arith.constant 0 : index
    %12 = vector.load %arg3[%c1, %c0_8] : memref<48x32xf32, #tpu.memory_space<vmem>>, vector<1x32xf32>
    %13 = vector.broadcast %12 : vector<1x32xf32> to vector<16x32xf32>
    %14 = vector.broadcast %7 : vector<16x1xf32> to vector<16x32xf32>
    %15 = arith.mulf %13, %14 : vector<16x32xf32>
    %16 = arith.addf %11, %15 : vector<16x32xf32>
    %17 = vector.shape_cast %16 : vector<16x32xf32> to vector<2x8x32xf32>
    %c0_9 = arith.constant 0 : index
    %c0_10 = arith.constant 0 : index
    %c0_11 = arith.constant 0 : index
    %18 = vector.load %arg9[%c0_9, %c0_10, %c0_11] : memref<2x16x32xf32, #tpu.memory_space<vmem>>, vector<2x8x32xf32>
    tpu.vector_store %arg9[%c0_9, %c0_10, %c0_11], %17 {strides = array<i32>} : memref<2x16x32xf32, #tpu.memory_space<vmem>>, vector<2x8x32xf32>,
    %cst_12 = arith.constant 0.000000e+00 : f32
    %19 = vector.broadcast %cst_12 : f32 to vector<2x8x32xf32>
    %c0_13 = arith.constant 0 : index
    %c8 = arith.constant 8 : index
    %c0_14 = arith.constant 0 : index
    %20 = vector.load %arg9[%c0_13, %c8, %c0_14] : memref<2x16x32xf32, #tpu.memory_space<vmem>>, vector<2x8x32xf32>
    tpu.vector_store %arg9[%c0_13, %c8, %c0_14], %19 {strides = array<i32>} : memref<2x16x32xf32, #tpu.memory_space<vmem>>, vector<2x8x32xf32>,
    %c16 = arith.constant 16 : index
    %c0_15 = arith.constant 0 : index
    %21 = vector.load %arg3[%c16, %c0_15] : memref<48x32xf32, #tpu.memory_space<vmem>>, vector<16x32xf32>
    %c0_16 = arith.constant 0 : index
    %c0_17 = arith.constant 0 : index
    %c0_18 = arith.constant 0 : index
    %22 = vector.load %arg9[%c0_16, %c0_17, %c0_18] : memref<2x16x32xf32, #tpu.memory_space<vmem>>, vector<2x16x32xf32>
    %23 = vector.shape_cast %21 : vector<16x32xf32> to vector<1x16x32xf32>
    %24 = vector.broadcast %23 : vector<1x16x32xf32> to vector<2x16x32xf32>
    %25 = arith.addf %22, %24 : vector<2x16x32xf32>
    %26 = vector.shape_cast %25 : vector<2x16x32xf32> to vector<32x32xf32>
    %27 = tpu.iota {dimensions = array<i32: 1>} : vector<1x16xi32>
    %c9_i32 = arith.constant 9 : i32
    %28 = vector.broadcast %c9_i32 : i32 to vector<1x16xi32>
    %29 = arith.cmpi slt, %27, %28 : vector<1x16xi32>
    %cst_19 = arith.constant 0.000000e+00 : f32
    %cst_20 = arith.constant -1.000000e+30 : f32
    %30 = vector.broadcast %cst_19 : f32 to vector<1x16xf32>
    %31 = vector.broadcast %cst_20 : f32 to vector<1x16xf32>
    %32 = arith.select %29, %30, %31 : vector<1x16xi1>, vector<1x16xf32>
    %c4 = arith.constant 4 : index
    %c0_21 = arith.constant 0 : index
    %33 = vector.load %arg3[%c4, %c0_21] : memref<48x32xf32, #tpu.memory_space<vmem>>, vector<1x32xf32>
    %c5 = arith.constant 5 : index
    %c0_22 = arith.constant 0 : index
    %34 = vector.load %arg3[%c5, %c0_22] : memref<48x32xf32, #tpu.memory_space<vmem>>, vector<1x32xf32>
    %cst_23 = arith.constant dense<0.000000e+00> : vector<32xf32>
    %35 = vector.multi_reduction <add>, %26, %cst_23 [1] : vector<32x32xf32> to vector<32xf32>
    %36 = vector.shape_cast %35 : vector<32xf32> to vector<32x1xf32>
    %cst_24 = arith.constant 3.200000e+01 : f32
    %37 = vector.broadcast %cst_24 : f32 to vector<32x1xf32>
    %38 = arith.divf %36, %37 : vector<32x1xf32>
    %39 = vector.broadcast %38 : vector<32x1xf32> to vector<32x32xf32>
    %40 = arith.subf %26, %39 : vector<32x32xf32>
    %41 = arith.mulf %40, %40 : vector<32x32xf32>
    %cst_25 = arith.constant dense<0.000000e+00> : vector<32xf32>
    %42 = vector.multi_reduction <add>, %41, %cst_25 [1] : vector<32x32xf32> to vector<32xf32>
    %43 = vector.shape_cast %42 : vector<32xf32> to vector<32x1xf32>
    %cst_26 = arith.constant 3.200000e+01 : f32
    %44 = vector.broadcast %cst_26 : f32 to vector<32x1xf32>
    %45 = arith.divf %43, %44 : vector<32x1xf32>
    %46 = vector.broadcast %38 : vector<32x1xf32> to vector<32x32xf32>
    %47 = arith.subf %26, %46 : vector<32x32xf32>
    %cst_27 = arith.constant 9.99999974E-6 : f32
    %48 = vector.broadcast %cst_27 : f32 to vector<32x1xf32>
    %49 = arith.addf %45, %48 : vector<32x1xf32>
    %50 = math.rsqrt %49 : vector<32x1xf32>
    %51 = vector.broadcast %50 : vector<32x1xf32> to vector<32x32xf32>
    %52 = arith.mulf %47, %51 : vector<32x32xf32>
    %53 = vector.broadcast %33 : vector<1x32xf32> to vector<32x32xf32>
    %54 = arith.mulf %52, %53 : vector<32x32xf32>
    %55 = vector.broadcast %34 : vector<1x32xf32> to vector<32x32xf32>
    %56 = arith.addf %54, %55 : vector<32x32xf32>
    %c0_28 = arith.constant 0 : index
    %c0_29 = arith.constant 0 : index
    %c0_30 = arith.constant 0 : index
    %57 = vector.load %arg4[%c0_28, %c0_29, %c0_30] : memref<2x32x96xf32, #tpu.memory_space<vmem>>, vector<1x32x96xf32>
    %58 = vector.shape_cast %57 : vector<1x32x96xf32> to vector<32x96xf32>
    %cst_31 = arith.constant dense<0.000000e+00> : vector<32x96xf32>
    %59 = tpu.matmul %56, %58, %cst_31 {dimension_numbers = #tpu.dot_dimension_numbers<[1], [0], [0], [1], [0, 0, 1, 1], [], []>} : vector<32x32xf32>, vector<32x96xf32>, vector<32x96xf32> -> vector<32x96xf32>
    %c0_32 = arith.constant 0 : index
    %c0_33 = arith.constant 0 : index
    %c0_34 = arith.constant 0 : index
    %60 = vector.load %arg5[%c0_32, %c0_33, %c0_34] : memref<2x32x32xf32, #tpu.memory_space<vmem>>, vector<1x32x32xf32>
    %61 = vector.shape_cast %60 : vector<1x32x32xf32> to vector<32x32xf32>
    %cst_35 = arith.constant 0.000000e+00 : f32
    %62 = vector.broadcast %cst_35 : f32 to vector<32x32xf32>
    %63 = vector.extract_strided_slice %59 {offsets = [0, 0], sizes = [32, 16], strides = [1, 1]} : vector<32x96xf32> to vector<32x16xf32>
    %64 = vector.shape_cast %63 : vector<32x16xf32> to vector<2x16x16xf32>
    %65 = vector.extract_strided_slice %59 {offsets = [0, 32], sizes = [32, 16], strides = [1, 1]} : vector<32x96xf32> to vector<32x16xf32>
    %66 = vector.shape_cast %65 : vector<32x16xf32> to vector<2x16x16xf32>
    %67 = vector.extract_strided_slice %59 {offsets = [0, 64], sizes = [32, 16], strides = [1, 1]} : vector<32x96xf32> to vector<32x16xf32>
    %68 = vector.shape_cast %67 : vector<32x16xf32> to vector<2x16x16xf32>
    "tpu.trace_start"() <{level = 10 : i32, message = "bqd,bkd->bqk"}> : () -> ()
    %cst_36 = arith.constant dense<0.000000e+00> : vector<2x16x16xf32>
    %69 = tpu.matmul %64, %66, %cst_36 {dimension_numbers = #tpu.dot_dimension_numbers<[2], [2], [1], [1], [0, 0, 0, 1, 1, 1], [0], [0]>} : vector<2x16x16xf32>, vector<2x16x16xf32>, vector<2x16x16xf32> -> vector<2x16x16xf32>
    "tpu.trace_stop"() : () -> ()
    %cst_37 = arith.constant 2.500000e-01 : f32
    %70 = vector.broadcast %cst_37 : f32 to vector<2x16x16xf32>
    %71 = arith.mulf %69, %70 : vector<2x16x16xf32>
    %72 = vector.shape_cast %32 : vector<1x16xf32> to vector<1x1x16xf32>
    %73 = vector.broadcast %72 : vector<1x1x16xf32> to vector<2x16x16xf32>
    %74 = arith.addf %71, %73 : vector<2x16x16xf32>
    %cst_38 = arith.constant dense<0xFF800000> : vector<2x16xf32>
    %75 = vector.multi_reduction <maximumf>, %74, %cst_38 [2] : vector<2x16x16xf32> to vector<2x16xf32>
    %76 = vector.shape_cast %75 : vector<2x16xf32> to vector<2x16x1xf32>
    %77 = vector.broadcast %76 : vector<2x16x1xf32> to vector<2x16x16xf32>
    %78 = arith.subf %74, %77 : vector<2x16x16xf32>
    %79 = math.exp %78 : vector<2x16x16xf32>
    %cst_39 = arith.constant dense<0.000000e+00> : vector<2x16xf32>
    %80 = vector.multi_reduction <add>, %79, %cst_39 [2] : vector<2x16x16xf32> to vector<2x16xf32>
    %81 = vector.shape_cast %80 : vector<2x16xf32> to vector<2x16x1xf32>
    %82 = vector.broadcast %81 : vector<2x16x1xf32> to vector<2x16x16xf32>
    %83 = arith.divf %79, %82 : vector<2x16x16xf32>
    "tpu.trace_start"() <{level = 10 : i32, message = "bqk,bkd->bqd"}> : () -> ()
    %cst_40 = arith.constant dense<0.000000e+00> : vector<2x16x16xf32>
    %84 = tpu.matmul %83, %68, %cst_40 {dimension_numbers = #tpu.dot_dimension_numbers<[2], [1], [1], [2], [0, 0, 0, 1, 1, 2], [0], [0]>} : vector<2x16x16xf32>, vector<2x16x16xf32>, vector<2x16x16xf32> -> vector<2x16x16xf32>
    "tpu.trace_stop"() : () -> ()
    %85 = vector.shape_cast %84 : vector<2x16x16xf32> to vector<32x16xf32>
    %86 = vector.extract_strided_slice %61 {offsets = [0, 0], sizes = [16, 32], strides = [1, 1]} : vector<32x32xf32> to vector<16x32xf32>
    %cst_41 = arith.constant dense<0.000000e+00> : vector<32x32xf32>
    %87 = tpu.matmul %85, %86, %cst_41 {dimension_numbers = #tpu.dot_dimension_numbers<[1], [0], [0], [1], [0, 0, 1, 1], [], []>} : vector<32x16xf32>, vector<16x32xf32>, vector<32x32xf32> -> vector<32x32xf32>
    %88 = arith.addf %62, %87 : vector<32x32xf32>
    %89 = vector.extract_strided_slice %59 {offsets = [0, 16], sizes = [32, 16], strides = [1, 1]} : vector<32x96xf32> to vector<32x16xf32>
    %90 = vector.shape_cast %89 : vector<32x16xf32> to vector<2x16x16xf32>
    %91 = vector.extract_strided_slice %59 {offsets = [0, 48], sizes = [32, 16], strides = [1, 1]} : vector<32x96xf32> to vector<32x16xf32>
    %92 = vector.shape_cast %91 : vector<32x16xf32> to vector<2x16x16xf32>
    %93 = vector.extract_strided_slice %59 {offsets = [0, 80], sizes = [32, 16], strides = [1, 1]} : vector<32x96xf32> to vector<32x16xf32>
    %94 = vector.shape_cast %93 : vector<32x16xf32> to vector<2x16x16xf32>
    "tpu.trace_start"() <{level = 10 : i32, message = "bqd,bkd->bqk"}> : () -> ()
    %cst_42 = arith.constant dense<0.000000e+00> : vector<2x16x16xf32>
    %95 = tpu.matmul %90, %92, %cst_42 {dimension_numbers = #tpu.dot_dimension_numbers<[2], [2], [1], [1], [0, 0, 0, 1, 1, 1], [0], [0]>} : vector<2x16x16xf32>, vector<2x16x16xf32>, vector<2x16x16xf32> -> vector<2x16x16xf32>
    "tpu.trace_stop"() : () -> ()
    %cst_43 = arith.constant 2.500000e-01 : f32
    %96 = vector.broadcast %cst_43 : f32 to vector<2x16x16xf32>
    %97 = arith.mulf %95, %96 : vector<2x16x16xf32>
    %98 = vector.shape_cast %32 : vector<1x16xf32> to vector<1x1x16xf32>
    %99 = vector.broadcast %98 : vector<1x1x16xf32> to vector<2x16x16xf32>
    %100 = arith.addf %97, %99 : vector<2x16x16xf32>
    %cst_44 = arith.constant dense<0xFF800000> : vector<2x16xf32>
    %101 = vector.multi_reduction <maximumf>, %100, %cst_44 [2] : vector<2x16x16xf32> to vector<2x16xf32>
    %102 = vector.shape_cast %101 : vector<2x16xf32> to vector<2x16x1xf32>
    %103 = vector.broadcast %102 : vector<2x16x1xf32> to vector<2x16x16xf32>
    %104 = arith.subf %100, %103 : vector<2x16x16xf32>
    %105 = math.exp %104 : vector<2x16x16xf32>
    %cst_45 = arith.constant dense<0.000000e+00> : vector<2x16xf32>
    %106 = vector.multi_reduction <add>, %105, %cst_45 [2] : vector<2x16x16xf32> to vector<2x16xf32>
    %107 = vector.shape_cast %106 : vector<2x16xf32> to vector<2x16x1xf32>
    %108 = vector.broadcast %107 : vector<2x16x1xf32> to vector<2x16x16xf32>
    %109 = arith.divf %105, %108 : vector<2x16x16xf32>
    "tpu.trace_start"() <{level = 10 : i32, message = "bqk,bkd->bqd"}> : () -> ()
    %cst_46 = arith.constant dense<0.000000e+00> : vector<2x16x16xf32>
    %110 = tpu.matmul %109, %94, %cst_46 {dimension_numbers = #tpu.dot_dimension_numbers<[2], [1], [1], [2], [0, 0, 0, 1, 1, 2], [0], [0]>} : vector<2x16x16xf32>, vector<2x16x16xf32>, vector<2x16x16xf32> -> vector<2x16x16xf32>
    "tpu.trace_stop"() : () -> ()
    %111 = vector.shape_cast %110 : vector<2x16x16xf32> to vector<32x16xf32>
    %112 = vector.extract_strided_slice %61 {offsets = [16, 0], sizes = [16, 32], strides = [1, 1]} : vector<32x32xf32> to vector<16x32xf32>
    %cst_47 = arith.constant dense<0.000000e+00> : vector<32x32xf32>
    %113 = tpu.matmul %111, %112, %cst_47 {dimension_numbers = #tpu.dot_dimension_numbers<[1], [0], [0], [1], [0, 0, 1, 1], [], []>} : vector<32x16xf32>, vector<16x32xf32>, vector<32x32xf32> -> vector<32x32xf32>
    %114 = arith.addf %88, %113 : vector<32x32xf32>
    %c6 = arith.constant 6 : index
    %c0_48 = arith.constant 0 : index
    %115 = vector.load %arg3[%c6, %c0_48] : memref<48x32xf32, #tpu.memory_space<vmem>>, vector<1x32xf32>
    %116 = vector.broadcast %115 : vector<1x32xf32> to vector<32x32xf32>
    %117 = arith.addf %114, %116 : vector<32x32xf32>
    %118 = arith.addf %56, %117 : vector<32x32xf32>
    %c7 = arith.constant 7 : index
    %c0_49 = arith.constant 0 : index
    %119 = vector.load %arg3[%c7, %c0_49] : memref<48x32xf32, #tpu.memory_space<vmem>>, vector<1x32xf32>
    %c8_50 = arith.constant 8 : index
    %c0_51 = arith.constant 0 : index
    %120 = vector.load %arg3[%c8_50, %c0_51] : memref<48x32xf32, #tpu.memory_space<vmem>>, vector<1x32xf32>
    %cst_52 = arith.constant dense<0.000000e+00> : vector<32xf32>
    %121 = vector.multi_reduction <add>, %118, %cst_52 [1] : vector<32x32xf32> to vector<32xf32>
    %122 = vector.shape_cast %121 : vector<32xf32> to vector<32x1xf32>
    %cst_53 = arith.constant 3.200000e+01 : f32
    %123 = vector.broadcast %cst_53 : f32 to vector<32x1xf32>
    %124 = arith.divf %122, %123 : vector<32x1xf32>
    %125 = vector.broadcast %124 : vector<32x1xf32> to vector<32x32xf32>
    %126 = arith.subf %118, %125 : vector<32x32xf32>
    %127 = arith.mulf %126, %126 : vector<32x32xf32>
    %cst_54 = arith.constant dense<0.000000e+00> : vector<32xf32>
    %128 = vector.multi_reduction <add>, %127, %cst_54 [1] : vector<32x32xf32> to vector<32xf32>
    %129 = vector.shape_cast %128 : vector<32xf32> to vector<32x1xf32>
    %cst_55 = arith.constant 3.200000e+01 : f32
    %130 = vector.broadcast %cst_55 : f32 to vector<32x1xf32>
    %131 = arith.divf %129, %130 : vector<32x1xf32>
    %132 = vector.broadcast %124 : vector<32x1xf32> to vector<32x32xf32>
    %133 = arith.subf %118, %132 : vector<32x32xf32>
    %cst_56 = arith.constant 9.99999974E-6 : f32
    %134 = vector.broadcast %cst_56 : f32 to vector<32x1xf32>
    %135 = arith.addf %131, %134 : vector<32x1xf32>
    %136 = math.rsqrt %135 : vector<32x1xf32>
    %137 = vector.broadcast %136 : vector<32x1xf32> to vector<32x32xf32>
    %138 = arith.mulf %133, %137 : vector<32x32xf32>
    %139 = vector.broadcast %119 : vector<1x32xf32> to vector<32x32xf32>
    %140 = arith.mulf %138, %139 : vector<32x32xf32>
    %141 = vector.broadcast %120 : vector<1x32xf32> to vector<32x32xf32>
    %142 = arith.addf %140, %141 : vector<32x32xf32>
    %c0_57 = arith.constant 0 : index
    %c0_58 = arith.constant 0 : index
    %c0_59 = arith.constant 0 : index
    %143 = vector.load %arg6[%c0_57, %c0_58, %c0_59] : memref<2x40x128xf32, #tpu.memory_space<vmem>>, vector<1x40x128xf32>
    %144 = vector.shape_cast %143 : vector<1x40x128xf32> to vector<40x128xf32>
    %145 = vector.extract_strided_slice %144 {offsets = [0, 0], sizes = [32, 128], strides = [1, 1]} : vector<40x128xf32> to vector<32x128xf32>
    %cst_60 = arith.constant dense<0.000000e+00> : vector<32x128xf32>
    %146 = tpu.matmul %142, %145, %cst_60 {dimension_numbers = #tpu.dot_dimension_numbers<[1], [0], [0], [1], [0, 0, 1, 1], [], []>} : vector<32x32xf32>, vector<32x128xf32>, vector<32x128xf32> -> vector<32x128xf32>
    %147 = vector.extract_strided_slice %144 {offsets = [32, 0], sizes = [1, 128], strides = [1, 1]} : vector<40x128xf32> to vector<1x128xf32>
    %148 = vector.broadcast %147 : vector<1x128xf32> to vector<32x128xf32>
    %149 = arith.addf %146, %148 : vector<32x128xf32>
    %cst_61 = arith.constant 5.000000e-01 : f32
    %150 = vector.broadcast %cst_61 : f32 to vector<32x128xf32>
    %151 = arith.mulf %150, %149 : vector<32x128xf32>
    %cst_62 = arith.constant 0.707106769 : f32
    %152 = vector.broadcast %cst_62 : f32 to vector<32x128xf32>
    %153 = arith.mulf %149, %152 : vector<32x128xf32>
    %154 = math.erf %153 : vector<32x128xf32>
    %cst_63 = arith.constant 1.000000e+00 : f32
    %155 = vector.broadcast %cst_63 : f32 to vector<32x128xf32>
    %156 = arith.addf %155, %154 : vector<32x128xf32>
    %157 = arith.mulf %151, %156 : vector<32x128xf32>
    %c0_64 = arith.constant 0 : index
    %c0_65 = arith.constant 0 : index
    %c0_66 = arith.constant 0 : index
    %158 = vector.load %arg7[%c0_64, %c0_65, %c0_66] : memref<2x128x32xf32, #tpu.memory_space<vmem>>, vector<1x128x32xf32>
    %159 = vector.shape_cast %158 : vector<1x128x32xf32> to vector<128x32xf32>
    %cst_67 = arith.constant dense<0.000000e+00> : vector<32x32xf32>
    %160 = tpu.matmul %157, %159, %cst_67 {dimension_numbers = #tpu.dot_dimension_numbers<[1], [0], [0], [1], [0, 0, 1, 1], [], []>} : vector<32x128xf32>, vector<128x32xf32>, vector<32x32xf32> -> vector<32x32xf32>
    %c9 = arith.constant 9 : index
    %c0_68 = arith.constant 0 : index
    %161 = vector.load %arg3[%c9, %c0_68] : memref<48x32xf32, #tpu.memory_space<vmem>>, vector<1x32xf32>
    %162 = vector.broadcast %161 : vector<1x32xf32> to vector<32x32xf32>
    %163 = arith.addf %160, %162 : vector<32x32xf32>
    %164 = arith.addf %142, %163 : vector<32x32xf32>
    %c10 = arith.constant 10 : index
    %c0_69 = arith.constant 0 : index
    %165 = vector.load %arg3[%c10, %c0_69] : memref<48x32xf32, #tpu.memory_space<vmem>>, vector<1x32xf32>
    %c11 = arith.constant 11 : index
    %c0_70 = arith.constant 0 : index
    %166 = vector.load %arg3[%c11, %c0_70] : memref<48x32xf32, #tpu.memory_space<vmem>>, vector<1x32xf32>
    %cst_71 = arith.constant dense<0.000000e+00> : vector<32xf32>
    %167 = vector.multi_reduction <add>, %164, %cst_71 [1] : vector<32x32xf32> to vector<32xf32>
    %168 = vector.shape_cast %167 : vector<32xf32> to vector<32x1xf32>
    %cst_72 = arith.constant 3.200000e+01 : f32
    %169 = vector.broadcast %cst_72 : f32 to vector<32x1xf32>
    %170 = arith.divf %168, %169 : vector<32x1xf32>
    %171 = vector.broadcast %170 : vector<32x1xf32> to vector<32x32xf32>
    %172 = arith.subf %164, %171 : vector<32x32xf32>
    %173 = arith.mulf %172, %172 : vector<32x32xf32>
    %cst_73 = arith.constant dense<0.000000e+00> : vector<32xf32>
    %174 = vector.multi_reduction <add>, %173, %cst_73 [1] : vector<32x32xf32> to vector<32xf32>
    %175 = vector.shape_cast %174 : vector<32xf32> to vector<32x1xf32>
    %cst_74 = arith.constant 3.200000e+01 : f32
    %176 = vector.broadcast %cst_74 : f32 to vector<32x1xf32>
    %177 = arith.divf %175, %176 : vector<32x1xf32>
    %178 = vector.broadcast %170 : vector<32x1xf32> to vector<32x32xf32>
    %179 = arith.subf %164, %178 : vector<32x32xf32>
    %cst_75 = arith.constant 9.99999974E-6 : f32
    %180 = vector.broadcast %cst_75 : f32 to vector<32x1xf32>
    %181 = arith.addf %177, %180 : vector<32x1xf32>
    %182 = math.rsqrt %181 : vector<32x1xf32>
    %183 = vector.broadcast %182 : vector<32x1xf32> to vector<32x32xf32>
    %184 = arith.mulf %179, %183 : vector<32x32xf32>
    %185 = vector.broadcast %165 : vector<1x32xf32> to vector<32x32xf32>
    %186 = arith.mulf %184, %185 : vector<32x32xf32>
    %187 = vector.broadcast %166 : vector<1x32xf32> to vector<32x32xf32>
    %188 = arith.addf %186, %187 : vector<32x32xf32>
    %c1_76 = arith.constant 1 : index
    %c0_77 = arith.constant 0 : index
    %c0_78 = arith.constant 0 : index
    %189 = vector.load %arg4[%c1_76, %c0_77, %c0_78] : memref<2x32x96xf32, #tpu.memory_space<vmem>>, vector<1x32x96xf32>
    %190 = vector.shape_cast %189 : vector<1x32x96xf32> to vector<32x96xf32>
    %cst_79 = arith.constant dense<0.000000e+00> : vector<32x96xf32>
    %191 = tpu.matmul %188, %190, %cst_79 {dimension_numbers = #tpu.dot_dimension_numbers<[1], [0], [0], [1], [0, 0, 1, 1], [], []>} : vector<32x32xf32>, vector<32x96xf32>, vector<32x96xf32> -> vector<32x96xf32>
    %c1_80 = arith.constant 1 : index
    %c0_81 = arith.constant 0 : index
    %c0_82 = arith.constant 0 : index
    %192 = vector.load %arg5[%c1_80, %c0_81, %c0_82] : memref<2x32x32xf32, #tpu.memory_space<vmem>>, vector<1x32x32xf32>
    %193 = vector.shape_cast %192 : vector<1x32x32xf32> to vector<32x32xf32>
    %cst_83 = arith.constant 0.000000e+00 : f32
    %194 = vector.broadcast %cst_83 : f32 to vector<32x32xf32>
    %195 = vector.extract_strided_slice %191 {offsets = [0, 0], sizes = [32, 16], strides = [1, 1]} : vector<32x96xf32> to vector<32x16xf32>
    %196 = vector.shape_cast %195 : vector<32x16xf32> to vector<2x16x16xf32>
    %197 = vector.extract_strided_slice %191 {offsets = [0, 32], sizes = [32, 16], strides = [1, 1]} : vector<32x96xf32> to vector<32x16xf32>
    %198 = vector.shape_cast %197 : vector<32x16xf32> to vector<2x16x16xf32>
    %199 = vector.extract_strided_slice %191 {offsets = [0, 64], sizes = [32, 16], strides = [1, 1]} : vector<32x96xf32> to vector<32x16xf32>
    %200 = vector.shape_cast %199 : vector<32x16xf32> to vector<2x16x16xf32>
    "tpu.trace_start"() <{level = 10 : i32, message = "bqd,bkd->bqk"}> : () -> ()
    %cst_84 = arith.constant dense<0.000000e+00> : vector<2x16x16xf32>
    %201 = tpu.matmul %196, %198, %cst_84 {dimension_numbers = #tpu.dot_dimension_numbers<[2], [2], [1], [1], [0, 0, 0, 1, 1, 1], [0], [0]>} : vector<2x16x16xf32>, vector<2x16x16xf32>, vector<2x16x16xf32> -> vector<2x16x16xf32>
    "tpu.trace_stop"() : () -> ()
    %cst_85 = arith.constant 2.500000e-01 : f32
    %202 = vector.broadcast %cst_85 : f32 to vector<2x16x16xf32>
    %203 = arith.mulf %201, %202 : vector<2x16x16xf32>
    %204 = vector.shape_cast %32 : vector<1x16xf32> to vector<1x1x16xf32>
    %205 = vector.broadcast %204 : vector<1x1x16xf32> to vector<2x16x16xf32>
    %206 = arith.addf %203, %205 : vector<2x16x16xf32>
    %cst_86 = arith.constant dense<0xFF800000> : vector<2x16xf32>
    %207 = vector.multi_reduction <maximumf>, %206, %cst_86 [2] : vector<2x16x16xf32> to vector<2x16xf32>
    %208 = vector.shape_cast %207 : vector<2x16xf32> to vector<2x16x1xf32>
    %209 = vector.broadcast %208 : vector<2x16x1xf32> to vector<2x16x16xf32>
    %210 = arith.subf %206, %209 : vector<2x16x16xf32>
    %211 = math.exp %210 : vector<2x16x16xf32>
    %cst_87 = arith.constant dense<0.000000e+00> : vector<2x16xf32>
    %212 = vector.multi_reduction <add>, %211, %cst_87 [2] : vector<2x16x16xf32> to vector<2x16xf32>
    %213 = vector.shape_cast %212 : vector<2x16xf32> to vector<2x16x1xf32>
    %214 = vector.broadcast %213 : vector<2x16x1xf32> to vector<2x16x16xf32>
    %215 = arith.divf %211, %214 : vector<2x16x16xf32>
    "tpu.trace_start"() <{level = 10 : i32, message = "bqk,bkd->bqd"}> : () -> ()
    %cst_88 = arith.constant dense<0.000000e+00> : vector<2x16x16xf32>
    %216 = tpu.matmul %215, %200, %cst_88 {dimension_numbers = #tpu.dot_dimension_numbers<[2], [1], [1], [2], [0, 0, 0, 1, 1, 2], [0], [0]>} : vector<2x16x16xf32>, vector<2x16x16xf32>, vector<2x16x16xf32> -> vector<2x16x16xf32>
    "tpu.trace_stop"() : () -> ()
    %217 = vector.shape_cast %216 : vector<2x16x16xf32> to vector<32x16xf32>
    %218 = vector.extract_strided_slice %193 {offsets = [0, 0], sizes = [16, 32], strides = [1, 1]} : vector<32x32xf32> to vector<16x32xf32>
    %cst_89 = arith.constant dense<0.000000e+00> : vector<32x32xf32>
    %219 = tpu.matmul %217, %218, %cst_89 {dimension_numbers = #tpu.dot_dimension_numbers<[1], [0], [0], [1], [0, 0, 1, 1], [], []>} : vector<32x16xf32>, vector<16x32xf32>, vector<32x32xf32> -> vector<32x32xf32>
    %220 = arith.addf %194, %219 : vector<32x32xf32>
    %221 = vector.extract_strided_slice %191 {offsets = [0, 16], sizes = [32, 16], strides = [1, 1]} : vector<32x96xf32> to vector<32x16xf32>
    %222 = vector.shape_cast %221 : vector<32x16xf32> to vector<2x16x16xf32>
    %223 = vector.extract_strided_slice %191 {offsets = [0, 48], sizes = [32, 16], strides = [1, 1]} : vector<32x96xf32> to vector<32x16xf32>
    %224 = vector.shape_cast %223 : vector<32x16xf32> to vector<2x16x16xf32>
    %225 = vector.extract_strided_slice %191 {offsets = [0, 80], sizes = [32, 16], strides = [1, 1]} : vector<32x96xf32> to vector<32x16xf32>
    %226 = vector.shape_cast %225 : vector<32x16xf32> to vector<2x16x16xf32>
    "tpu.trace_start"() <{level = 10 : i32, message = "bqd,bkd->bqk"}> : () -> ()
    %cst_90 = arith.constant dense<0.000000e+00> : vector<2x16x16xf32>
    %227 = tpu.matmul %222, %224, %cst_90 {dimension_numbers = #tpu.dot_dimension_numbers<[2], [2], [1], [1], [0, 0, 0, 1, 1, 1], [0], [0]>} : vector<2x16x16xf32>, vector<2x16x16xf32>, vector<2x16x16xf32> -> vector<2x16x16xf32>
    "tpu.trace_stop"() : () -> ()
    %cst_91 = arith.constant 2.500000e-01 : f32
    %228 = vector.broadcast %cst_91 : f32 to vector<2x16x16xf32>
    %229 = arith.mulf %227, %228 : vector<2x16x16xf32>
    %230 = vector.shape_cast %32 : vector<1x16xf32> to vector<1x1x16xf32>
    %231 = vector.broadcast %230 : vector<1x1x16xf32> to vector<2x16x16xf32>
    %232 = arith.addf %229, %231 : vector<2x16x16xf32>
    %cst_92 = arith.constant dense<0xFF800000> : vector<2x16xf32>
    %233 = vector.multi_reduction <maximumf>, %232, %cst_92 [2] : vector<2x16x16xf32> to vector<2x16xf32>
    %234 = vector.shape_cast %233 : vector<2x16xf32> to vector<2x16x1xf32>
    %235 = vector.broadcast %234 : vector<2x16x1xf32> to vector<2x16x16xf32>
    %236 = arith.subf %232, %235 : vector<2x16x16xf32>
    %237 = math.exp %236 : vector<2x16x16xf32>
    %cst_93 = arith.constant dense<0.000000e+00> : vector<2x16xf32>
    %238 = vector.multi_reduction <add>, %237, %cst_93 [2] : vector<2x16x16xf32> to vector<2x16xf32>
    %239 = vector.shape_cast %238 : vector<2x16xf32> to vector<2x16x1xf32>
    %240 = vector.broadcast %239 : vector<2x16x1xf32> to vector<2x16x16xf32>
    %241 = arith.divf %237, %240 : vector<2x16x16xf32>
    "tpu.trace_start"() <{level = 10 : i32, message = "bqk,bkd->bqd"}> : () -> ()
    %cst_94 = arith.constant dense<0.000000e+00> : vector<2x16x16xf32>
    %242 = tpu.matmul %241, %226, %cst_94 {dimension_numbers = #tpu.dot_dimension_numbers<[2], [1], [1], [2], [0, 0, 0, 1, 1, 2], [0], [0]>} : vector<2x16x16xf32>, vector<2x16x16xf32>, vector<2x16x16xf32> -> vector<2x16x16xf32>
    "tpu.trace_stop"() : () -> ()
    %243 = vector.shape_cast %242 : vector<2x16x16xf32> to vector<32x16xf32>
    %244 = vector.extract_strided_slice %193 {offsets = [16, 0], sizes = [16, 32], strides = [1, 1]} : vector<32x32xf32> to vector<16x32xf32>
    %cst_95 = arith.constant dense<0.000000e+00> : vector<32x32xf32>
    %245 = tpu.matmul %243, %244, %cst_95 {dimension_numbers = #tpu.dot_dimension_numbers<[1], [0], [0], [1], [0, 0, 1, 1], [], []>} : vector<32x16xf32>, vector<16x32xf32>, vector<32x32xf32> -> vector<32x32xf32>
    %246 = arith.addf %220, %245 : vector<32x32xf32>
    %c12 = arith.constant 12 : index
    %c0_96 = arith.constant 0 : index
    %247 = vector.load %arg3[%c12, %c0_96] : memref<48x32xf32, #tpu.memory_space<vmem>>, vector<1x32xf32>
    %248 = vector.broadcast %247 : vector<1x32xf32> to vector<32x32xf32>
    %249 = arith.addf %246, %248 : vector<32x32xf32>
    %250 = arith.addf %188, %249 : vector<32x32xf32>
    %c13 = arith.constant 13 : index
    %c0_97 = arith.constant 0 : index
    %251 = vector.load %arg3[%c13, %c0_97] : memref<48x32xf32, #tpu.memory_space<vmem>>, vector<1x32xf32>
    %c14 = arith.constant 14 : index
    %c0_98 = arith.constant 0 : index
    %252 = vector.load %arg3[%c14, %c0_98] : memref<48x32xf32, #tpu.memory_space<vmem>>, vector<1x32xf32>
    %cst_99 = arith.constant dense<0.000000e+00> : vector<32xf32>
    %253 = vector.multi_reduction <add>, %250, %cst_99 [1] : vector<32x32xf32> to vector<32xf32>
    %254 = vector.shape_cast %253 : vector<32xf32> to vector<32x1xf32>
    %cst_100 = arith.constant 3.200000e+01 : f32
    %255 = vector.broadcast %cst_100 : f32 to vector<32x1xf32>
    %256 = arith.divf %254, %255 : vector<32x1xf32>
    %257 = vector.broadcast %256 : vector<32x1xf32> to vector<32x32xf32>
    %258 = arith.subf %250, %257 : vector<32x32xf32>
    %259 = arith.mulf %258, %258 : vector<32x32xf32>
    %cst_101 = arith.constant dense<0.000000e+00> : vector<32xf32>
    %260 = vector.multi_reduction <add>, %259, %cst_101 [1] : vector<32x32xf32> to vector<32xf32>
    %261 = vector.shape_cast %260 : vector<32xf32> to vector<32x1xf32>
    %cst_102 = arith.constant 3.200000e+01 : f32
    %262 = vector.broadcast %cst_102 : f32 to vector<32x1xf32>
    %263 = arith.divf %261, %262 : vector<32x1xf32>
    %264 = vector.broadcast %256 : vector<32x1xf32> to vector<32x32xf32>
    %265 = arith.subf %250, %264 : vector<32x32xf32>
    %cst_103 = arith.constant 9.99999974E-6 : f32
    %266 = vector.broadcast %cst_103 : f32 to vector<32x1xf32>
    %267 = arith.addf %263, %266 : vector<32x1xf32>
    %268 = math.rsqrt %267 : vector<32x1xf32>
    %269 = vector.broadcast %268 : vector<32x1xf32> to vector<32x32xf32>
    %270 = arith.mulf %265, %269 : vector<32x32xf32>
    %271 = vector.broadcast %251 : vector<1x32xf32> to vector<32x32xf32>
    %272 = arith.mulf %270, %271 : vector<32x32xf32>
    %273 = vector.broadcast %252 : vector<1x32xf32> to vector<32x32xf32>
    %274 = arith.addf %272, %273 : vector<32x32xf32>
    %c1_104 = arith.constant 1 : index
    %c0_105 = arith.constant 0 : index
    %c0_106 = arith.constant 0 : index
    %275 = vector.load %arg6[%c1_104, %c0_105, %c0_106] : memref<2x40x128xf32, #tpu.memory_space<vmem>>, vector<1x40x128xf32>
    %276 = vector.shape_cast %275 : vector<1x40x128xf32> to vector<40x128xf32>
    %277 = vector.extract_strided_slice %276 {offsets = [0, 0], sizes = [32, 128], strides = [1, 1]} : vector<40x128xf32> to vector<32x128xf32>
    %cst_107 = arith.constant dense<0.000000e+00> : vector<32x128xf32>
    %278 = tpu.matmul %274, %277, %cst_107 {dimension_numbers = #tpu.dot_dimension_numbers<[1], [0], [0], [1], [0, 0, 1, 1], [], []>} : vector<32x32xf32>, vector<32x128xf32>, vector<32x128xf32> -> vector<32x128xf32>
    %279 = vector.extract_strided_slice %276 {offsets = [32, 0], sizes = [1, 128], strides = [1, 1]} : vector<40x128xf32> to vector<1x128xf32>
    %280 = vector.broadcast %279 : vector<1x128xf32> to vector<32x128xf32>
    %281 = arith.addf %278, %280 : vector<32x128xf32>
    %cst_108 = arith.constant 5.000000e-01 : f32
    %282 = vector.broadcast %cst_108 : f32 to vector<32x128xf32>
    %283 = arith.mulf %282, %281 : vector<32x128xf32>
    %cst_109 = arith.constant 0.707106769 : f32
    %284 = vector.broadcast %cst_109 : f32 to vector<32x128xf32>
    %285 = arith.mulf %281, %284 : vector<32x128xf32>
    %286 = math.erf %285 : vector<32x128xf32>
    %cst_110 = arith.constant 1.000000e+00 : f32
    %287 = vector.broadcast %cst_110 : f32 to vector<32x128xf32>
    %288 = arith.addf %287, %286 : vector<32x128xf32>
    %289 = arith.mulf %283, %288 : vector<32x128xf32>
    %c1_111 = arith.constant 1 : index
    %c0_112 = arith.constant 0 : index
    %c0_113 = arith.constant 0 : index
    %290 = vector.load %arg7[%c1_111, %c0_112, %c0_113] : memref<2x128x32xf32, #tpu.memory_space<vmem>>, vector<1x128x32xf32>
    %291 = vector.shape_cast %290 : vector<1x128x32xf32> to vector<128x32xf32>
    %cst_114 = arith.constant dense<0.000000e+00> : vector<32x32xf32>
    %292 = tpu.matmul %289, %291, %cst_114 {dimension_numbers = #tpu.dot_dimension_numbers<[1], [0], [0], [1], [0, 0, 1, 1], [], []>} : vector<32x128xf32>, vector<128x32xf32>, vector<32x32xf32> -> vector<32x32xf32>
    %c15 = arith.constant 15 : index
    %c0_115 = arith.constant 0 : index
    %293 = vector.load %arg3[%c15, %c0_115] : memref<48x32xf32, #tpu.memory_space<vmem>>, vector<1x32xf32>
    %294 = vector.broadcast %293 : vector<1x32xf32> to vector<32x32xf32>
    %295 = arith.addf %292, %294 : vector<32x32xf32>
    %296 = arith.addf %274, %295 : vector<32x32xf32>
    %c2 = arith.constant 2 : index
    %c0_116 = arith.constant 0 : index
    %297 = vector.load %arg3[%c2, %c0_116] : memref<48x32xf32, #tpu.memory_space<vmem>>, vector<1x32xf32>
    %c3 = arith.constant 3 : index
    %c0_117 = arith.constant 0 : index
    %298 = vector.load %arg3[%c3, %c0_117] : memref<48x32xf32, #tpu.memory_space<vmem>>, vector<1x32xf32>
    %cst_118 = arith.constant dense<0.000000e+00> : vector<32xf32>
    %299 = vector.multi_reduction <add>, %296, %cst_118 [1] : vector<32x32xf32> to vector<32xf32>
    %300 = vector.shape_cast %299 : vector<32xf32> to vector<32x1xf32>
    %cst_119 = arith.constant 3.200000e+01 : f32
    %301 = vector.broadcast %cst_119 : f32 to vector<32x1xf32>
    %302 = arith.divf %300, %301 : vector<32x1xf32>
    %303 = vector.broadcast %302 : vector<32x1xf32> to vector<32x32xf32>
    %304 = arith.subf %296, %303 : vector<32x32xf32>
    %305 = arith.mulf %304, %304 : vector<32x32xf32>
    %cst_120 = arith.constant dense<0.000000e+00> : vector<32xf32>
    %306 = vector.multi_reduction <add>, %305, %cst_120 [1] : vector<32x32xf32> to vector<32xf32>
    %307 = vector.shape_cast %306 : vector<32xf32> to vector<32x1xf32>
    %cst_121 = arith.constant 3.200000e+01 : f32
    %308 = vector.broadcast %cst_121 : f32 to vector<32x1xf32>
    %309 = arith.divf %307, %308 : vector<32x1xf32>
    %310 = vector.broadcast %302 : vector<32x1xf32> to vector<32x32xf32>
    %311 = arith.subf %296, %310 : vector<32x32xf32>
    %cst_122 = arith.constant 9.99999974E-6 : f32
    %312 = vector.broadcast %cst_122 : f32 to vector<32x1xf32>
    %313 = arith.addf %309, %312 : vector<32x1xf32>
    %314 = math.rsqrt %313 : vector<32x1xf32>
    %315 = vector.broadcast %314 : vector<32x1xf32> to vector<32x32xf32>
    %316 = arith.mulf %311, %315 : vector<32x32xf32>
    %317 = vector.broadcast %297 : vector<1x32xf32> to vector<32x32xf32>
    %318 = arith.mulf %316, %317 : vector<32x32xf32>
    %319 = vector.broadcast %298 : vector<1x32xf32> to vector<32x32xf32>
    %320 = arith.addf %318, %319 : vector<32x32xf32>
    %321 = vector.shape_cast %320 : vector<32x32xf32> to vector<2x16x32xf32>
    %c0_123 = arith.constant 0 : index
    %c0_124 = arith.constant 0 : index
    %c0_125 = arith.constant 0 : index
    %322 = vector.load %arg8[%c0_123, %c0_124, %c0_125] : memref<2x16x32xf32, #tpu.memory_space<vmem>>, vector<2x16x32xf32>
    tpu.vector_store %arg8[%c0_123, %c0_124, %c0_125], %321 {strides = array<i32>} : memref<2x16x32xf32, #tpu.memory_space<vmem>>, vector<2x16x32xf32>,
    return
  }
  func.func @transform_0(%arg0: i32) -> (i32, i32, i32) {
    %c0_i32 = arith.constant 0 : i32
    %c0_i32_0 = arith.constant 0 : i32
    %c0_i32_1 = arith.constant 0 : i32
    %c0_i32_2 = arith.constant 0 : i32
    return %c0_i32, %c0_i32_0, %c0_i32_1 : i32, i32, i32
  }
  func.func @transform_1(%arg0: i32) -> (i32, i32) {
    %c0_i32 = arith.constant 0 : i32
    %c0_i32_0 = arith.constant 0 : i32
    %c0_i32_1 = arith.constant 0 : i32
    return %c0_i32, %c0_i32_0 : i32, i32
  }
  func.func @transform_2(%arg0: i32) -> (i32, i32) {
    %c0_i32 = arith.constant 0 : i32
    %c0_i32_0 = arith.constant 0 : i32
    %c0_i32_1 = arith.constant 0 : i32
    return %c0_i32, %c0_i32_0 : i32, i32
  }
  func.func @transform_3(%arg0: i32) -> (i32, i32, i32) {
    %c0_i32 = arith.constant 0 : i32
    %c0_i32_0 = arith.constant 0 : i32
    %c0_i32_1 = arith.constant 0 : i32
    %c0_i32_2 = arith.constant 0 : i32
    return %c0_i32, %c0_i32_0, %c0_i32_1 : i32, i32, i32
  }
  func.func @transform_4(%arg0: i32) -> (i32, i32, i32) {
    %c0_i32 = arith.constant 0 : i32
    %c0_i32_0 = arith.constant 0 : i32
    %c0_i32_1 = arith.constant 0 : i32
    %c0_i32_2 = arith.constant 0 : i32
    return %c0_i32, %c0_i32_0, %c0_i32_1 : i32, i32, i32
  }
  func.func @transform_5(%arg0: i32) -> (i32, i32, i32) {
    %c0_i32 = arith.constant 0 : i32
    %c0_i32_0 = arith.constant 0 : i32
    %c0_i32_1 = arith.constant 0 : i32
    %c0_i32_2 = arith.constant 0 : i32
    return %c0_i32, %c0_i32_0, %c0_i32_1 : i32, i32, i32
  }
  func.func @transform_6(%arg0: i32) -> (i32, i32, i32) {
    %c0_i32 = arith.constant 0 : i32
    %c0_i32_0 = arith.constant 0 : i32
    %c0_i32_1 = arith.constant 0 : i32
    %c0_i32_2 = arith.constant 0 : i32
    return %c0_i32, %c0_i32_0, %c0_i32_1 : i32, i32, i32
  }
  func.func @transform_7(%arg0: i32) -> (i32, i32, i32) {
    %c0_i32 = arith.constant 0 : i32
    %c0_i32_0 = arith.constant 0 : i32
    %c0_i32_1 = arith.constant 0 : i32
    %c0_i32_2 = arith.constant 0 : i32
    return %c0_i32, %c0_i32_0, %c0_i32_1 : i32, i32, i32
  }
}

</mosaic_0001>

<llo_original>
// kernel: dtransformer_for_spatial_forward.1
$region0: #{dtransformer_for_spatial_forward.1}
  #allocation0 [shape = 'u32[]', space=smem, size = 0x4, offset = 0x4, fixed_abs, tag = 'smem constant byte address 0x4 - core index']
  #allocation1 [shape = 'u32[144,128]{1,0:T(1,128)}', space=vmem, size = 0x12000, scoped, tag = 'internal scratch']
  #allocation2 [shape = 'f32[2,16,32]{2,1,0:T(8,128)}', space=vmem, size = 0x4000, scoped, tag = 'scratch operand']
  %s0 = inlined_call_operand.vmem [shape: f32[2,8,16], index: 0, kind: input, shape index: {}]
  %s1 = inlined_call_operand.vmem [shape: f32[16,1], index: 1, kind: input, shape index: {}]
  %s2 = inlined_call_operand.vmem [shape: f32[48,32], index: 2, kind: input, shape index: {}]
  %s3 = inlined_call_operand.vmem [shape: f32[2,32,96], index: 3, kind: input, shape index: {}]
  %s4 = inlined_call_operand.vmem [shape: f32[2,32,32], index: 4, kind: input, shape index: {}]
  %s5 = inlined_call_operand.vmem [shape: f32[2,40,128], index: 5, kind: input, shape index: {}]
  %s6 = inlined_call_operand.vmem [shape: f32[2,128,32], index: 6, kind: input, shape index: {}]
  %s7 = inlined_call_operand.vmem [shape: f32[2,16,32], index: 7, kind: output, shape index: {}]
  %s8 = sld [smem:[#allocation0]]
  $region38: #{dtransformer_for_spatial_forward.1} parent=0
    _
  %s10 = ssub.s32 1, %s8
  %s11 = scalar_select 0, %s10, %s8
  // Predicated region
  $region2: #{dtransformer_for_spatial_forward.1} parent=0 // pred_check
    _
  $region3: #{dtransformer_for_spatial_forward.1} parent=0 // pred_check_branch
    %13 = sbr.rel (0) target = $region5
  $region4: #{dtransformer_for_spatial_forward.1} parent=0 // pred_region
    _
  $region5: #{dtransformer_for_spatial_forward.1} parent=0 // pred_fallthru
    _
  // Predicated region
  $region6: #{dtransformer_for_spatial_forward.1} parent=0 // pred_check
    _
  $region7: #{dtransformer_for_spatial_forward.1} parent=0 // pred_check_branch
    %15 = sbr.rel (0) target = $region9
  $region8: #{dtransformer_for_spatial_forward.1} parent=0 // pred_region
    _
  $region9: #{dtransformer_for_spatial_forward.1} parent=0 // pred_fallthru
    _
  // Predicated region
  $region10: #{dtransformer_for_spatial_forward.1} parent=0 // pred_check
    _
  $region11: #{dtransformer_for_spatial_forward.1} parent=0 // pred_check_branch
    %17 = sbr.rel (0) target = $region13
  $region12: #{dtransformer_for_spatial_forward.1} parent=0 // pred_region
    _
  $region13: #{dtransformer_for_spatial_forward.1} parent=0 // pred_fallthru
    _
  // Predicated region
  $region14: #{dtransformer_for_spatial_forward.1} parent=0 // pred_check
    _
  $region15: #{dtransformer_for_spatial_forward.1} parent=0 // pred_check_branch
    %19 = sbr.rel (0) target = $region17
  $region16: #{dtransformer_for_spatial_forward.1} parent=0 // pred_region
    _
  $region17: #{dtransformer_for_spatial_forward.1} parent=0 // pred_fallthru
    _
  // Predicated region
  $region18: #{dtransformer_for_spatial_forward.1} parent=0 // pred_check
    _
  $region19: #{dtransformer_for_spatial_forward.1} parent=0 // pred_check_branch
    %21 = sbr.rel (0) target = $region21
  $region20: #{dtransformer_for_spatial_forward.1} parent=0 // pred_region
    _
  $region21: #{dtransformer_for_spatial_forward.1} parent=0 // pred_fallthru
    _
  // Predicated region
  $region22: #{dtransformer_for_spatial_forward.1} parent=0 // pred_check
    _
  $region23: #{dtransformer_for_spatial_forward.1} parent=0 // pred_check_branch
    %23 = sbr.rel (0) target = $region25
  $region24: #{dtransformer_for_spatial_forward.1} parent=0 // pred_region
    _
  $region25: #{dtransformer_for_spatial_forward.1} parent=0 // pred_fallthru
    _
  // Predicated region
  $region26: #{dtransformer_for_spatial_forward.1} parent=0 // pred_check
    _
  $region27: #{dtransformer_for_spatial_forward.1} parent=0 // pred_check_branch
    %25 = sbr.rel (0) target = $region29
  $region28: #{dtransformer_for_spatial_forward.1} parent=0 // pred_region
    _
  $region29: #{dtransformer_for_spatial_forward.1} parent=0 // pred_fallthru
    _
  %v26 = vld [vmem:[%s0] sm:$0xff]
  %v27 = vld [vmem:[%s0 + $0x8] sm:$0xff]
  %v28 = vld [vmem:[%s2 + $0x20] sm:$0xff]
  %v29 = vld [vmem:[%s2 + $0x28] sm:$0xff]
  %v30 = vld [vmem:[%s2] sm:$0x1]
  %v31 = vlaneseq
  %v32 = vshrl.u32 %v31, 7
  %v33 = vsub.s32 0, %v32
  %v34 = vrot.slane %v30, %v33
  %vm35 = vcmask 130048
  %v37 = vsel %vm35, %v26, 0
  %v40 = vsel %vm35, %v27, 0
  %42 = vmatprep.subr.mxu0 0.0
  %43 = vmatpush1.msra.mxu0 %v28
  %44 = vmatprep.subr.mxu0 0.0
  %45 = vmatpush1.msra.mxu0 %v29
  %46 = vmatprep.subr.mxu0 0.0
  %47 = vmatpush1.msra.mxu0 0.0
  %48 = vmatprep.subr.mxu0 0.0
  %49 = vmatpush1.msra.mxu0 0.0
  %50 = vmatprep.subr.mxu0 0.0
  %51 = vmatpush1.msra.mxu0 0.0
  %52 = vmatprep.subr.mxu0 0.0
  %53 = vmatpush1.msra.mxu0 0.0
  %54 = vmatprep.subr.mxu0 0.0
  %55 = vmatpush1.msra.mxu0 0.0
  %56 = vmatprep.subr.mxu0 0.0
  %57 = vmatpush1.msra.mxu0 0.0
  %58 = vmatprep.subr.mxu0 0.0
  %59 = vmatpush1.msra.mxu0 0.0
  %60 = vmatprep.subr.mxu0 0.0
  %61 = vmatpush1.msra.mxu0 0.0
  %62 = vmatprep.subr.mxu0 0.0
  %63 = vmatpush1.msra.mxu0 0.0
  %64 = vmatprep.subr.mxu0 0.0
  %65 = vmatpush1.msra.mxu0 0.0
  %66 = vmatprep.subr.mxu0 0.0
  %67 = vmatpush1.msra.mxu0 0.0
  %68 = vmatprep.subr.mxu0 0.0
  %69 = vmatpush1.msra.mxu0 0.0
  %70 = vmatprep.subr.mxu0 0.0
  %71 = vmatpush1.msra.mxu0 0.0
  %72 = vmatprep.subr.mxu0 0.0
  %73 = vmatpush1.msra.mxu0 0.0
  %74 = vmatprep.subr.mxu0 0.0
  %75 = vmatpush1.msra.mxu0 0.0
  %76 = vmatprep.subr.mxu0 0.0
  %77 = vmatpush1.msra.mxu0 0.0
  %78 = vmatprep.subr.mxu0 0.0
  %79 = vmatpush1.msra.mxu0 0.0
  %80 = vmatprep.subr.mxu0 0.0
  %81 = vmatpush1.msra.mxu0 0.0
  %82 = vmatprep.subr.mxu0 0.0
  %83 = vmatpush1.msra.mxu0 0.0
  %84 = vmatprep.subr.mxu0 0.0
  %85 = vmatpush1.msra.mxu0 0.0
  %86 = vmatprep.subr.mxu0 0.0
  %87 = vmatpush1.msra.mxu0 0.0
  %88 = vmatprep.subr.mxu0 0.0
  %89 = vmatpush1.msra.mxu0 0.0
  %90 = vmatprep.subr.mxu0 0.0
  %91 = vmatpush1.msra.mxu0 0.0
  %92 = vmatprep.subr.mxu0 0.0
  %93 = vmatpush1.msra.mxu0 0.0
  %94 = vmatprep.subr.mxu0 0.0
  %95 = vmatpush1.msra.mxu0 0.0
  %96 = vmatprep.subr.mxu0 0.0
  %97 = vmatpush1.msra.mxu0 0.0
  %98 = vmatprep.subr.mxu0 0.0
  %99 = vmatpush1.msra.mxu0 0.0
  %100 = vmatprep.subr.mxu0 0.0
  %101 = vmatpush1.msra.mxu0 0.0
  %102 = vmatprep.subr.mxu0 0.0
  %103 = vmatpush1.msra.mxu0 0.0
  %104 = vmatprep.subr.mxu0 0.0
  %105 = vmatpush1.msra.mxu0 0.0
  %106 = vmatprep.mubr.f32.mxu0 0.0
  %107 = vmatmul.mubr.f32.gmra.mrb[0].mxu0 %v37
  %v108 = vpop.f32.mrb[0].mxu0
  %v109 = vadd.f32 %v34, %v108
  %v110 = vpop.f32.mrb[0].mxu0
  %111 = vmatprep.mubr.f32.mxu0 0.0
  %112 = vmatmul.mubr.f32.gmra.mrb[0].mxu0 %v40
  %v113 = vpop.f32.mrb[0].mxu0
  %v114 = vadd.f32 %v34, %v113
  %v115 = vpop.f32.mrb[0].mxu0
  %116 = vdwg.mxu0
  %v117 = vld [vmem:[%s1] sm:$0xff]
  %v118 = vld [vmem:[%s1 + $0x8] sm:$0xff]
  %v119 = vsub.f32 1.0, %v117
  %v120 = vsub.f32 1.0, %v118
  %122 = vset.pattern.permute.xlu0 0
  %123 = vperm.xlu0 %122, %v119
  %v124 = vpop.permute.xlu0 %123
  %127 = vset.pattern.permute.xlu0 0
  %128 = vperm.xlu0 %127, %v120
  %v129 = vpop.permute.xlu0 %128
  %v131 = vmul.f32 %v109, %v124
  %v132 = vmul.f32 %v114, %v129
  %v133 = vld [vmem:[%s2 + $0x1] sm:$0x1]
  %v134 = vlaneseq
  %v135 = vshrl.u32 %v134, 7
  %v136 = vsub.s32 0, %v135
  %v137 = vrot.slane %v133, %v136
  %139 = vset.pattern.permute.xlu0 0
  %140 = vperm.xlu0 %139, %v117
  %v141 = vpop.permute.xlu0 %140
  %144 = vset.pattern.permute.xlu0 0
  %145 = vperm.xlu0 %144, %v118
  %v146 = vpop.permute.xlu0 %145
  %v148 = vmul.f32 %v137, %v141
  %v149 = vmul.f32 %v137, %v146
  %v150 = vadd.f32 %v131, %v148
  %v151 = vadd.f32 %v132, %v149
  %vm152 = vcmask 261120
  %153 = vst.msk [vmem:[#allocation2] sm:$0xff] %vm152, %v150
  %154 = vst.msk [vmem:[#allocation2 + $0x10] sm:$0xff] %vm152, %v151
  %155 = vst.msk [vmem:[#allocation2 + $0x8] sm:$0xff] %vm152, 0.0
  %156 = vst.msk [vmem:[#allocation2 + $0x18] sm:$0xff] %vm152, 0.0
  %v157 = vld [vmem:[%s2 + $0x10] sm:$0xff]
  %v158 = vld [vmem:[%s2 + $0x18] sm:$0xff]
  %v159 = vld [vmem:[#allocation2] sm:$0xff]
  %v160 = vld [vmem:[#allocation2 + $0x8] sm:$0xff]
  %v161 = vld [vmem:[#allocation2 + $0x10] sm:$0xff]
  %v162 = vld [vmem:[#allocation2 + $0x18] sm:$0xff]
  %v163 = vadd.f32 %v159, %v157
  %v164 = vadd.f32 %v160, %v158
  %v165 = vadd.f32 %v161, %v157
  %v166 = vadd.f32 %v162, %v158
  %v167 = vlaneseq
  %v168 = vand.u32 %v167, 127
  %vm169 = vcmp.lt.s32.totalorder %v168, 9
  %v170 = vsel %vm169, 0.0, -1e+30
  %v171 = vld [vmem:[%s2 + $0x4] sm:$0x1]
  %v172 = vld [vmem:[%s2 + $0x5] sm:$0x1]
  %v173 = vsel %vm152, %v163, 0.0
  %174 = vadd.xlane.f32.xlu0 %v173
  %v175 = vpop.xlane.xlu0 %174
  %v176 = vsel %vm152, %v164, 0.0
  %177 = vadd.xlane.f32.xlu0 %v176
  %v178 = vpop.xlane.xlu0 %177
  %v179 = vsel %vm152, %v165, 0.0
  %180 = vadd.xlane.f32.xlu0 %v179
  %v181 = vpop.xlane.xlu0 %180
  %v182 = vsel %vm152, %v166, 0.0
  %183 = vadd.xlane.f32.xlu0 %v182
  %v184 = vpop.xlane.xlu0 %183
  %v185 = vrcp.pop 32.0
  %v186 = vmul.f32 %v175, %v185
  %v187 = vmul.f32 %v178, %v185
  %v188 = vmul.f32 %v181, %v185
  %v189 = vmul.f32 %v184, %v185
  %v190 = vsub.f32 %v163, %v186
  %v191 = vsub.f32 %v164, %v187
  %v192 = vsub.f32 %v165, %v188
  %v193 = vsub.f32 %v166, %v189
  %v194 = vmul.f32 %v190, %v190
  %v195 = vmul.f32 %v191, %v191
  %v196 = vmul.f32 %v192, %v192
  %v197 = vmul.f32 %v193, %v193
  %v198 = vsel %vm152, %v194, 0.0
  %199 = vadd.xlane.f32.xlu0 %v198
  %v200 = vpop.xlane.xlu0 %199
  %v201 = vsel %vm152, %v195, 0.0
  %202 = vadd.xlane.f32.xlu0 %v201
  %v203 = vpop.xlane.xlu0 %202
  %v204 = vsel %vm152, %v196, 0.0
  %205 = vadd.xlane.f32.xlu0 %v204
  %v206 = vpop.xlane.xlu0 %205
  %v207 = vsel %vm152, %v197, 0.0
  %208 = vadd.xlane.f32.xlu0 %v207
  %v209 = vpop.xlane.xlu0 %208
  %v210 = vmul.f32 %v200, %v185
  %v211 = vmul.f32 %v203, %v185
  %v212 = vmul.f32 %v206, %v185
  %v213 = vmul.f32 %v209, %v185
  %v214 = vadd.f32 %v210, 1e-05
  %v215 = vadd.f32 %v211, 1e-05
  %v216 = vadd.f32 %v212, 1e-05
  %v217 = vadd.f32 %v213, 1e-05
  %v218 = vrsqrt.pop %v214
  %v219 = vrsqrt.pop %v215
  %v220 = vrsqrt.pop %v216
  %v221 = vrsqrt.pop %v217
  %v222 = vmul.f32 %v190, %v218
  %v223 = vmul.f32 %v191, %v219
  %v224 = vmul.f32 %v192, %v220
  %v225 = vmul.f32 %v193, %v221
  %v226 = vlaneseq
  %v227 = vshrl.u32 %v226, 7
  %v228 = vsub.s32 0, %v227
  %v229 = vrot.slane %v171, %v228
  %v230 = vmul.f32 %v222, %v229
  %v231 = vmul.f32 %v223, %v229
  %v232 = vmul.f32 %v224, %v229
  %v233 = vmul.f32 %v225, %v229
  %v234 = vlaneseq
  %v235 = vshrl.u32 %v234, 7
  %v236 = vsub.s32 0, %v235
  %v237 = vrot.slane %v172, %v236
  %v238 = vadd.f32 %v230, %v237
  %v239 = vadd.f32 %v231, %v237
  %v240 = vadd.f32 %v232, %v237
  %v241 = vadd.f32 %v233, %v237
  %v242 = vld [vmem:[%s3] sm:$0xff]
  %v243 = vld [vmem:[%s3 + $0x8] sm:$0xff]
  %v244 = vld [vmem:[%s3 + $0x10] sm:$0xff]
  %v245 = vld [vmem:[%s3 + $0x18] sm:$0xff]
  %v247 = vsel %vm152, %v238, 0
  %v250 = vsel %vm152, %v239, 0
  %v253 = vsel %vm152, %v240, 0
  %v256 = vsel %vm152, %v241, 0
  %258 = vmatprep.subr.mxu0 0.0
  %259 = vmatpush1.msra.mxu0 %v242
  %260 = vmatprep.subr.mxu0 0.0
  %261 = vmatpush1.msra.mxu0 %v243
  %262 = vmatprep.subr.mxu0 0.0
  %263 = vmatpush1.msra.mxu0 %v244
  %264 = vmatprep.subr.mxu0 0.0
  %265 = vmatpush1.msra.mxu0 %v245
  %266 = vmatprep.subr.mxu0 0.0
  %267 = vmatpush1.msra.mxu0 0.0
  %268 = vmatprep.subr.mxu0 0.0
  %269 = vmatpush1.msra.mxu0 0.0
  %270 = vmatprep.subr.mxu0 0.0
  %271 = vmatpush1.msra.mxu0 0.0
  %272 = vmatprep.subr.mxu0 0.0
  %273 = vmatpush1.msra.mxu0 0.0
  %274 = vmatprep.subr.mxu0 0.0
  %275 = vmatpush1.msra.mxu0 0.0
  %276 = vmatprep.subr.mxu0 0.0
  %277 = vmatpush1.msra.mxu0 0.0
  %278 = vmatprep.subr.mxu0 0.0
  %279 = vmatpush1.msra.mxu0 0.0
  %280 = vmatprep.subr.mxu0 0.0
  %281 = vmatpush1.msra.mxu0 0.0
  %282 = vmatprep.subr.mxu0 0.0
  %283 = vmatpush1.msra.mxu0 0.0
  %284 = vmatprep.subr.mxu0 0.0
  %285 = vmatpush1.msra.mxu0 0.0
  %286 = vmatprep.subr.mxu0 0.0
  %287 = vmatpush1.msra.mxu0 0.0
  %288 = vmatprep.subr.mxu0 0.0
  %289 = vmatpush1.msra.mxu0 0.0
  %290 = vmatprep.subr.mxu0 0.0
  %291 = vmatpush1.msra.mxu0 0.0
  %292 = vmatprep.subr.mxu0 0.0
  %293 = vmatpush1.msra.mxu0 0.0
  %294 = vmatprep.subr.mxu0 0.0
  %295 = vmatpush1.msra.mxu0 0.0
  %296 = vmatprep.subr.mxu0 0.0
  %297 = vmatpush1.msra.mxu0 0.0
  %298 = vmatprep.subr.mxu0 0.0
  %299 = vmatpush1.msra.mxu0 0.0
  %300 = vmatprep.subr.mxu0 0.0
  %301 = vmatpush1.msra.mxu0 0.0
  %302 = vmatprep.subr.mxu0 0.0
  %303 = vmatpush1.msra.mxu0 0.0
  %304 = vmatprep.subr.mxu0 0.0
  %305 = vmatpush1.msra.mxu0 0.0
  %306 = vmatprep.subr.mxu0 0.0
  %307 = vmatpush1.msra.mxu0 0.0
  %308 = vmatprep.subr.mxu0 0.0
  %309 = vmatpush1.msra.mxu0 0.0
  %310 = vmatprep.subr.mxu0 0.0
  %311 = vmatpush1.msra.mxu0 0.0
  %312 = vmatprep.subr.mxu0 0.0
  %313 = vmatpush1.msra.mxu0 0.0
  %314 = vmatprep.subr.mxu0 0.0
  %315 = vmatpush1.msra.mxu0 0.0
  %316 = vmatprep.subr.mxu0 0.0
  %317 = vmatpush1.msra.mxu0 0.0
  %318 = vmatprep.subr.mxu0 0.0
  %319 = vmatpush1.msra.mxu0 0.0
  %320 = vmatprep.subr.mxu0 0.0
  %321 = vmatpush1.msra.mxu0 0.0
  %322 = vmatprep.mubr.f32.mxu0 0.0
  %323 = vmatmul.mubr.f32.gmra.mrb[0].mxu0 %v247
  %v324 = vpop.f32.mrb[0].mxu0
  %v325 = vadd.f32 0.0, %v324
  %v326 = vpop.f32.mrb[0].mxu0
  %327 = vmatprep.mubr.f32.mxu0 0.0
  %328 = vmatmul.mubr.f32.gmra.mrb[0].mxu0 %v250
  %v329 = vpop.f32.mrb[0].mxu0
  %v330 = vadd.f32 0.0, %v329
  %v331 = vpop.f32.mrb[0].mxu0
  %332 = vmatprep.mubr.f32.mxu0 0.0
  %333 = vmatmul.mubr.f32.gmra.mrb[0].mxu0 %v253
  %v334 = vpop.f32.mrb[0].mxu0
  %v335 = vadd.f32 0.0, %v334
  %v336 = vpop.f32.mrb[0].mxu0
  %337 = vmatprep.mubr.f32.mxu0 0.0
  %338 = vmatmul.mubr.f32.gmra.mrb[0].mxu0 %v256
  %v339 = vpop.f32.mrb[0].mxu0
  %v340 = vadd.f32 0.0, %v339
  %v341 = vpop.f32.mrb[0].mxu0
  %342 = vdwg.mxu0
  %v343 = vld [vmem:[%s4] sm:$0xff]
  %v344 = vld [vmem:[%s4 + $0x8] sm:$0xff]
  %v345 = vld [vmem:[%s4 + $0x10] sm:$0xff]
  %v346 = vld [vmem:[%s4 + $0x18] sm:$0xff]
  %349 = vrot.lane.b32.xlu0 %v325, 96
  %v350 = vpop.permute.xlu0 %349
  %351 = vrot.lane.b32.xlu0 %v330, 96
  %v352 = vpop.permute.xlu0 %351
  %v353 = vsel %vm35, %v325, 0
  %v355 = vsel %vm35, %v330, 0
  %v357 = vsel %vm35, %v350, 0
  %v359 = vsel %vm35, %v352, 0
  %361 = vmatprep.subr.mxu0 0.0
  %362 = vmatpush1.xpose.msra.mxu0 %v357
  %363 = vmatprep.subr.mxu0 0.0
  %364 = vmatpush1.xpose.msra.mxu0 %v359
  %365 = vmatprep.subr.mxu0 0.0
  %366 = vmatpush1.xpose.msra.mxu0 0.0
  %367 = vmatprep.subr.mxu0 0.0
  %368 = vmatpush1.xpose.msra.mxu0 0.0
  %369 = vmatprep.subr.mxu0 0.0
  %370 = vmatpush1.xpose.msra.mxu0 0.0
  %371 = vmatprep.subr.mxu0 0.0
  %372 = vmatpush1.xpose.msra.mxu0 0.0
  %373 = vmatprep.subr.mxu0 0.0
  %374 = vmatpush1.xpose.msra.mxu0 0.0
  %375 = vmatprep.subr.mxu0 0.0
  %376 = vmatpush1.xpose.msra.mxu0 0.0
  %377 = vmatprep.subr.mxu0 0.0
  %378 = vmatpush1.xpose.msra.mxu0 0.0
  %379 = vmatprep.subr.mxu0 0.0
  %380 = vmatpush1.xpose.msra.mxu0 0.0
  %381 = vmatprep.subr.mxu0 0.0
  %382 = vmatpush1.xpose.msra.mxu0 0.0
  %383 = vmatprep.subr.mxu0 0.0
  %384 = vmatpush1.xpose.msra.mxu0 0.0
  %385 = vmatprep.subr.mxu0 0.0
  %386 = vmatpush1.xpose.msra.mxu0 0.0
  %387 = vmatprep.subr.mxu0 0.0
  %388 = vmatpush1.xpose.msra.mxu0 0.0
  %389 = vmatprep.subr.mxu0 0.0
  %390 = vmatpush1.xpose.msra.mxu0 0.0
  %391 = vmatprep.subr.mxu0 0.0
  %392 = vmatpush1.xpose.msra.mxu0 0.0
  %393 = vmatprep.subr.mxu0 0.0
  %394 = vmatpush1.xpose.msra.mxu0 0.0
  %395 = vmatprep.subr.mxu0 0.0
  %396 = vmatpush1.xpose.msra.mxu0 0.0
  %397 = vmatprep.subr.mxu0 0.0
  %398 = vmatpush1.xpose.msra.mxu0 0.0
  %399 = vmatprep.subr.mxu0 0.0
  %400 = vmatpush1.xpose.msra.mxu0 0.0
  %401 = vmatprep.subr.mxu0 0.0
  %402 = vmatpush1.xpose.msra.mxu0 0.0
  %403 = vmatprep.subr.mxu0 0.0
  %404 = vmatpush1.xpose.msra.mxu0 0.0
  %405 = vmatprep.subr.mxu0 0.0
  %406 = vmatpush1.xpose.msra.mxu0 0.0
  %407 = vmatprep.subr.mxu0 0.0
  %408 = vmatpush1.xpose.msra.mxu0 0.0
  %409 = vmatprep.subr.mxu0 0.0
  %410 = vmatpush1.xpose.msra.mxu0 0.0
  %411 = vmatprep.subr.mxu0 0.0
  %412 = vmatpush1.xpose.msra.mxu0 0.0
  %413 = vmatprep.subr.mxu0 0.0
  %414 = vmatpush1.xpose.msra.mxu0 0.0
  %415 = vmatprep.subr.mxu0 0.0
  %416 = vmatpush1.xpose.msra.mxu0 0.0
  %417 = vmatprep.subr.mxu0 0.0
  %418 = vmatpush1.xpose.msra.mxu0 0.0
  %419 = vmatprep.subr.mxu0 0.0
  %420 = vmatpush1.xpose.msra.mxu0 0.0
  %421 = vmatprep.subr.mxu0 0.0
  %422 = vmatpush1.xpose.msra.mxu0 0.0
  %423 = vmatprep.subr.mxu0 0.0
  %424 = vmatpush1.xpose.msra.mxu0 0.0
  %425 = vmatprep.mubr.f32.mxu0 0.0
  %426 = vmatmul.mubr.f32.gmra.mrb[0].mxu0 %v353
  %v427 = vpop.f32.mrb[0].mxu0
  %v428 = vadd.f32 0.0, %v427
  %v429 = vpop.f32.mrb[0].mxu0
  %430 = vmatprep.mubr.f32.mxu0 0.0
  %431 = vmatmul.mubr.f32.gmra.mrb[0].mxu0 %v355
  %v432 = vpop.f32.mrb[0].mxu0
  %v433 = vadd.f32 0.0, %v432
  %v434 = vpop.f32.mrb[0].mxu0
  %435 = vdwg.mxu0
  %438 = vrot.lane.b32.xlu0 %v335, 96
  %v439 = vpop.permute.xlu0 %438
  %440 = vrot.lane.b32.xlu0 %v340, 96
  %v441 = vpop.permute.xlu0 %440
  %v442 = vsel %vm35, %v335, 0
  %v444 = vsel %vm35, %v340, 0
  %v446 = vsel %vm35, %v439, 0
  %v448 = vsel %vm35, %v441, 0
  %450 = vmatprep.subr.mxu0 0.0
  %451 = vmatpush1.xpose.msra.mxu0 %v446
  %452 = vmatprep.subr.mxu0 0.0
  %453 = vmatpush1.xpose.msra.mxu0 %v448
  %454 = vmatprep.subr.mxu0 0.0
  %455 = vmatpush1.xpose.msra.mxu0 0.0
  %456 = vmatprep.subr.mxu0 0.0
  %457 = vmatpush1.xpose.msra.mxu0 0.0
  %458 = vmatprep.subr.mxu0 0.0
  %459 = vmatpush1.xpose.msra.mxu0 0.0
  %460 = vmatprep.subr.mxu0 0.0
  %461 = vmatpush1.xpose.msra.mxu0 0.0
  %462 = vmatprep.subr.mxu0 0.0
  %463 = vmatpush1.xpose.msra.mxu0 0.0
  %464 = vmatprep.subr.mxu0 0.0
  %465 = vmatpush1.xpose.msra.mxu0 0.0
  %466 = vmatprep.subr.mxu0 0.0
  %467 = vmatpush1.xpose.msra.mxu0 0.0
  %468 = vmatprep.subr.mxu0 0.0
  %469 = vmatpush1.xpose.msra.mxu0 0.0
  %470 = vmatprep.subr.mxu0 0.0
  %471 = vmatpush1.xpose.msra.mxu0 0.0
  %472 = vmatprep.subr.mxu0 0.0
  %473 = vmatpush1.xpose.msra.mxu0 0.0
  %474 = vmatprep.subr.mxu0 0.0
  %475 = vmatpush1.xpose.msra.mxu0 0.0
  %476 = vmatprep.subr.mxu0 0.0
  %477 = vmatpush1.xpose.msra.mxu0 0.0
  %478 = vmatprep.subr.mxu0 0.0
  %479 = vmatpush1.xpose.msra.mxu0 0.0
  %480 = vmatprep.subr.mxu0 0.0
  %481 = vmatpush1.xpose.msra.mxu0 0.0
  %482 = vmatprep.subr.mxu0 0.0
  %483 = vmatpush1.xpose.msra.mxu0 0.0
  %484 = vmatprep.subr.mxu0 0.0
  %485 = vmatpush1.xpose.msra.mxu0 0.0
  %486 = vmatprep.subr.mxu0 0.0
  %487 = vmatpush1.xpose.msra.mxu0 0.0
  %488 = vmatprep.subr.mxu0 0.0
  %489 = vmatpush1.xpose.msra.mxu0 0.0
  %490 = vmatprep.subr.mxu0 0.0
  %491 = vmatpush1.xpose.msra.mxu0 0.0
  %492 = vmatprep.subr.mxu0 0.0
  %493 = vmatpush1.xpose.msra.mxu0 0.0
  %494 = vmatprep.subr.mxu0 0.0
  %495 = vmatpush1.xpose.msra.mxu0 0.0
  %496 = vmatprep.subr.mxu0 0.0
  %497 = vmatpush1.xpose.msra.mxu0 0.0
  %498 = vmatprep.subr.mxu0 0.0
  %499 = vmatpush1.xpose.msra.mxu0 0.0
  %500 = vmatprep.subr.mxu0 0.0
  %501 = vmatpush1.xpose.msra.mxu0 0.0
  %502 = vmatprep.subr.mxu0 0.0
  %503 = vmatpush1.xpose.msra.mxu0 0.0
  %504 = vmatprep.subr.mxu0 0.0
  %505 = vmatpush1.xpose.msra.mxu0 0.0
  %506 = vmatprep.subr.mxu0 0.0
  %507 = vmatpush1.xpose.msra.mxu0 0.0
  %508 = vmatprep.subr.mxu0 0.0
  %509 = vmatpush1.xpose.msra.mxu0 0.0
  %510 = vmatprep.subr.mxu0 0.0
  %511 = vmatpush1.xpose.msra.mxu0 0.0
  %512 = vmatprep.subr.mxu0 0.0
  %513 = vmatpush1.xpose.msra.mxu0 0.0
  %514 = vmatprep.mubr.f32.mxu0 0.0
  %515 = vmatmul.mubr.f32.gmra.mrb[0].mxu0 %v442
  %v516 = vpop.f32.mrb[0].mxu0
  %v517 = vadd.f32 0.0, %v516
  %v518 = vpop.f32.mrb[0].mxu0
  %519 = vmatprep.mubr.f32.mxu0 0.0
  %520 = vmatmul.mubr.f32.gmra.mrb[0].mxu0 %v444
  %v521 = vpop.f32.mrb[0].mxu0
  %v522 = vadd.f32 0.0, %v521
  %v523 = vpop.f32.mrb[0].mxu0
  %524 = vdwg.mxu0
  %v525 = vmul.f32 %v428, 0.25
  %v526 = vmul.f32 %v433, 0.25
  %v527 = vmul.f32 %v517, 0.25
  %v528 = vmul.f32 %v522, 0.25
  %v529 = vadd.f32 %v525, %v170
  %v530 = vadd.f32 %v526, %v170
  %v531 = vadd.f32 %v527, %v170
  %v532 = vadd.f32 %v528, %v170
  %v533 = vsel %vm35, %v529, -inf
  %534 = vmax.xlane.f32.xlu0 %v533
  %v535 = vpop.xlane.xlu0 %534
  %v536 = vsel %vm35, %v530, -inf
  %537 = vmax.xlane.f32.xlu0 %v536
  %v538 = vpop.xlane.xlu0 %537
  %v539 = vsel %vm35, %v531, -inf
  %540 = vmax.xlane.f32.xlu0 %v539
  %v541 = vpop.xlane.xlu0 %540
  %v542 = vsel %vm35, %v532, -inf
  %543 = vmax.xlane.f32.xlu0 %v542
  %v544 = vpop.xlane.xlu0 %543
  %v545 = vsub.f32 %v529, %v535
  %v546 = vsub.f32 %v530, %v538
  %v547 = vsub.f32 %v531, %v541
  %v548 = vsub.f32 %v532, %v544
  %v549 = vmul.f32 %v545, 1.442695
  %v550 = vpow.pop %v549
  %v551 = vmul.f32 %v546, 1.442695
  %v552 = vpow.pop %v551
  %v553 = vmul.f32 %v547, 1.442695
  %v554 = vpow.pop %v553
  %v555 = vmul.f32 %v548, 1.442695
  %v556 = vpow.pop %v555
  %v557 = vsel %vm35, %v550, 0.0
  %558 = vadd.xlane.f32.xlu0 %v557
  %v559 = vpop.xlane.xlu0 %558
  %v560 = vsel %vm35, %v552, 0.0
  %561 = vadd.xlane.f32.xlu0 %v560
  %v562 = vpop.xlane.xlu0 %561
  %v563 = vsel %vm35, %v554, 0.0
  %564 = vadd.xlane.f32.xlu0 %v563
  %v565 = vpop.xlane.xlu0 %564
  %v566 = vsel %vm35, %v556, 0.0
  %567 = vadd.xlane.f32.xlu0 %v566
  %v568 = vpop.xlane.xlu0 %567
  %v569 = vrcp.pop %v559
  %v570 = vmul.f32 %v550, %v569
  %v571 = vrcp.pop %v562
  %v572 = vmul.f32 %v552, %v571
  %v573 = vrcp.pop %v565
  %v574 = vmul.f32 %v554, %v573
  %v575 = vrcp.pop %v568
  %v576 = vmul.f32 %v556, %v575
  %577 = vrot.lane.b32.xlu0 %v325, 64
  %v578 = vpop.permute.xlu0 %577
  %579 = vrot.lane.b32.xlu0 %v330, 64
  %v580 = vpop.permute.xlu0 %579
  %v584 = vsel %vm35, %v570, 0
  %v587 = vsel %vm35, %v572, 0
  %589 = vmatprep.subr.mxu0 0.0
  %590 = vmatpush1.msra.mxu0 %v578
  %591 = vmatprep.subr.mxu0 0.0
  %592 = vmatpush1.msra.mxu0 %v580
  %593 = vmatprep.subr.mxu0 0.0
  %594 = vmatpush1.msra.mxu0 0.0
  %595 = vmatprep.subr.mxu0 0.0
  %596 = vmatpush1.msra.mxu0 0.0
  %597 = vmatprep.subr.mxu0 0.0
  %598 = vmatpush1.msra.mxu0 0.0
  %599 = vmatprep.subr.mxu0 0.0
  %600 = vmatpush1.msra.mxu0 0.0
  %601 = vmatprep.subr.mxu0 0.0
  %602 = vmatpush1.msra.mxu0 0.0
  %603 = vmatprep.subr.mxu0 0.0
  %604 = vmatpush1.msra.mxu0 0.0
  %605 = vmatprep.subr.mxu0 0.0
  %606 = vmatpush1.msra.mxu0 0.0
  %607 = vmatprep.subr.mxu0 0.0
  %608 = vmatpush1.msra.mxu0 0.0
  %609 = vmatprep.subr.mxu0 0.0
  %610 = vmatpush1.msra.mxu0 0.0
  %611 = vmatprep.subr.mxu0 0.0
  %612 = vmatpush1.msra.mxu0 0.0
  %613 = vmatprep.subr.mxu0 0.0
  %614 = vmatpush1.msra.mxu0 0.0
  %615 = vmatprep.subr.mxu0 0.0
  %616 = vmatpush1.msra.mxu0 0.0
  %617 = vmatprep.subr.mxu0 0.0
  %618 = vmatpush1.msra.mxu0 0.0
  %619 = vmatprep.subr.mxu0 0.0
  %620 = vmatpush1.msra.mxu0 0.0
  %621 = vmatprep.subr.mxu0 0.0
  %622 = vmatpush1.msra.mxu0 0.0
  %623 = vmatprep.subr.mxu0 0.0
  %624 = vmatpush1.msra.mxu0 0.0
  %625 = vmatprep.subr.mxu0 0.0
  %626 = vmatpush1.msra.mxu0 0.0
  %627 = vmatprep.subr.mxu0 0.0
  %628 = vmatpush1.msra.mxu0 0.0
  %629 = vmatprep.subr.mxu0 0.0
  %630 = vmatpush1.msra.mxu0 0.0
  %631 = vmatprep.subr.mxu0 0.0
  %632 = vmatpush1.msra.mxu0 0.0
  %633 = vmatprep.subr.mxu0 0.0
  %634 = vmatpush1.msra.mxu0 0.0
  %635 = vmatprep.subr.mxu0 0.0
  %636 = vmatpush1.msra.mxu0 0.0
  %637 = vmatprep.subr.mxu0 0.0
  %638 = vmatpush1.msra.mxu0 0.0
  %639 = vmatprep.subr.mxu0 0.0
  %640 = vmatpush1.msra.mxu0 0.0
  %641 = vmatprep.subr.mxu0 0.0
  %642 = vmatpush1.msra.mxu0 0.0
  %643 = vmatprep.subr.mxu0 0.0
  %644 = vmatpush1.msra.mxu0 0.0
  %645 = vmatprep.subr.mxu0 0.0
  %646 = vmatpush1.msra.mxu0 0.0
  %647 = vmatprep.subr.mxu0 0.0
  %648 = vmatpush1.msra.mxu0 0.0
  %649 = vmatprep.subr.mxu0 0.0
  %650 = vmatpush1.msra.mxu0 0.0
  %651 = vmatprep.subr.mxu0 0.0
  %652 = vmatpush1.msra.mxu0 0.0
  %653 = vmatprep.mubr.f32.mxu0 0.0
  %654 = vmatmul.mubr.f32.gmra.mrb[0].mxu0 %v584
  %v655 = vpop.f32.mrb[0].mxu0
  %v656 = vadd.f32 0.0, %v655
  %v657 = vpop.f32.mrb[0].mxu0
  %658 = vmatprep.mubr.f32.mxu0 0.0
  %659 = vmatmul.mubr.f32.gmra.mrb[0].mxu0 %v587
  %v660 = vpop.f32.mrb[0].mxu0
  %v661 = vadd.f32 0.0, %v660
  %v662 = vpop.f32.mrb[0].mxu0
  %663 = vdwg.mxu0
  %664 = vrot.lane.b32.xlu0 %v335, 64
  %v665 = vpop.permute.xlu0 %664
  %666 = vrot.lane.b32.xlu0 %v340, 64
  %v667 = vpop.permute.xlu0 %666
  %v671 = vsel %vm35, %v574, 0
  %v674 = vsel %vm35, %v576, 0
  %676 = vmatprep.subr.mxu0 0.0
  %677 = vmatpush1.msra.mxu0 %v665
  %678 = vmatprep.subr.mxu0 0.0
  %679 = vmatpush1.msra.mxu0 %v667
  %680 = vmatprep.subr.mxu0 0.0
  %681 = vmatpush1.msra.mxu0 0.0
  %682 = vmatprep.subr.mxu0 0.0
  %683 = vmatpush1.msra.mxu0 0.0
  %684 = vmatprep.subr.mxu0 0.0
  %685 = vmatpush1.msra.mxu0 0.0
  %686 = vmatprep.subr.mxu0 0.0
  %687 = vmatpush1.msra.mxu0 0.0
  %688 = vmatprep.subr.mxu0 0.0
  %689 = vmatpush1.msra.mxu0 0.0
  %690 = vmatprep.subr.mxu0 0.0
  %691 = vmatpush1.msra.mxu0 0.0
  %692 = vmatprep.subr.mxu0 0.0
  %693 = vmatpush1.msra.mxu0 0.0
  %694 = vmatprep.subr.mxu0 0.0
  %695 = vmatpush1.msra.mxu0 0.0
  %696 = vmatprep.subr.mxu0 0.0
  %697 = vmatpush1.msra.mxu0 0.0
  %698 = vmatprep.subr.mxu0 0.0
  %699 = vmatpush1.msra.mxu0 0.0
  %700 = vmatprep.subr.mxu0 0.0
  %701 = vmatpush1.msra.mxu0 0.0
  %702 = vmatprep.subr.mxu0 0.0
  %703 = vmatpush1.msra.mxu0 0.0
  %704 = vmatprep.subr.mxu0 0.0
  %705 = vmatpush1.msra.mxu0 0.0
  %706 = vmatprep.subr.mxu0 0.0
  %707 = vmatpush1.msra.mxu0 0.0
  %708 = vmatprep.subr.mxu0 0.0
  %709 = vmatpush1.msra.mxu0 0.0
  %710 = vmatprep.subr.mxu0 0.0
  %711 = vmatpush1.msra.mxu0 0.0
  %712 = vmatprep.subr.mxu0 0.0
  %713 = vmatpush1.msra.mxu0 0.0
  %714 = vmatprep.subr.mxu0 0.0
  %715 = vmatpush1.msra.mxu0 0.0
  %716 = vmatprep.subr.mxu0 0.0
  %717 = vmatpush1.msra.mxu0 0.0
  %718 = vmatprep.subr.mxu0 0.0
  %719 = vmatpush1.msra.mxu0 0.0
  %720 = vmatprep.subr.mxu0 0.0
  %721 = vmatpush1.msra.mxu0 0.0
  %722 = vmatprep.subr.mxu0 0.0
  %723 = vmatpush1.msra.mxu0 0.0
  %724 = vmatprep.subr.mxu0 0.0
  %725 = vmatpush1.msra.mxu0 0.0
  %726 = vmatprep.subr.mxu0 0.0
  %727 = vmatpush1.msra.mxu0 0.0
  %728 = vmatprep.subr.mxu0 0.0
  %729 = vmatpush1.msra.mxu0 0.0
  %730 = vmatprep.subr.mxu0 0.0
  %731 = vmatpush1.msra.mxu0 0.0
  %732 = vmatprep.subr.mxu0 0.0
  %733 = vmatpush1.msra.mxu0 0.0
  %734 = vmatprep.subr.mxu0 0.0
  %735 = vmatpush1.msra.mxu0 0.0
  %736 = vmatprep.subr.mxu0 0.0
  %737 = vmatpush1.msra.mxu0 0.0
  %738 = vmatprep.subr.mxu0 0.0
  %739 = vmatpush1.msra.mxu0 0.0
  %740 = vmatprep.mubr.f32.mxu0 0.0
  %741 = vmatmul.mubr.f32.gmra.mrb[0].mxu0 %v671
  %v742 = vpop.f32.mrb[0].mxu0
  %v743 = vadd.f32 0.0, %v742
  %v744 = vpop.f32.mrb[0].mxu0
  %745 = vmatprep.mubr.f32.mxu0 0.0
  %746 = vmatmul.mubr.f32.gmra.mrb[0].mxu0 %v674
  %v747 = vpop.f32.mrb[0].mxu0
  %v748 = vadd.f32 0.0, %v747
  %v749 = vpop.f32.mrb[0].mxu0
  %750 = vdwg.mxu0
  %751 = vrot.lane.b32.xlu0 %v325, 112
  %v752 = vpop.permute.xlu0 %751
  %753 = vrot.lane.b32.xlu0 %v330, 112
  %v754 = vpop.permute.xlu0 %753
  %755 = vrot.lane.b32.xlu0 %v325, 80
  %v756 = vpop.permute.xlu0 %755
  %757 = vrot.lane.b32.xlu0 %v330, 80
  %v758 = vpop.permute.xlu0 %757
  %v759 = vsel %vm35, %v752, 0
  %v761 = vsel %vm35, %v754, 0
  %v763 = vsel %vm35, %v756, 0
  %v765 = vsel %vm35, %v758, 0
  %767 = vmatprep.subr.mxu0 0.0
  %768 = vmatpush1.xpose.msra.mxu0 %v763
  %769 = vmatprep.subr.mxu0 0.0
  %770 = vmatpush1.xpose.msra.mxu0 %v765
  %771 = vmatprep.subr.mxu0 0.0
  %772 = vmatpush1.xpose.msra.mxu0 0.0
  %773 = vmatprep.subr.mxu0 0.0
  %774 = vmatpush1.xpose.msra.mxu0 0.0
  %775 = vmatprep.subr.mxu0 0.0
  %776 = vmatpush1.xpose.msra.mxu0 0.0
  %777 = vmatprep.subr.mxu0 0.0
  %778 = vmatpush1.xpose.msra.mxu0 0.0
  %779 = vmatprep.subr.mxu0 0.0
  %780 = vmatpush1.xpose.msra.mxu0 0.0
  %781 = vmatprep.subr.mxu0 0.0
  %782 = vmatpush1.xpose.msra.mxu0 0.0
  %783 = vmatprep.subr.mxu0 0.0
  %784 = vmatpush1.xpose.msra.mxu0 0.0
  %785 = vmatprep.subr.mxu0 0.0
  %786 = vmatpush1.xpose.msra.mxu0 0.0
  %787 = vmatprep.subr.mxu0 0.0
  %788 = vmatpush1.xpose.msra.mxu0 0.0
  %789 = vmatprep.subr.mxu0 0.0
  %790 = vmatpush1.xpose.msra.mxu0 0.0
  %791 = vmatprep.subr.mxu0 0.0
  %792 = vmatpush1.xpose.msra.mxu0 0.0
  %793 = vmatprep.subr.mxu0 0.0
  %794 = vmatpush1.xpose.msra.mxu0 0.0
  %795 = vmatprep.subr.mxu0 0.0
  %796 = vmatpush1.xpose.msra.mxu0 0.0
  %797 = vmatprep.subr.mxu0 0.0
  %798 = vmatpush1.xpose.msra.mxu0 0.0
  %799 = vmatprep.subr.mxu0 0.0
  %800 = vmatpush1.xpose.msra.mxu0 0.0
  %801 = vmatprep.subr.mxu0 0.0
  %802 = vmatpush1.xpose.msra.mxu0 0.0
  %803 = vmatprep.subr.mxu0 0.0
  %804 = vmatpush1.xpose.msra.mxu0 0.0
  %805 = vmatprep.subr.mxu0 0.0
  %806 = vmatpush1.xpose.msra.mxu0 0.0
  %807 = vmatprep.subr.mxu0 0.0
  %808 = vmatpush1.xpose.msra.mxu0 0.0
  %809 = vmatprep.subr.mxu0 0.0
  %810 = vmatpush1.xpose.msra.mxu0 0.0
  %811 = vmatprep.subr.mxu0 0.0
  %812 = vmatpush1.xpose.msra.mxu0 0.0
  %813 = vmatprep.subr.mxu0 0.0
  %814 = vmatpush1.xpose.msra.mxu0 0.0
  %815 = vmatprep.subr.mxu0 0.0
  %816 = vmatpush1.xpose.msra.mxu0 0.0
  %817 = vmatprep.subr.mxu0 0.0
  %818 = vmatpush1.xpose.msra.mxu0 0.0
  %819 = vmatprep.subr.mxu0 0.0
  %820 = vmatpush1.xpose.msra.mxu0 0.0
  %821 = vmatprep.subr.mxu0 0.0
  %822 = vmatpush1.xpose.msra.mxu0 0.0
  %823 = vmatprep.subr.mxu0 0.0
  %824 = vmatpush1.xpose.msra.mxu0 0.0
  %825 = vmatprep.subr.mxu0 0.0
  %826 = vmatpush1.xpose.msra.mxu0 0.0
  %827 = vmatprep.subr.mxu0 0.0
  %828 = vmatpush1.xpose.msra.mxu0 0.0
  %829 = vmatprep.subr.mxu0 0.0
  %830 = vmatpush1.xpose.msra.mxu0 0.0
  %831 = vmatprep.mubr.f32.mxu0 0.0
  %832 = vmatmul.mubr.f32.gmra.mrb[0].mxu0 %v759
  %v833 = vpop.f32.mrb[0].mxu0
  %v834 = vadd.f32 0.0, %v833
  %v835 = vpop.f32.mrb[0].mxu0
  %836 = vmatprep.mubr.f32.mxu0 0.0
  %837 = vmatmul.mubr.f32.gmra.mrb[0].mxu0 %v761
  %v838 = vpop.f32.mrb[0].mxu0
  %v839 = vadd.f32 0.0, %v838
  %v840 = vpop.f32.mrb[0].mxu0
  %841 = vdwg.mxu0
  %842 = vrot.lane.b32.xlu0 %v335, 112
  %v843 = vpop.permute.xlu0 %842
  %844 = vrot.lane.b32.xlu0 %v340, 112
  %v845 = vpop.permute.xlu0 %844
  %846 = vrot.lane.b32.xlu0 %v335, 80
  %v847 = vpop.permute.xlu0 %846
  %848 = vrot.lane.b32.xlu0 %v340, 80
  %v849 = vpop.permute.xlu0 %848
  %v850 = vsel %vm35, %v843, 0
  %v852 = vsel %vm35, %v845, 0
  %v854 = vsel %vm35, %v847, 0
  %v856 = vsel %vm35, %v849, 0
  %858 = vmatprep.subr.mxu0 0.0
  %859 = vmatpush1.xpose.msra.mxu0 %v854
  %860 = vmatprep.subr.mxu0 0.0
  %861 = vmatpush1.xpose.msra.mxu0 %v856
  %862 = vmatprep.subr.mxu0 0.0
  %863 = vmatpush1.xpose.msra.mxu0 0.0
  %864 = vmatprep.subr.mxu0 0.0
  %865 = vmatpush1.xpose.msra.mxu0 0.0
  %866 = vmatprep.subr.mxu0 0.0
  %867 = vmatpush1.xpose.msra.mxu0 0.0
  %868 = vmatprep.subr.mxu0 0.0
  %869 = vmatpush1.xpose.msra.mxu0 0.0
  %870 = vmatprep.subr.mxu0 0.0
  %871 = vmatpush1.xpose.msra.mxu0 0.0
  %872 = vmatprep.subr.mxu0 0.0
  %873 = vmatpush1.xpose.msra.mxu0 0.0
  %874 = vmatprep.subr.mxu0 0.0
  %875 = vmatpush1.xpose.msra.mxu0 0.0
  %876 = vmatprep.subr.mxu0 0.0
  %877 = vmatpush1.xpose.msra.mxu0 0.0
  %878 = vmatprep.subr.mxu0 0.0
  %879 = vmatpush1.xpose.msra.mxu0 0.0
  %880 = vmatprep.subr.mxu0 0.0
  %881 = vmatpush1.xpose.msra.mxu0 0.0
  %882 = vmatprep.subr.mxu0 0.0
  %883 = vmatpush1.xpose.msra.mxu0 0.0
  %884 = vmatprep.subr.mxu0 0.0
  %885 = vmatpush1.xpose.msra.mxu0 0.0
  %886 = vmatprep.subr.mxu0 0.0
  %887 = vmatpush1.xpose.msra.mxu0 0.0
  %888 = vmatprep.subr.mxu0 0.0
  %889 = vmatpush1.xpose.msra.mxu0 0.0
  %890 = vmatprep.subr.mxu0 0.0
  %891 = vmatpush1.xpose.msra.mxu0 0.0
  %892 = vmatprep.subr.mxu0 0.0
  %893 = vmatpush1.xpose.msra.mxu0 0.0
  %894 = vmatprep.subr.mxu0 0.0
  %895 = vmatpush1.xpose.msra.mxu0 0.0
  %896 = vmatprep.subr.mxu0 0.0
  %897 = vmatpush1.xpose.msra.mxu0 0.0
  %898 = vmatprep.subr.mxu0 0.0
  %899 = vmatpush1.xpose.msra.mxu0 0.0
  %900 = vmatprep.subr.mxu0 0.0
  %901 = vmatpush1.xpose.msra.mxu0 0.0
  %902 = vmatprep.subr.mxu0 0.0
  %903 = vmatpush1.xpose.msra.mxu0 0.0
  %904 = vmatprep.subr.mxu0 0.0
  %905 = vmatpush1.xpose.msra.mxu0 0.0
  %906 = vmatprep.subr.mxu0 0.0
  %907 = vmatpush1.xpose.msra.mxu0 0.0
  %908 = vmatprep.subr.mxu0 0.0
  %909 = vmatpush1.xpose.msra.mxu0 0.0
  %910 = vmatprep.subr.mxu0 0.0
  %911 = vmatpush1.xpose.msra.mxu0 0.0
  %912 = vmatprep.subr.mxu0 0.0
  %913 = vmatpush1.xpose.msra.mxu0 0.0
  %914 = vmatprep.subr.mxu0 0.0
  %915 = vmatpush1.xpose.msra.mxu0 0.0
  %916 = vmatprep.subr.mxu0 0.0
  %917 = vmatpush1.xpose.msra.mxu0 0.0
  %918 = vmatprep.subr.mxu0 0.0
  %919 = vmatpush1.xpose.msra.mxu0 0.0
  %920 = vmatprep.subr.mxu0 0.0
  %921 = vmatpush1.xpose.msra.mxu0 0.0
  %922 = vmatprep.mubr.f32.mxu0 0.0
  %923 = vmatmul.mubr.f32.gmra.mrb[0].mxu0 %v850
  %v924 = vpop.f32.mrb[0].mxu0
  %v925 = vadd.f32 0.0, %v924
  %v926 = vpop.f32.mrb[0].mxu0
  %927 = vmatprep.mubr.f32.mxu0 0.0
  %928 = vmatmul.mubr.f32.gmra.mrb[0].mxu0 %v852
  %v929 = vpop.f32.mrb[0].mxu0
  %v930 = vadd.f32 0.0, %v929
  %v931 = vpop.f32.mrb[0].mxu0
  %932 = vdwg.mxu0
  %v933 = vmul.f32 %v834, 0.25
  %v934 = vmul.f32 %v839, 0.25
  %v935 = vmul.f32 %v925, 0.25
  %v936 = vmul.f32 %v930, 0.25
  %v937 = vadd.f32 %v933, %v170
  %v938 = vadd.f32 %v934, %v170
  %v939 = vadd.f32 %v935, %v170
  %v940 = vadd.f32 %v936, %v170
  %v941 = vsel %vm35, %v937, -inf
  %942 = vmax.xlane.f32.xlu0 %v941
  %v943 = vpop.xlane.xlu0 %942
  %v944 = vsel %vm35, %v938, -inf
  %945 = vmax.xlane.f32.xlu0 %v944
  %v946 = vpop.xlane.xlu0 %945
  %v947 = vsel %vm35, %v939, -inf
  %948 = vmax.xlane.f32.xlu0 %v947
  %v949 = vpop.xlane.xlu0 %948
  %v950 = vsel %vm35, %v940, -inf
  %951 = vmax.xlane.f32.xlu0 %v950
  %v952 = vpop.xlane.xlu0 %951
  %v953 = vsub.f32 %v937, %v943
  %v954 = vsub.f32 %v938, %v946
  %v955 = vsub.f32 %v939, %v949
  %v956 = vsub.f32 %v940, %v952
  %v957 = vmul.f32 %v953, 1.442695
  %v958 = vpow.pop %v957
  %v959 = vmul.f32 %v954, 1.442695
  %v960 = vpow.pop %v959
  %v961 = vmul.f32 %v955, 1.442695
  %v962 = vpow.pop %v961
  %v963 = vmul.f32 %v956, 1.442695
  %v964 = vpow.pop %v963
  %v965 = vsel %vm35, %v958, 0.0
  %966 = vadd.xlane.f32.xlu0 %v965
  %v967 = vpop.xlane.xlu0 %966
  %v968 = vsel %vm35, %v960, 0.0
  %969 = vadd.xlane.f32.xlu0 %v968
  %v970 = vpop.xlane.xlu0 %969
  %v971 = vsel %vm35, %v962, 0.0
  %972 = vadd.xlane.f32.xlu0 %v971
  %v973 = vpop.xlane.xlu0 %972
  %v974 = vsel %vm35, %v964, 0.0
  %975 = vadd.xlane.f32.xlu0 %v974
  %v976 = vpop.xlane.xlu0 %975
  %v977 = vrcp.pop %v967
  %v978 = vmul.f32 %v958, %v977
  %v979 = vrcp.pop %v970
  %v980 = vmul.f32 %v960, %v979
  %v981 = vrcp.pop %v973
  %v982 = vmul.f32 %v962, %v981
  %v983 = vrcp.pop %v976
  %v984 = vmul.f32 %v964, %v983
  %985 = vrot.lane.b32.xlu0 %v325, 48
  %v986 = vpop.permute.xlu0 %985
  %987 = vrot.lane.b32.xlu0 %v330, 48
  %v988 = vpop.permute.xlu0 %987
  %v992 = vsel %vm35, %v978, 0
  %v995 = vsel %vm35, %v980, 0
  %997 = vmatprep.subr.mxu0 0.0
  %998 = vmatpush1.msra.mxu0 %v986
  %999 = vmatprep.subr.mxu0 0.0
  %1000 = vmatpush1.msra.mxu0 %v988
  %1001 = vmatprep.subr.mxu0 0.0
  %1002 = vmatpush1.msra.mxu0 0.0
  %1003 = vmatprep.subr.mxu0 0.0
  %1004 = vmatpush1.msra.mxu0 0.0
  %1005 = vmatprep.subr.mxu0 0.0
  %1006 = vmatpush1.msra.mxu0 0.0
  %1007 = vmatprep.subr.mxu0 0.0
  %1008 = vmatpush1.msra.mxu0 0.0
  %1009 = vmatprep.subr.mxu0 0.0
  %1010 = vmatpush1.msra.mxu0 0.0
  %1011 = vmatprep.subr.mxu0 0.0
  %1012 = vmatpush1.msra.mxu0 0.0
  %1013 = vmatprep.subr.mxu0 0.0
  %1014 = vmatpush1.msra.mxu0 0.0
  %1015 = vmatprep.subr.mxu0 0.0
  %1016 = vmatpush1.msra.mxu0 0.0
  %1017 = vmatprep.subr.mxu0 0.0
  %1018 = vmatpush1.msra.mxu0 0.0
  %1019 = vmatprep.subr.mxu0 0.0
  %1020 = vmatpush1.msra.mxu0 0.0
  %1021 = vmatprep.subr.mxu0 0.0
  %1022 = vmatpush1.msra.mxu0 0.0
  %1023 = vmatprep.subr.mxu0 0.0
  %1024 = vmatpush1.msra.mxu0 0.0
  %1025 = vmatprep.subr.mxu0 0.0
  %1026 = vmatpush1.msra.mxu0 0.0
  %1027 = vmatprep.subr.mxu0 0.0
  %1028 = vmatpush1.msra.mxu0 0.0
  %1029 = vmatprep.subr.mxu0 0.0
  %1030 = vmatpush1.msra.mxu0 0.0
  %1031 = vmatprep.subr.mxu0 0.0
  %1032 = vmatpush1.msra.mxu0 0.0
  %1033 = vmatprep.subr.mxu0 0.0
  %1034 = vmatpush1.msra.mxu0 0.0
  %1035 = vmatprep.subr.mxu0 0.0
  %1036 = vmatpush1.msra.mxu0 0.0
  %1037 = vmatprep.subr.mxu0 0.0
  %1038 = vmatpush1.msra.mxu0 0.0
  %1039 = vmatprep.subr.mxu0 0.0
  %1040 = vmatpush1.msra.mxu0 0.0
  %1041 = vmatprep.subr.mxu0 0.0
  %1042 = vmatpush1.msra.mxu0 0.0
  %1043 = vmatprep.subr.mxu0 0.0
  %1044 = vmatpush1.msra.mxu0 0.0
  %1045 = vmatprep.subr.mxu0 0.0
  %1046 = vmatpush1.msra.mxu0 0.0
  %1047 = vmatprep.subr.mxu0 0.0
  %1048 = vmatpush1.msra.mxu0 0.0
  %1049 = vmatprep.subr.mxu0 0.0
  %1050 = vmatpush1.msra.mxu0 0.0
  %1051 = vmatprep.subr.mxu0 0.0
  %1052 = vmatpush1.msra.mxu0 0.0
  %1053 = vmatprep.subr.mxu0 0.0
  %1054 = vmatpush1.msra.mxu0 0.0
  %1055 = vmatprep.subr.mxu0 0.0
  %1056 = vmatpush1.msra.mxu0 0.0
  %1057 = vmatprep.subr.mxu0 0.0
  %1058 = vmatpush1.msra.mxu0 0.0
  %1059 = vmatprep.subr.mxu0 0.0
  %1060 = vmatpush1.msra.mxu0 0.0
  %1061 = vmatprep.mubr.f32.mxu0 0.0
  %1062 = vmatmul.mubr.f32.gmra.mrb[0].mxu0 %v992
  %v1063 = vpop.f32.mrb[0].mxu0
  %v1064 = vadd.f32 0.0, %v1063
  %v1065 = vpop.f32.mrb[0].mxu0
  %1066 = vmatprep.mubr.f32.mxu0 0.0
  %1067 = vmatmul.mubr.f32.gmra.mrb[0].mxu0 %v995
  %v1068 = vpop.f32.mrb[0].mxu0
  %v1069 = vadd.f32 0.0, %v1068
  %v1070 = vpop.f32.mrb[0].mxu0
  %1071 = vdwg.mxu0
  %1072 = vrot.lane.b32.xlu0 %v335, 48
  %v1073 = vpop.permute.xlu0 %1072
  %1074 = vrot.lane.b32.xlu0 %v340, 48
  %v1075 = vpop.permute.xlu0 %1074
  %v1079 = vsel %vm35, %v982, 0
  %v1082 = vsel %vm35, %v984, 0
  %1084 = vmatprep.subr.mxu0 0.0
  %1085 = vmatpush1.msra.mxu0 %v1073
  %1086 = vmatprep.subr.mxu0 0.0
  %1087 = vmatpush1.msra.mxu0 %v1075
  %1088 = vmatprep.subr.mxu0 0.0
  %1089 = vmatpush1.msra.mxu0 0.0
  %1090 = vmatprep.subr.mxu0 0.0
  %1091 = vmatpush1.msra.mxu0 0.0
  %1092 = vmatprep.subr.mxu0 0.0
  %1093 = vmatpush1.msra.mxu0 0.0
  %1094 = vmatprep.subr.mxu0 0.0
  %1095 = vmatpush1.msra.mxu0 0.0
  %1096 = vmatprep.subr.mxu0 0.0
  %1097 = vmatpush1.msra.mxu0 0.0
  %1098 = vmatprep.subr.mxu0 0.0
  %1099 = vmatpush1.msra.mxu0 0.0
  %1100 = vmatprep.subr.mxu0 0.0
  %1101 = vmatpush1.msra.mxu0 0.0
  %1102 = vmatprep.subr.mxu0 0.0
  %1103 = vmatpush1.msra.mxu0 0.0
  %1104 = vmatprep.subr.mxu0 0.0
  %1105 = vmatpush1.msra.mxu0 0.0
  %1106 = vmatprep.subr.mxu0 0.0
  %1107 = vmatpush1.msra.mxu0 0.0
  %1108 = vmatprep.subr.mxu0 0.0
  %1109 = vmatpush1.msra.mxu0 0.0
  %1110 = vmatprep.subr.mxu0 0.0
  %1111 = vmatpush1.msra.mxu0 0.0
  %1112 = vmatprep.subr.mxu0 0.0
  %1113 = vmatpush1.msra.mxu0 0.0
  %1114 = vmatprep.subr.mxu0 0.0
  %1115 = vmatpush1.msra.mxu0 0.0
  %1116 = vmatprep.subr.mxu0 0.0
  %1117 = vmatpush1.msra.mxu0 0.0
  %1118 = vmatprep.subr.mxu0 0.0
  %1119 = vmatpush1.msra.mxu0 0.0
  %1120 = vmatprep.subr.mxu0 0.0
  %1121 = vmatpush1.msra.mxu0 0.0
  %1122 = vmatprep.subr.mxu0 0.0
  %1123 = vmatpush1.msra.mxu0 0.0
  %1124 = vmatprep.subr.mxu0 0.0
  %1125 = vmatpush1.msra.mxu0 0.0
  %1126 = vmatprep.subr.mxu0 0.0
  %1127 = vmatpush1.msra.mxu0 0.0
  %1128 = vmatprep.subr.mxu0 0.0
  %1129 = vmatpush1.msra.mxu0 0.0
  %1130 = vmatprep.subr.mxu0 0.0
  %1131 = vmatpush1.msra.mxu0 0.0
  %1132 = vmatprep.subr.mxu0 0.0
  %1133 = vmatpush1.msra.mxu0 0.0
  %1134 = vmatprep.subr.mxu0 0.0
  %1135 = vmatpush1.msra.mxu0 0.0
  %1136 = vmatprep.subr.mxu0 0.0
  %1137 = vmatpush1.msra.mxu0 0.0
  %1138 = vmatprep.subr.mxu0 0.0
  %1139 = vmatpush1.msra.mxu0 0.0
  %1140 = vmatprep.subr.mxu0 0.0
  %1141 = vmatpush1.msra.mxu0 0.0
  %1142 = vmatprep.subr.mxu0 0.0
  %1143 = vmatpush1.msra.mxu0 0.0
  %1144 = vmatprep.subr.mxu0 0.0
  %1145 = vmatpush1.msra.mxu0 0.0
  %1146 = vmatprep.subr.mxu0 0.0
  %1147 = vmatpush1.msra.mxu0 0.0
  %1148 = vmatprep.mubr.f32.mxu0 0.0
  %1149 = vmatmul.mubr.f32.gmra.mrb[0].mxu0 %v1079
  %v1150 = vpop.f32.mrb[0].mxu0
  %v1151 = vadd.f32 0.0, %v1150
  %v1152 = vpop.f32.mrb[0].mxu0
  %1153 = vmatprep.mubr.f32.mxu0 0.0
  %1154 = vmatmul.mubr.f32.gmra.mrb[0].mxu0 %v1082
  %v1155 = vpop.f32.mrb[0].mxu0
  %v1156 = vadd.f32 0.0, %v1155
  %v1157 = vpop.f32.mrb[0].mxu0
  %1158 = vdwg.mxu0
  %v1160 = vsel %vm35, %v1064, 0
  %v1163 = vsel %vm35, %v1069, 0
  %v1166 = vsel %vm35, %v1151, 0
  %v1169 = vsel %vm35, %v1156, 0
  %1171 = vmatprep.subr.mxu0 0.0
  %1172 = vmatpush1.msra.mxu0 %v345
  %1173 = vmatprep.subr.mxu0 0.0
  %1174 = vmatpush1.msra.mxu0 %v346
  %1175 = vmatprep.subr.mxu0 0.0
  %1176 = vmatpush1.msra.mxu0 0.0
  %1177 = vmatprep.subr.mxu0 0.0
  %1178 = vmatpush1.msra.mxu0 0.0
  %1179 = vmatprep.subr.mxu0 0.0
  %1180 = vmatpush1.msra.mxu0 0.0
  %1181 = vmatprep.subr.mxu0 0.0
  %1182 = vmatpush1.msra.mxu0 0.0
  %1183 = vmatprep.subr.mxu0 0.0
  %1184 = vmatpush1.msra.mxu0 0.0
  %1185 = vmatprep.subr.mxu0 0.0
  %1186 = vmatpush1.msra.mxu0 0.0
  %1187 = vmatprep.subr.mxu0 0.0
  %1188 = vmatpush1.msra.mxu0 0.0
  %1189 = vmatprep.subr.mxu0 0.0
  %1190 = vmatpush1.msra.mxu0 0.0
  %1191 = vmatprep.subr.mxu0 0.0
  %1192 = vmatpush1.msra.mxu0 0.0
  %1193 = vmatprep.subr.mxu0 0.0
  %1194 = vmatpush1.msra.mxu0 0.0
  %1195 = vmatprep.subr.mxu0 0.0
  %1196 = vmatpush1.msra.mxu0 0.0
  %1197 = vmatprep.subr.mxu0 0.0
  %1198 = vmatpush1.msra.mxu0 0.0
  %1199 = vmatprep.subr.mxu0 0.0
  %1200 = vmatpush1.msra.mxu0 0.0
  %1201 = vmatprep.subr.mxu0 0.0
  %1202 = vmatpush1.msra.mxu0 0.0
  %1203 = vmatprep.subr.mxu0 0.0
  %1204 = vmatpush1.msra.mxu0 0.0
  %1205 = vmatprep.subr.mxu0 0.0
  %1206 = vmatpush1.msra.mxu0 0.0
  %1207 = vmatprep.subr.mxu0 0.0
  %1208 = vmatpush1.msra.mxu0 0.0
  %1209 = vmatprep.subr.mxu0 0.0
  %1210 = vmatpush1.msra.mxu0 0.0
  %1211 = vmatprep.subr.mxu0 0.0
  %1212 = vmatpush1.msra.mxu0 0.0
  %1213 = vmatprep.subr.mxu0 0.0
  %1214 = vmatpush1.msra.mxu0 0.0
  %1215 = vmatprep.subr.mxu0 0.0
  %1216 = vmatpush1.msra.mxu0 0.0
  %1217 = vmatprep.subr.mxu0 0.0
  %1218 = vmatpush1.msra.mxu0 0.0
  %1219 = vmatprep.subr.mxu0 0.0
  %1220 = vmatpush1.msra.mxu0 0.0
  %1221 = vmatprep.subr.mxu0 0.0
  %1222 = vmatpush1.msra.mxu0 0.0
  %1223 = vmatprep.subr.mxu0 0.0
  %1224 = vmatpush1.msra.mxu0 0.0
  %1225 = vmatprep.subr.mxu0 0.0
  %1226 = vmatpush1.msra.mxu0 0.0
  %1227 = vmatprep.subr.mxu0 0.0
  %1228 = vmatpush1.msra.mxu0 0.0
  %1229 = vmatprep.subr.mxu0 0.0
  %1230 = vmatpush1.msra.mxu0 0.0
  %1231 = vmatprep.subr.mxu0 0.0
  %1232 = vmatpush1.msra.mxu0 0.0
  %1233 = vmatprep.subr.mxu0 0.0
  %1234 = vmatpush1.msra.mxu0 0.0
  %1235 = vmatprep.mubr.f32.mxu0 0.0
  %1236 = vmatmul.mubr.f32.gmra.mrb[0].mxu0 %v1160
  %v1237 = vpop.f32.mrb[0].mxu0
  %v1238 = vadd.f32 0.0, %v1237
  %v1239 = vpop.f32.mrb[0].mxu0
  %1240 = vmatprep.mubr.f32.mxu0 0.0
  %1241 = vmatmul.mubr.f32.gmra.mrb[0].mxu0 %v1163
  %v1242 = vpop.f32.mrb[0].mxu0
  %v1243 = vadd.f32 0.0, %v1242
  %v1244 = vpop.f32.mrb[0].mxu0
  %1245 = vmatprep.mubr.f32.mxu0 0.0
  %1246 = vmatmul.mubr.f32.gmra.mrb[0].mxu0 %v1166
  %v1247 = vpop.f32.mrb[0].mxu0
  %v1248 = vadd.f32 0.0, %v1247
  %v1249 = vpop.f32.mrb[0].mxu0
  %1250 = vmatprep.mubr.f32.mxu0 0.0
  %1251 = vmatmul.mubr.f32.gmra.mrb[0].mxu0 %v1169
  %v1252 = vpop.f32.mrb[0].mxu0
  %v1253 = vadd.f32 0.0, %v1252
  %v1254 = vpop.f32.mrb[0].mxu0
  %1255 = vdwg.mxu0
  %v1257 = vsel %vm35, %v656, 0
  %v1260 = vsel %vm35, %v661, 0
  %v1263 = vsel %vm35, %v743, 0
  %v1266 = vsel %vm35, %v748, 0
  %1268 = vmatprep.subr.mxu0 0.0
  %1269 = vmatpush1.msra.mxu0 %v343
  %1270 = vmatprep.subr.mxu0 0.0
  %1271 = vmatpush1.msra.mxu0 %v344
  %1272 = vmatprep.subr.mxu0 0.0
  %1273 = vmatpush1.msra.mxu0 0.0
  %1274 = vmatprep.subr.mxu0 0.0
  %1275 = vmatpush1.msra.mxu0 0.0
  %1276 = vmatprep.subr.mxu0 0.0
  %1277 = vmatpush1.msra.mxu0 0.0
  %1278 = vmatprep.subr.mxu0 0.0
  %1279 = vmatpush1.msra.mxu0 0.0
  %1280 = vmatprep.subr.mxu0 0.0
  %1281 = vmatpush1.msra.mxu0 0.0
  %1282 = vmatprep.subr.mxu0 0.0
  %1283 = vmatpush1.msra.mxu0 0.0
  %1284 = vmatprep.subr.mxu0 0.0
  %1285 = vmatpush1.msra.mxu0 0.0
  %1286 = vmatprep.subr.mxu0 0.0
  %1287 = vmatpush1.msra.mxu0 0.0
  %1288 = vmatprep.subr.mxu0 0.0
  %1289 = vmatpush1.msra.mxu0 0.0
  %1290 = vmatprep.subr.mxu0 0.0
  %1291 = vmatpush1.msra.mxu0 0.0
  %1292 = vmatprep.subr.mxu0 0.0
  %1293 = vmatpush1.msra.mxu0 0.0
  %1294 = vmatprep.subr.mxu0 0.0
  %1295 = vmatpush1.msra.mxu0 0.0
  %1296 = vmatprep.subr.mxu0 0.0
  %1297 = vmatpush1.msra.mxu0 0.0
  %1298 = vmatprep.subr.mxu0 0.0
  %1299 = vmatpush1.msra.mxu0 0.0
  %1300 = vmatprep.subr.mxu0 0.0
  %1301 = vmatpush1.msra.mxu0 0.0
  %1302 = vmatprep.subr.mxu0 0.0
  %1303 = vmatpush1.msra.mxu0 0.0
  %1304 = vmatprep.subr.mxu0 0.0
  %1305 = vmatpush1.msra.mxu0 0.0
  %1306 = vmatprep.subr.mxu0 0.0
  %1307 = vmatpush1.msra.mxu0 0.0
  %1308 = vmatprep.subr.mxu0 0.0
  %1309 = vmatpush1.msra.mxu0 0.0
  %1310 = vmatprep.subr.mxu0 0.0
  %1311 = vmatpush1.msra.mxu0 0.0
  %1312 = vmatprep.subr.mxu0 0.0
  %1313 = vmatpush1.msra.mxu0 0.0
  %1314 = vmatprep.subr.mxu0 0.0
  %1315 = vmatpush1.msra.mxu0 0.0
  %1316 = vmatprep.subr.mxu0 0.0
  %1317 = vmatpush1.msra.mxu0 0.0
  %1318 = vmatprep.subr.mxu0 0.0
  %1319 = vmatpush1.msra.mxu0 0.0
  %1320 = vmatprep.subr.mxu0 0.0
  %1321 = vmatpush1.msra.mxu0 0.0
  %1322 = vmatprep.subr.mxu0 0.0
  %1323 = vmatpush1.msra.mxu0 0.0
  %1324 = vmatprep.subr.mxu0 0.0
  %1325 = vmatpush1.msra.mxu0 0.0
  %1326 = vmatprep.subr.mxu0 0.0
  %1327 = vmatpush1.msra.mxu0 0.0
  %1328 = vmatprep.subr.mxu0 0.0
  %1329 = vmatpush1.msra.mxu0 0.0
  %1330 = vmatprep.subr.mxu0 0.0
  %1331 = vmatpush1.msra.mxu0 0.0
  %1332 = vmatprep.mubr.f32.mxu0 0.0
  %1333 = vmatmul.mubr.f32.gmra.mrb[0].mxu0 %v1257
  %v1334 = vpop.f32.mrb[0].mxu0
  %v1335 = vadd.f32 %v1238, %v1334
  %v1336 = vpop.f32.mrb[0].mxu0
  %1337 = vmatprep.mubr.f32.mxu0 0.0
  %1338 = vmatmul.mubr.f32.gmra.mrb[0].mxu0 %v1260
  %v1339 = vpop.f32.mrb[0].mxu0
  %v1340 = vadd.f32 %v1243, %v1339
  %v1341 = vpop.f32.mrb[0].mxu0
  %1342 = vmatprep.mubr.f32.mxu0 0.0
  %1343 = vmatmul.mubr.f32.gmra.mrb[0].mxu0 %v1263
  %v1344 = vpop.f32.mrb[0].mxu0
  %v1345 = vadd.f32 %v1248, %v1344
  %v1346 = vpop.f32.mrb[0].mxu0
  %1347 = vmatprep.mubr.f32.mxu0 0.0
  %1348 = vmatmul.mubr.f32.gmra.mrb[0].mxu0 %v1266
  %v1349 = vpop.f32.mrb[0].mxu0
  %v1350 = vadd.f32 %v1253, %v1349
  %v1351 = vpop.f32.mrb[0].mxu0
  %1352 = vdwg.mxu0
  %v1353 = vld [vmem:[%s2 + $0x6] sm:$0x1]
  %v1354 = vlaneseq
  %v1355 = vshrl.u32 %v1354, 7
  %v1356 = vsub.s32 0, %v1355
  %v1357 = vrot.slane %v1353, %v1356
  %v1358 = vadd.f32 %v1335, %v1357
  %v1359 = vadd.f32 %v1340, %v1357
  %v1360 = vadd.f32 %v1345, %v1357
  %v1361 = vadd.f32 %v1350, %v1357
  %v1362 = vadd.f32 %v238, %v1358
  %v1363 = vadd.f32 %v239, %v1359
  %v1364 = vadd.f32 %v240, %v1360
  %v1365 = vadd.f32 %v241, %v1361
  %v1366 = vld [vmem:[%s2 + $0x7] sm:$0x1]
  %v1367 = vld [vmem:[%s2 + $0x8] sm:$0x1]
  %v1368 = vsel %vm152, %v1362, 0.0
  %1369 = vadd.xlane.f32.xlu0 %v1368
  %v1370 = vpop.xlane.xlu0 %1369
  %v1371 = vsel %vm152, %v1363, 0.0
  %1372 = vadd.xlane.f32.xlu0 %v1371
  %v1373 = vpop.xlane.xlu0 %1372
  %v1374 = vsel %vm152, %v1364, 0.0
  %1375 = vadd.xlane.f32.xlu0 %v1374
  %v1376 = vpop.xlane.xlu0 %1375
  %v1377 = vsel %vm152, %v1365, 0.0
  %1378 = vadd.xlane.f32.xlu0 %v1377
  %v1379 = vpop.xlane.xlu0 %1378
  %v1380 = vmul.f32 %v1370, %v185
  %v1381 = vmul.f32 %v1373, %v185
  %v1382 = vmul.f32 %v1376, %v185
  %v1383 = vmul.f32 %v1379, %v185
  %v1384 = vsub.f32 %v1362, %v1380
  %v1385 = vsub.f32 %v1363, %v1381
  %v1386 = vsub.f32 %v1364, %v1382
  %v1387 = vsub.f32 %v1365, %v1383
  %v1388 = vmul.f32 %v1384, %v1384
  %v1389 = vmul.f32 %v1385, %v1385
  %v1390 = vmul.f32 %v1386, %v1386
  %v1391 = vmul.f32 %v1387, %v1387
  %v1392 = vsel %vm152, %v1388, 0.0
  %1393 = vadd.xlane.f32.xlu0 %v1392
  %v1394 = vpop.xlane.xlu0 %1393
  %v1395 = vsel %vm152, %v1389, 0.0
  %1396 = vadd.xlane.f32.xlu0 %v1395
  %v1397 = vpop.xlane.xlu0 %1396
  %v1398 = vsel %vm152, %v1390, 0.0
  %1399 = vadd.xlane.f32.xlu0 %v1398
  %v1400 = vpop.xlane.xlu0 %1399
  %v1401 = vsel %vm152, %v1391, 0.0
  %1402 = vadd.xlane.f32.xlu0 %v1401
  %v1403 = vpop.xlane.xlu0 %1402
  %v1404 = vmul.f32 %v1394, %v185
  %v1405 = vmul.f32 %v1397, %v185
  %v1406 = vmul.f32 %v1400, %v185
  %v1407 = vmul.f32 %v1403, %v185
  %v1408 = vadd.f32 %v1404, 1e-05
  %v1409 = vadd.f32 %v1405, 1e-05
  %v1410 = vadd.f32 %v1406, 1e-05
  %v1411 = vadd.f32 %v1407, 1e-05
  %v1412 = vrsqrt.pop %v1408
  %v1413 = vrsqrt.pop %v1409
  %v1414 = vrsqrt.pop %v1410
  %v1415 = vrsqrt.pop %v1411
  %v1416 = vmul.f32 %v1384, %v1412
  %v1417 = vmul.f32 %v1385, %v1413
  %v1418 = vmul.f32 %v1386, %v1414
  %v1419 = vmul.f32 %v1387, %v1415
  %v1420 = vlaneseq
  %v1421 = vshrl.u32 %v1420, 7
  %v1422 = vsub.s32 0, %v1421
  %v1423 = vrot.slane %v1366, %v1422
  %v1424 = vmul.f32 %v1416, %v1423
  %v1425 = vmul.f32 %v1417, %v1423
  %v1426 = vmul.f32 %v1418, %v1423
  %v1427 = vmul.f32 %v1419, %v1423
  %v1428 = vlaneseq
  %v1429 = vshrl.u32 %v1428, 7
  %v1430 = vsub.s32 0, %v1429
  %v1431 = vrot.slane %v1367, %v1430
  %v1432 = vadd.f32 %v1424, %v1431
  %v1433 = vadd.f32 %v1425, %v1431
  %v1434 = vadd.f32 %v1426, %v1431
  %v1435 = vadd.f32 %v1427, %v1431
  %v1436 = vld [vmem:[%s5] sm:$0xff]
  %v1437 = vld [vmem:[%s5 + $0x8] sm:$0xff]
  %v1438 = vld [vmem:[%s5 + $0x10] sm:$0xff]
  %v1439 = vld [vmem:[%s5 + $0x18] sm:$0xff]
  %v1440 = vld [vmem:[%s5 + $0x20] sm:$0xff]
  %v1441 = vlaneseq
  %v1442 = vshrl.u32 %v1441, 7
  %v1443 = vsub.s32 0, %v1442
  %v1444 = vrot.slane %v1440, %v1443
  %v1446 = vsel %vm152, %v1432, 0
  %v1449 = vsel %vm152, %v1433, 0
  %v1452 = vsel %vm152, %v1434, 0
  %v1455 = vsel %vm152, %v1435, 0
  %1457 = vmatprep.subr.mxu0 0.0
  %1458 = vmatpush1.msra.mxu0 %v1436
  %1459 = vmatprep.subr.mxu0 0.0
  %1460 = vmatpush1.msra.mxu0 %v1437
  %1461 = vmatprep.subr.mxu0 0.0
  %1462 = vmatpush1.msra.mxu0 %v1438
  %1463 = vmatprep.subr.mxu0 0.0
  %1464 = vmatpush1.msra.mxu0 %v1439
  %1465 = vmatprep.subr.mxu0 0.0
  %1466 = vmatpush1.msra.mxu0 0.0
  %1467 = vmatprep.subr.mxu0 0.0
  %1468 = vmatpush1.msra.mxu0 0.0
  %1469 = vmatprep.subr.mxu0 0.0
  %1470 = vmatpush1.msra.mxu0 0.0
  %1471 = vmatprep.subr.mxu0 0.0
  %1472 = vmatpush1.msra.mxu0 0.0
  %1473 = vmatprep.subr.mxu0 0.0
  %1474 = vmatpush1.msra.mxu0 0.0
  %1475 = vmatprep.subr.mxu0 0.0
  %1476 = vmatpush1.msra.mxu0 0.0
  %1477 = vmatprep.subr.mxu0 0.0
  %1478 = vmatpush1.msra.mxu0 0.0
  %1479 = vmatprep.subr.mxu0 0.0
  %1480 = vmatpush1.msra.mxu0 0.0
  %1481 = vmatprep.subr.mxu0 0.0
  %1482 = vmatpush1.msra.mxu0 0.0
  %1483 = vmatprep.subr.mxu0 0.0
  %1484 = vmatpush1.msra.mxu0 0.0
  %1485 = vmatprep.subr.mxu0 0.0
  %1486 = vmatpush1.msra.mxu0 0.0
  %1487 = vmatprep.subr.mxu0 0.0
  %1488 = vmatpush1.msra.mxu0 0.0
  %1489 = vmatprep.subr.mxu0 0.0
  %1490 = vmatpush1.msra.mxu0 0.0
  %1491 = vmatprep.subr.mxu0 0.0
  %1492 = vmatpush1.msra.mxu0 0.0
  %1493 = vmatprep.subr.mxu0 0.0
  %1494 = vmatpush1.msra.mxu0 0.0
  %1495 = vmatprep.subr.mxu0 0.0
  %1496 = vmatpush1.msra.mxu0 0.0
  %1497 = vmatprep.subr.mxu0 0.0
  %1498 = vmatpush1.msra.mxu0 0.0
  %1499 = vmatprep.subr.mxu0 0.0
  %1500 = vmatpush1.msra.mxu0 0.0
  %1501 = vmatprep.subr.mxu0 0.0
  %1502 = vmatpush1.msra.mxu0 0.0
  %1503 = vmatprep.subr.mxu0 0.0
  %1504 = vmatpush1.msra.mxu0 0.0
  %1505 = vmatprep.subr.mxu0 0.0
  %1506 = vmatpush1.msra.mxu0 0.0
  %1507 = vmatprep.subr.mxu0 0.0
  %1508 = vmatpush1.msra.mxu0 0.0
  %1509 = vmatprep.subr.mxu0 0.0
  %1510 = vmatpush1.msra.mxu0 0.0
  %1511 = vmatprep.subr.mxu0 0.0
  %1512 = vmatpush1.msra.mxu0 0.0
  %1513 = vmatprep.subr.mxu0 0.0
  %1514 = vmatpush1.msra.mxu0 0.0
  %1515 = vmatprep.subr.mxu0 0.0
  %1516 = vmatpush1.msra.mxu0 0.0
  %1517 = vmatprep.subr.mxu0 0.0
  %1518 = vmatpush1.msra.mxu0 0.0
  %1519 = vmatprep.subr.mxu0 0.0
  %1520 = vmatpush1.msra.mxu0 0.0
  %1521 = vmatprep.mubr.f32.mxu0 0.0
  %1522 = vmatmul.mubr.f32.gmra.mrb[0].mxu0 %v1446
  %v1523 = vpop.f32.mrb[0].mxu0
  %v1524 = vadd.f32 %v1444, %v1523
  %v1525 = vpop.f32.mrb[0].mxu0
  %1526 = vmatprep.mubr.f32.mxu0 0.0
  %1527 = vmatmul.mubr.f32.gmra.mrb[0].mxu0 %v1449
  %v1528 = vpop.f32.mrb[0].mxu0
  %v1529 = vadd.f32 %v1444, %v1528
  %v1530 = vpop.f32.mrb[0].mxu0
  %1531 = vmatprep.mubr.f32.mxu0 0.0
  %1532 = vmatmul.mubr.f32.gmra.mrb[0].mxu0 %v1452
  %v1533 = vpop.f32.mrb[0].mxu0
  %v1534 = vadd.f32 %v1444, %v1533
  %v1535 = vpop.f32.mrb[0].mxu0
  %1536 = vmatprep.mubr.f32.mxu0 0.0
  %1537 = vmatmul.mubr.f32.gmra.mrb[0].mxu0 %v1455
  %v1538 = vpop.f32.mrb[0].mxu0
  %v1539 = vadd.f32 %v1444, %v1538
  %v1540 = vpop.f32.mrb[0].mxu0
  %1541 = vdwg.mxu0
  %v1542 = vmul.f32 %v1524, 0.5
  %v1543 = vmul.f32 %v1529, 0.5
  %v1544 = vmul.f32 %v1534, 0.5
  %v1545 = vmul.f32 %v1539, 0.5
  %v1546 = vmul.f32 %v1524, 0.70710677
  %v1547 = vmul.f32 %v1529, 0.70710677
  %v1548 = vmul.f32 %v1534, 0.70710677
  %v1549 = vmul.f32 %v1539, 0.70710677
  %v1550 = verf.f32.pop %v1546
  %v1551 = verf.f32.pop %v1547
  %v1552 = verf.f32.pop %v1548
  %v1553 = verf.f32.pop %v1549
  %v1554 = vadd.f32 %v1550, 1.0
  %v1555 = vadd.f32 %v1551, 1.0
  %v1556 = vadd.f32 %v1552, 1.0
  %v1557 = vadd.f32 %v1553, 1.0
  %v1558 = vmul.f32 %v1542, %v1554
  %v1559 = vmul.f32 %v1543, %v1555
  %v1560 = vmul.f32 %v1544, %v1556
  %v1561 = vmul.f32 %v1545, %v1557
  %v1562 = vld [vmem:[%s6] sm:$0xff]
  %v1563 = vld [vmem:[%s6 + $0x8] sm:$0xff]
  %v1564 = vld [vmem:[%s6 + $0x10] sm:$0xff]
  %v1565 = vld [vmem:[%s6 + $0x18] sm:$0xff]
  %v1566 = vld [vmem:[%s6 + $0x20] sm:$0xff]
  %v1567 = vld [vmem:[%s6 + $0x28] sm:$0xff]
  %v1568 = vld [vmem:[%s6 + $0x30] sm:$0xff]
  %v1569 = vld [vmem:[%s6 + $0x38] sm:$0xff]
  %v1570 = vld [vmem:[%s6 + $0x40] sm:$0xff]
  %v1571 = vld [vmem:[%s6 + $0x48] sm:$0xff]
  %v1572 = vld [vmem:[%s6 + $0x50] sm:$0xff]
  %v1573 = vld [vmem:[%s6 + $0x58] sm:$0xff]
  %v1574 = vld [vmem:[%s6 + $0x60] sm:$0xff]
  %v1575 = vld [vmem:[%s6 + $0x68] sm:$0xff]
  %v1576 = vld [vmem:[%s6 + $0x70] sm:$0xff]
  %v1577 = vld [vmem:[%s6 + $0x78] sm:$0xff]
  %v1578 = vld [vmem:[%s2 + $0x9] sm:$0x1]
  %v1579 = vlaneseq
  %v1580 = vshrl.u32 %v1579, 7
  %v1581 = vsub.s32 0, %v1580
  %v1582 = vrot.slane %v1578, %v1581
  %1583 = vmatprep.subr.mxu0 0.0
  %1584 = vmatpush1.msra.mxu0 %v1562
  %1585 = vmatprep.subr.mxu0 0.0
  %1586 = vmatpush1.msra.mxu0 %v1563
  %1587 = vmatprep.subr.mxu0 0.0
  %1588 = vmatpush1.msra.mxu0 %v1564
  %1589 = vmatprep.subr.mxu0 0.0
  %1590 = vmatpush1.msra.mxu0 %v1565
  %1591 = vmatprep.subr.mxu0 0.0
  %1592 = vmatpush1.msra.mxu0 %v1566
  %1593 = vmatprep.subr.mxu0 0.0
  %1594 = vmatpush1.msra.mxu0 %v1567
  %1595 = vmatprep.subr.mxu0 0.0
  %1596 = vmatpush1.msra.mxu0 %v1568
  %1597 = vmatprep.subr.mxu0 0.0
  %1598 = vmatpush1.msra.mxu0 %v1569
  %1599 = vmatprep.subr.mxu0 0.0
  %1600 = vmatpush1.msra.mxu0 %v1570
  %1601 = vmatprep.subr.mxu0 0.0
  %1602 = vmatpush1.msra.mxu0 %v1571
  %1603 = vmatprep.subr.mxu0 0.0
  %1604 = vmatpush1.msra.mxu0 %v1572
  %1605 = vmatprep.subr.mxu0 0.0
  %1606 = vmatpush1.msra.mxu0 %v1573
  %1607 = vmatprep.subr.mxu0 0.0
  %1608 = vmatpush1.msra.mxu0 %v1574
  %1609 = vmatprep.subr.mxu0 0.0
  %1610 = vmatpush1.msra.mxu0 %v1575
  %1611 = vmatprep.subr.mxu0 0.0
  %1612 = vmatpush1.msra.mxu0 %v1576
  %1613 = vmatprep.subr.mxu0 0.0
  %1614 = vmatpush1.msra.mxu0 %v1577
  %1615 = vmatprep.subr.mxu0 0.0
  %1616 = vmatpush1.msra.mxu0 0.0
  %1617 = vmatprep.subr.mxu0 0.0
  %1618 = vmatpush1.msra.mxu0 0.0
  %1619 = vmatprep.subr.mxu0 0.0
  %1620 = vmatpush1.msra.mxu0 0.0
  %1621 = vmatprep.subr.mxu0 0.0
  %1622 = vmatpush1.msra.mxu0 0.0
  %1623 = vmatprep.subr.mxu0 0.0
  %1624 = vmatpush1.msra.mxu0 0.0
  %1625 = vmatprep.subr.mxu0 0.0
  %1626 = vmatpush1.msra.mxu0 0.0
  %1627 = vmatprep.subr.mxu0 0.0
  %1628 = vmatpush1.msra.mxu0 0.0
  %1629 = vmatprep.subr.mxu0 0.0
  %1630 = vmatpush1.msra.mxu0 0.0
  %1631 = vmatprep.subr.mxu0 0.0
  %1632 = vmatpush1.msra.mxu0 0.0
  %1633 = vmatprep.subr.mxu0 0.0
  %1634 = vmatpush1.msra.mxu0 0.0
  %1635 = vmatprep.subr.mxu0 0.0
  %1636 = vmatpush1.msra.mxu0 0.0
  %1637 = vmatprep.subr.mxu0 0.0
  %1638 = vmatpush1.msra.mxu0 0.0
  %1639 = vmatprep.subr.mxu0 0.0
  %1640 = vmatpush1.msra.mxu0 0.0
  %1641 = vmatprep.subr.mxu0 0.0
  %1642 = vmatpush1.msra.mxu0 0.0
  %1643 = vmatprep.subr.mxu0 0.0
  %1644 = vmatpush1.msra.mxu0 0.0
  %1645 = vmatprep.subr.mxu0 0.0
  %1646 = vmatpush1.msra.mxu0 0.0
  %1647 = vmatprep.mubr.f32.mxu0 0.0
  %1648 = vmatmul.mubr.f32.gmra.mrb[0].mxu0 %v1558
  %v1649 = vpop.f32.mrb[0].mxu0
  %v1650 = vadd.f32 %v1582, %v1649
  %v1651 = vpop.f32.mrb[0].mxu0
  %1652 = vmatprep.mubr.f32.mxu0 0.0
  %1653 = vmatmul.mubr.f32.gmra.mrb[0].mxu0 %v1559
  %v1654 = vpop.f32.mrb[0].mxu0
  %v1655 = vadd.f32 %v1582, %v1654
  %v1656 = vpop.f32.mrb[0].mxu0
  %1657 = vmatprep.mubr.f32.mxu0 0.0
  %1658 = vmatmul.mubr.f32.gmra.mrb[0].mxu0 %v1560
  %v1659 = vpop.f32.mrb[0].mxu0
  %v1660 = vadd.f32 %v1582, %v1659
  %v1661 = vpop.f32.mrb[0].mxu0
  %1662 = vmatprep.mubr.f32.mxu0 0.0
  %1663 = vmatmul.mubr.f32.gmra.mrb[0].mxu0 %v1561
  %v1664 = vpop.f32.mrb[0].mxu0
  %v1665 = vadd.f32 %v1582, %v1664
  %v1666 = vpop.f32.mrb[0].mxu0
  %1667 = vdwg.mxu0
  %v1668 = vadd.f32 %v1432, %v1650
  %v1669 = vadd.f32 %v1433, %v1655
  %v1670 = vadd.f32 %v1434, %v1660
  %v1671 = vadd.f32 %v1435, %v1665
  %v1672 = vld [vmem:[%s2 + $0xa] sm:$0x1]
  %v1673 = vld [vmem:[%s2 + $0xb] sm:$0x1]
  %v1674 = vsel %vm152, %v1668, 0.0
  %1675 = vadd.xlane.f32.xlu0 %v1674
  %v1676 = vpop.xlane.xlu0 %1675
  %v1677 = vsel %vm152, %v1669, 0.0
  %1678 = vadd.xlane.f32.xlu0 %v1677
  %v1679 = vpop.xlane.xlu0 %1678
  %v1680 = vsel %vm152, %v1670, 0.0
  %1681 = vadd.xlane.f32.xlu0 %v1680
  %v1682 = vpop.xlane.xlu0 %1681
  %v1683 = vsel %vm152, %v1671, 0.0
  %1684 = vadd.xlane.f32.xlu0 %v1683
  %v1685 = vpop.xlane.xlu0 %1684
  %v1686 = vmul.f32 %v1676, %v185
  %v1687 = vmul.f32 %v1679, %v185
  %v1688 = vmul.f32 %v1682, %v185
  %v1689 = vmul.f32 %v1685, %v185
  %v1690 = vsub.f32 %v1668, %v1686
  %v1691 = vsub.f32 %v1669, %v1687
  %v1692 = vsub.f32 %v1670, %v1688
  %v1693 = vsub.f32 %v1671, %v1689
  %v1694 = vmul.f32 %v1690, %v1690
  %v1695 = vmul.f32 %v1691, %v1691
  %v1696 = vmul.f32 %v1692, %v1692
  %v1697 = vmul.f32 %v1693, %v1693
  %v1698 = vsel %vm152, %v1694, 0.0
  %1699 = vadd.xlane.f32.xlu0 %v1698
  %v1700 = vpop.xlane.xlu0 %1699
  %v1701 = vsel %vm152, %v1695, 0.0
  %1702 = vadd.xlane.f32.xlu0 %v1701
  %v1703 = vpop.xlane.xlu0 %1702
  %v1704 = vsel %vm152, %v1696, 0.0
  %1705 = vadd.xlane.f32.xlu0 %v1704
  %v1706 = vpop.xlane.xlu0 %1705
  %v1707 = vsel %vm152, %v1697, 0.0
  %1708 = vadd.xlane.f32.xlu0 %v1707
  %v1709 = vpop.xlane.xlu0 %1708
  %v1710 = vmul.f32 %v1700, %v185
  %v1711 = vmul.f32 %v1703, %v185
  %v1712 = vmul.f32 %v1706, %v185
  %v1713 = vmul.f32 %v1709, %v185
  %v1714 = vadd.f32 %v1710, 1e-05
  %v1715 = vadd.f32 %v1711, 1e-05
  %v1716 = vadd.f32 %v1712, 1e-05
  %v1717 = vadd.f32 %v1713, 1e-05
  %v1718 = vrsqrt.pop %v1714
  %v1719 = vrsqrt.pop %v1715
  %v1720 = vrsqrt.pop %v1716
  %v1721 = vrsqrt.pop %v1717
  %v1722 = vmul.f32 %v1690, %v1718
  %v1723 = vmul.f32 %v1691, %v1719
  %v1724 = vmul.f32 %v1692, %v1720
  %v1725 = vmul.f32 %v1693, %v1721
  %v1726 = vlaneseq
  %v1727 = vshrl.u32 %v1726, 7
  %v1728 = vsub.s32 0, %v1727
  %v1729 = vrot.slane %v1672, %v1728
  %v1730 = vmul.f32 %v1722, %v1729
  %v1731 = vmul.f32 %v1723, %v1729
  %v1732 = vmul.f32 %v1724, %v1729
  %v1733 = vmul.f32 %v1725, %v1729
  %v1734 = vlaneseq
  %v1735 = vshrl.u32 %v1734, 7
  %v1736 = vsub.s32 0, %v1735
  %v1737 = vrot.slane %v1673, %v1736
  %v1738 = vadd.f32 %v1730, %v1737
  %v1739 = vadd.f32 %v1731, %v1737
  %v1740 = vadd.f32 %v1732, %v1737
  %v1741 = vadd.f32 %v1733, %v1737
  %s1742 = scalar_lea.vmem %s3, 32
  %v1743 = vld [vmem:[%s1742] sm:$0xff]
  %v1744 = vld [vmem:[%s1742 + $0x8] sm:$0xff]
  %v1745 = vld [vmem:[%s1742 + $0x10] sm:$0xff]
  %v1746 = vld [vmem:[%s1742 + $0x18] sm:$0xff]
  %v1748 = vsel %vm152, %v1738, 0
  %v1751 = vsel %vm152, %v1739, 0
  %v1754 = vsel %vm152, %v1740, 0
  %v1757 = vsel %vm152, %v1741, 0
  %1759 = vmatprep.subr.mxu0 0.0
  %1760 = vmatpush1.msra.mxu0 %v1743
  %1761 = vmatprep.subr.mxu0 0.0
  %1762 = vmatpush1.msra.mxu0 %v1744
  %1763 = vmatprep.subr.mxu0 0.0
  %1764 = vmatpush1.msra.mxu0 %v1745
  %1765 = vmatprep.subr.mxu0 0.0
  %1766 = vmatpush1.msra.mxu0 %v1746
  %1767 = vmatprep.subr.mxu0 0.0
  %1768 = vmatpush1.msra.mxu0 0.0
  %1769 = vmatprep.subr.mxu0 0.0
  %1770 = vmatpush1.msra.mxu0 0.0
  %1771 = vmatprep.subr.mxu0 0.0
  %1772 = vmatpush1.msra.mxu0 0.0
  %1773 = vmatprep.subr.mxu0 0.0
  %1774 = vmatpush1.msra.mxu0 0.0
  %1775 = vmatprep.subr.mxu0 0.0
  %1776 = vmatpush1.msra.mxu0 0.0
  %1777 = vmatprep.subr.mxu0 0.0
  %1778 = vmatpush1.msra.mxu0 0.0
  %1779 = vmatprep.subr.mxu0 0.0
  %1780 = vmatpush1.msra.mxu0 0.0
  %1781 = vmatprep.subr.mxu0 0.0
  %1782 = vmatpush1.msra.mxu0 0.0
  %1783 = vmatprep.subr.mxu0 0.0
  %1784 = vmatpush1.msra.mxu0 0.0
  %1785 = vmatprep.subr.mxu0 0.0
  %1786 = vmatpush1.msra.mxu0 0.0
  %1787 = vmatprep.subr.mxu0 0.0
  %1788 = vmatpush1.msra.mxu0 0.0
  %1789 = vmatprep.subr.mxu0 0.0
  %1790 = vmatpush1.msra.mxu0 0.0
  %1791 = vmatprep.subr.mxu0 0.0
  %1792 = vmatpush1.msra.mxu0 0.0
  %1793 = vmatprep.subr.mxu0 0.0
  %1794 = vmatpush1.msra.mxu0 0.0
  %1795 = vmatprep.subr.mxu0 0.0
  %1796 = vmatpush1.msra.mxu0 0.0
  %1797 = vmatprep.subr.mxu0 0.0
  %1798 = vmatpush1.msra.mxu0 0.0
  %1799 = vmatprep.subr.mxu0 0.0
  %1800 = vmatpush1.msra.mxu0 0.0
  %1801 = vmatprep.subr.mxu0 0.0
  %1802 = vmatpush1.msra.mxu0 0.0
  %1803 = vmatprep.subr.mxu0 0.0
  %1804 = vmatpush1.msra.mxu0 0.0
  %1805 = vmatprep.subr.mxu0 0.0
  %1806 = vmatpush1.msra.mxu0 0.0
  %1807 = vmatprep.subr.mxu0 0.0
  %1808 = vmatpush1.msra.mxu0 0.0
  %1809 = vmatprep.subr.mxu0 0.0
  %1810 = vmatpush1.msra.mxu0 0.0
  %1811 = vmatprep.subr.mxu0 0.0
  %1812 = vmatpush1.msra.mxu0 0.0
  %1813 = vmatprep.subr.mxu0 0.0
  %1814 = vmatpush1.msra.mxu0 0.0
  %1815 = vmatprep.subr.mxu0 0.0
  %1816 = vmatpush1.msra.mxu0 0.0
  %1817 = vmatprep.subr.mxu0 0.0
  %1818 = vmatpush1.msra.mxu0 0.0
  %1819 = vmatprep.subr.mxu0 0.0
  %1820 = vmatpush1.msra.mxu0 0.0
  %1821 = vmatprep.subr.mxu0 0.0
  %1822 = vmatpush1.msra.mxu0 0.0
  %1823 = vmatprep.mubr.f32.mxu0 0.0
  %1824 = vmatmul.mubr.f32.gmra.mrb[0].mxu0 %v1748
  %v1825 = vpop.f32.mrb[0].mxu0
  %v1826 = vadd.f32 0.0, %v1825
  %v1827 = vpop.f32.mrb[0].mxu0
  %1828 = vmatprep.mubr.f32.mxu0 0.0
  %1829 = vmatmul.mubr.f32.gmra.mrb[0].mxu0 %v1751
  %v1830 = vpop.f32.mrb[0].mxu0
  %v1831 = vadd.f32 0.0, %v1830
  %v1832 = vpop.f32.mrb[0].mxu0
  %1833 = vmatprep.mubr.f32.mxu0 0.0
  %1834 = vmatmul.mubr.f32.gmra.mrb[0].mxu0 %v1754
  %v1835 = vpop.f32.mrb[0].mxu0
  %v1836 = vadd.f32 0.0, %v1835
  %v1837 = vpop.f32.mrb[0].mxu0
  %1838 = vmatprep.mubr.f32.mxu0 0.0
  %1839 = vmatmul.mubr.f32.gmra.mrb[0].mxu0 %v1757
  %v1840 = vpop.f32.mrb[0].mxu0
  %v1841 = vadd.f32 0.0, %v1840
  %v1842 = vpop.f32.mrb[0].mxu0
  %1843 = vdwg.mxu0
  %s1844 = scalar_lea.vmem %s4, 32
  %v1845 = vld [vmem:[%s1844] sm:$0xff]
  %v1846 = vld [vmem:[%s1844 + $0x8] sm:$0xff]
  %v1847 = vld [vmem:[%s1844 + $0x10] sm:$0xff]
  %v1848 = vld [vmem:[%s1844 + $0x18] sm:$0xff]
  %1851 = vrot.lane.b32.xlu0 %v1826, 96
  %v1852 = vpop.permute.xlu0 %1851
  %1853 = vrot.lane.b32.xlu0 %v1831, 96
  %v1854 = vpop.permute.xlu0 %1853
  %v1855 = vsel %vm35, %v1826, 0
  %v1857 = vsel %vm35, %v1831, 0
  %v1859 = vsel %vm35, %v1852, 0
  %v1861 = vsel %vm35, %v1854, 0
  %1863 = vmatprep.subr.mxu0 0.0
  %1864 = vmatpush1.xpose.msra.mxu0 %v1859
  %1865 = vmatprep.subr.mxu0 0.0
  %1866 = vmatpush1.xpose.msra.mxu0 %v1861
  %1867 = vmatprep.subr.mxu0 0.0
  %1868 = vmatpush1.xpose.msra.mxu0 0.0
  %1869 = vmatprep.subr.mxu0 0.0
  %1870 = vmatpush1.xpose.msra.mxu0 0.0
  %1871 = vmatprep.subr.mxu0 0.0
  %1872 = vmatpush1.xpose.msra.mxu0 0.0
  %1873 = vmatprep.subr.mxu0 0.0
  %1874 = vmatpush1.xpose.msra.mxu0 0.0
  %1875 = vmatprep.subr.mxu0 0.0
  %1876 = vmatpush1.xpose.msra.mxu0 0.0
  %1877 = vmatprep.subr.mxu0 0.0
  %1878 = vmatpush1.xpose.msra.mxu0 0.0
  %1879 = vmatprep.subr.mxu0 0.0
  %1880 = vmatpush1.xpose.msra.mxu0 0.0
  %1881 = vmatprep.subr.mxu0 0.0
  %1882 = vmatpush1.xpose.msra.mxu0 0.0
  %1883 = vmatprep.subr.mxu0 0.0
  %1884 = vmatpush1.xpose.msra.mxu0 0.0
  %1885 = vmatprep.subr.mxu0 0.0
  %1886 = vmatpush1.xpose.msra.mxu0 0.0
  %1887 = vmatprep.subr.mxu0 0.0
  %1888 = vmatpush1.xpose.msra.mxu0 0.0
  %1889 = vmatprep.subr.mxu0 0.0
  %1890 = vmatpush1.xpose.msra.mxu0 0.0
  %1891 = vmatprep.subr.mxu0 0.0
  %1892 = vmatpush1.xpose.msra.mxu0 0.0
  %1893 = vmatprep.subr.mxu0 0.0
  %1894 = vmatpush1.xpose.msra.mxu0 0.0
  %1895 = vmatprep.subr.mxu0 0.0
  %1896 = vmatpush1.xpose.msra.mxu0 0.0
  %1897 = vmatprep.subr.mxu0 0.0
  %1898 = vmatpush1.xpose.msra.mxu0 0.0
  %1899 = vmatprep.subr.mxu0 0.0
  %1900 = vmatpush1.xpose.msra.mxu0 0.0
  %1901 = vmatprep.subr.mxu0 0.0
  %1902 = vmatpush1.xpose.msra.mxu0 0.0
  %1903 = vmatprep.subr.mxu0 0.0
  %1904 = vmatpush1.xpose.msra.mxu0 0.0
  %1905 = vmatprep.subr.mxu0 0.0
  %1906 = vmatpush1.xpose.msra.mxu0 0.0
  %1907 = vmatprep.subr.mxu0 0.0
  %1908 = vmatpush1.xpose.msra.mxu0 0.0
  %1909 = vmatprep.subr.mxu0 0.0
  %1910 = vmatpush1.xpose.msra.mxu0 0.0
  %1911 = vmatprep.subr.mxu0 0.0
  %1912 = vmatpush1.xpose.msra.mxu0 0.0
  %1913 = vmatprep.subr.mxu0 0.0
  %1914 = vmatpush1.xpose.msra.mxu0 0.0
  %1915 = vmatprep.subr.mxu0 0.0
  %1916 = vmatpush1.xpose.msra.mxu0 0.0
  %1917 = vmatprep.subr.mxu0 0.0
  %1918 = vmatpush1.xpose.msra.mxu0 0.0
  %1919 = vmatprep.subr.mxu0 0.0
  %1920 = vmatpush1.xpose.msra.mxu0 0.0
  %1921 = vmatprep.subr.mxu0 0.0
  %1922 = vmatpush1.xpose.msra.mxu0 0.0
  %1923 = vmatprep.subr.mxu0 0.0
  %1924 = vmatpush1.xpose.msra.mxu0 0.0
  %1925 = vmatprep.subr.mxu0 0.0
  %1926 = vmatpush1.xpose.msra.mxu0 0.0
  %1927 = vmatprep.mubr.f32.mxu0 0.0
  %1928 = vmatmul.mubr.f32.gmra.mrb[0].mxu0 %v1855
  %v1929 = vpop.f32.mrb[0].mxu0
  %v1930 = vadd.f32 0.0, %v1929
  %v1931 = vpop.f32.mrb[0].mxu0
  %1932 = vmatprep.mubr.f32.mxu0 0.0
  %1933 = vmatmul.mubr.f32.gmra.mrb[0].mxu0 %v1857
  %v1934 = vpop.f32.mrb[0].mxu0
  %v1935 = vadd.f32 0.0, %v1934
  %v1936 = vpop.f32.mrb[0].mxu0
  %1937 = vdwg.mxu0
  %1940 = vrot.lane.b32.xlu0 %v1836, 96
  %v1941 = vpop.permute.xlu0 %1940
  %1942 = vrot.lane.b32.xlu0 %v1841, 96
  %v1943 = vpop.permute.xlu0 %1942
  %v1944 = vsel %vm35, %v1836, 0
  %v1946 = vsel %vm35, %v1841, 0
  %v1948 = vsel %vm35, %v1941, 0
  %v1950 = vsel %vm35, %v1943, 0
  %1952 = vmatprep.subr.mxu0 0.0
  %1953 = vmatpush1.xpose.msra.mxu0 %v1948
  %1954 = vmatprep.subr.mxu0 0.0
  %1955 = vmatpush1.xpose.msra.mxu0 %v1950
  %1956 = vmatprep.subr.mxu0 0.0
  %1957 = vmatpush1.xpose.msra.mxu0 0.0
  %1958 = vmatprep.subr.mxu0 0.0
  %1959 = vmatpush1.xpose.msra.mxu0 0.0
  %1960 = vmatprep.subr.mxu0 0.0
  %1961 = vmatpush1.xpose.msra.mxu0 0.0
  %1962 = vmatprep.subr.mxu0 0.0
  %1963 = vmatpush1.xpose.msra.mxu0 0.0
  %1964 = vmatprep.subr.mxu0 0.0
  %1965 = vmatpush1.xpose.msra.mxu0 0.0
  %1966 = vmatprep.subr.mxu0 0.0
  %1967 = vmatpush1.xpose.msra.mxu0 0.0
  %1968 = vmatprep.subr.mxu0 0.0
  %1969 = vmatpush1.xpose.msra.mxu0 0.0
  %1970 = vmatprep.subr.mxu0 0.0
  %1971 = vmatpush1.xpose.msra.mxu0 0.0
  %1972 = vmatprep.subr.mxu0 0.0
  %1973 = vmatpush1.xpose.msra.mxu0 0.0
  %1974 = vmatprep.subr.mxu0 0.0
  %1975 = vmatpush1.xpose.msra.mxu0 0.0
  %1976 = vmatprep.subr.mxu0 0.0
  %1977 = vmatpush1.xpose.msra.mxu0 0.0
  %1978 = vmatprep.subr.mxu0 0.0
  %1979 = vmatpush1.xpose.msra.mxu0 0.0
  %1980 = vmatprep.subr.mxu0 0.0
  %1981 = vmatpush1.xpose.msra.mxu0 0.0
  %1982 = vmatprep.subr.mxu0 0.0
  %1983 = vmatpush1.xpose.msra.mxu0 0.0
  %1984 = vmatprep.subr.mxu0 0.0
  %1985 = vmatpush1.xpose.msra.mxu0 0.0
  %1986 = vmatprep.subr.mxu0 0.0
  %1987 = vmatpush1.xpose.msra.mxu0 0.0
  %1988 = vmatprep.subr.mxu0 0.0
  %1989 = vmatpush1.xpose.msra.mxu0 0.0
  %1990 = vmatprep.subr.mxu0 0.0
  %1991 = vmatpush1.xpose.msra.mxu0 0.0
  %1992 = vmatprep.subr.mxu0 0.0
  %1993 = vmatpush1.xpose.msra.mxu0 0.0
  %1994 = vmatprep.subr.mxu0 0.0
  %1995 = vmatpush1.xpose.msra.mxu0 0.0
  %1996 = vmatprep.subr.mxu0 0.0
  %1997 = vmatpush1.xpose.msra.mxu0 0.0
  %1998 = vmatprep.subr.mxu0 0.0
  %1999 = vmatpush1.xpose.msra.mxu0 0.0
  %2000 = vmatprep.subr.mxu0 0.0
  %2001 = vmatpush1.xpose.msra.mxu0 0.0
  %2002 = vmatprep.subr.mxu0 0.0
  %2003 = vmatpush1.xpose.msra.mxu0 0.0
  %2004 = vmatprep.subr.mxu0 0.0
  %2005 = vmatpush1.xpose.msra.mxu0 0.0
  %2006 = vmatprep.subr.mxu0 0.0
  %2007 = vmatpush1.xpose.msra.mxu0 0.0
  %2008 = vmatprep.subr.mxu0 0.0
  %2009 = vmatpush1.xpose.msra.mxu0 0.0
  %2010 = vmatprep.subr.mxu0 0.0
  %2011 = vmatpush1.xpose.msra.mxu0 0.0
  %2012 = vmatprep.subr.mxu0 0.0
  %2013 = vmatpush1.xpose.msra.mxu0 0.0
  %2014 = vmatprep.subr.mxu0 0.0
  %2015 = vmatpush1.xpose.msra.mxu0 0.0
  %2016 = vmatprep.mubr.f32.mxu0 0.0
  %2017 = vmatmul.mubr.f32.gmra.mrb[0].mxu0 %v1944
  %v2018 = vpop.f32.mrb[0].mxu0
  %v2019 = vadd.f32 0.0, %v2018
  %v2020 = vpop.f32.mrb[0].mxu0
  %2021 = vmatprep.mubr.f32.mxu0 0.0
  %2022 = vmatmul.mubr.f32.gmra.mrb[0].mxu0 %v1946
  %v2023 = vpop.f32.mrb[0].mxu0
  %v2024 = vadd.f32 0.0, %v2023
  %v2025 = vpop.f32.mrb[0].mxu0
  %2026 = vdwg.mxu0
  %v2027 = vmul.f32 %v1930, 0.25
  %v2028 = vmul.f32 %v1935, 0.25
  %v2029 = vmul.f32 %v2019, 0.25
  %v2030 = vmul.f32 %v2024, 0.25
  %v2031 = vadd.f32 %v2027, %v170
  %v2032 = vadd.f32 %v2028, %v170
  %v2033 = vadd.f32 %v2029, %v170
  %v2034 = vadd.f32 %v2030, %v170
  %v2035 = vsel %vm35, %v2031, -inf
  %2036 = vmax.xlane.f32.xlu0 %v2035
  %v2037 = vpop.xlane.xlu0 %2036
  %v2038 = vsel %vm35, %v2032, -inf
  %2039 = vmax.xlane.f32.xlu0 %v2038
  %v2040 = vpop.xlane.xlu0 %2039
  %v2041 = vsel %vm35, %v2033, -inf
  %2042 = vmax.xlane.f32.xlu0 %v2041
  %v2043 = vpop.xlane.xlu0 %2042
  %v2044 = vsel %vm35, %v2034, -inf
  %2045 = vmax.xlane.f32.xlu0 %v2044
  %v2046 = vpop.xlane.xlu0 %2045
  %v2047 = vsub.f32 %v2031, %v2037
  %v2048 = vsub.f32 %v2032, %v2040
  %v2049 = vsub.f32 %v2033, %v2043
  %v2050 = vsub.f32 %v2034, %v2046
  %v2051 = vmul.f32 %v2047, 1.442695
  %v2052 = vpow.pop %v2051
  %v2053 = vmul.f32 %v2048, 1.442695
  %v2054 = vpow.pop %v2053
  %v2055 = vmul.f32 %v2049, 1.442695
  %v2056 = vpow.pop %v2055
  %v2057 = vmul.f32 %v2050, 1.442695
  %v2058 = vpow.pop %v2057
  %v2059 = vsel %vm35, %v2052, 0.0
  %2060 = vadd.xlane.f32.xlu0 %v2059
  %v2061 = vpop.xlane.xlu0 %2060
  %v2062 = vsel %vm35, %v2054, 0.0
  %2063 = vadd.xlane.f32.xlu0 %v2062
  %v2064 = vpop.xlane.xlu0 %2063
  %v2065 = vsel %vm35, %v2056, 0.0
  %2066 = vadd.xlane.f32.xlu0 %v2065
  %v2067 = vpop.xlane.xlu0 %2066
  %v2068 = vsel %vm35, %v2058, 0.0
  %2069 = vadd.xlane.f32.xlu0 %v2068
  %v2070 = vpop.xlane.xlu0 %2069
  %v2071 = vrcp.pop %v2061
  %v2072 = vmul.f32 %v2052, %v2071
  %v2073 = vrcp.pop %v2064
  %v2074 = vmul.f32 %v2054, %v2073
  %v2075 = vrcp.pop %v2067
  %v2076 = vmul.f32 %v2056, %v2075
  %v2077 = vrcp.pop %v2070
  %v2078 = vmul.f32 %v2058, %v2077
  %2079 = vrot.lane.b32.xlu0 %v1826, 64
  %v2080 = vpop.permute.xlu0 %2079
  %2081 = vrot.lane.b32.xlu0 %v1831, 64
  %v2082 = vpop.permute.xlu0 %2081
  %v2086 = vsel %vm35, %v2072, 0
  %v2089 = vsel %vm35, %v2074, 0
  %2091 = vmatprep.subr.mxu0 0.0
  %2092 = vmatpush1.msra.mxu0 %v2080
  %2093 = vmatprep.subr.mxu0 0.0
  %2094 = vmatpush1.msra.mxu0 %v2082
  %2095 = vmatprep.subr.mxu0 0.0
  %2096 = vmatpush1.msra.mxu0 0.0
  %2097 = vmatprep.subr.mxu0 0.0
  %2098 = vmatpush1.msra.mxu0 0.0
  %2099 = vmatprep.subr.mxu0 0.0
  %2100 = vmatpush1.msra.mxu0 0.0
  %2101 = vmatprep.subr.mxu0 0.0
  %2102 = vmatpush1.msra.mxu0 0.0
  %2103 = vmatprep.subr.mxu0 0.0
  %2104 = vmatpush1.msra.mxu0 0.0
  %2105 = vmatprep.subr.mxu0 0.0
  %2106 = vmatpush1.msra.mxu0 0.0
  %2107 = vmatprep.subr.mxu0 0.0
  %2108 = vmatpush1.msra.mxu0 0.0
  %2109 = vmatprep.subr.mxu0 0.0
  %2110 = vmatpush1.msra.mxu0 0.0
  %2111 = vmatprep.subr.mxu0 0.0
  %2112 = vmatpush1.msra.mxu0 0.0
  %2113 = vmatprep.subr.mxu0 0.0
  %2114 = vmatpush1.msra.mxu0 0.0
  %2115 = vmatprep.subr.mxu0 0.0
  %2116 = vmatpush1.msra.mxu0 0.0
  %2117 = vmatprep.subr.mxu0 0.0
  %2118 = vmatpush1.msra.mxu0 0.0
  %2119 = vmatprep.subr.mxu0 0.0
  %2120 = vmatpush1.msra.mxu0 0.0
  %2121 = vmatprep.subr.mxu0 0.0
  %2122 = vmatpush1.msra.mxu0 0.0
  %2123 = vmatprep.subr.mxu0 0.0
  %2124 = vmatpush1.msra.mxu0 0.0
  %2125 = vmatprep.subr.mxu0 0.0
  %2126 = vmatpush1.msra.mxu0 0.0
  %2127 = vmatprep.subr.mxu0 0.0
  %2128 = vmatpush1.msra.mxu0 0.0
  %2129 = vmatprep.subr.mxu0 0.0
  %2130 = vmatpush1.msra.mxu0 0.0
  %2131 = vmatprep.subr.mxu0 0.0
  %2132 = vmatpush1.msra.mxu0 0.0
  %2133 = vmatprep.subr.mxu0 0.0
  %2134 = vmatpush1.msra.mxu0 0.0
  %2135 = vmatprep.subr.mxu0 0.0
  %2136 = vmatpush1.msra.mxu0 0.0
  %2137 = vmatprep.subr.mxu0 0.0
  %2138 = vmatpush1.msra.mxu0 0.0
  %2139 = vmatprep.subr.mxu0 0.0
  %2140 = vmatpush1.msra.mxu0 0.0
  %2141 = vmatprep.subr.mxu0 0.0
  %2142 = vmatpush1.msra.mxu0 0.0
  %2143 = vmatprep.subr.mxu0 0.0
  %2144 = vmatpush1.msra.mxu0 0.0
  %2145 = vmatprep.subr.mxu0 0.0
  %2146 = vmatpush1.msra.mxu0 0.0
  %2147 = vmatprep.subr.mxu0 0.0
  %2148 = vmatpush1.msra.mxu0 0.0
  %2149 = vmatprep.subr.mxu0 0.0
  %2150 = vmatpush1.msra.mxu0 0.0
  %2151 = vmatprep.subr.mxu0 0.0
  %2152 = vmatpush1.msra.mxu0 0.0
  %2153 = vmatprep.subr.mxu0 0.0
  %2154 = vmatpush1.msra.mxu0 0.0
  %2155 = vmatprep.mubr.f32.mxu0 0.0
  %2156 = vmatmul.mubr.f32.gmra.mrb[0].mxu0 %v2086
  %v2157 = vpop.f32.mrb[0].mxu0
  %v2158 = vadd.f32 0.0, %v2157
  %v2159 = vpop.f32.mrb[0].mxu0
  %2160 = vmatprep.mubr.f32.mxu0 0.0
  %2161 = vmatmul.mubr.f32.gmra.mrb[0].mxu0 %v2089
  %v2162 = vpop.f32.mrb[0].mxu0
  %v2163 = vadd.f32 0.0, %v2162
  %v2164 = vpop.f32.mrb[0].mxu0
  %2165 = vdwg.mxu0
  %2166 = vrot.lane.b32.xlu0 %v1836, 64
  %v2167 = vpop.permute.xlu0 %2166
  %2168 = vrot.lane.b32.xlu0 %v1841, 64
  %v2169 = vpop.permute.xlu0 %2168
  %v2173 = vsel %vm35, %v2076, 0
  %v2176 = vsel %vm35, %v2078, 0
  %2178 = vmatprep.subr.mxu0 0.0
  %2179 = vmatpush1.msra.mxu0 %v2167
  %2180 = vmatprep.subr.mxu0 0.0
  %2181 = vmatpush1.msra.mxu0 %v2169
  %2182 = vmatprep.subr.mxu0 0.0
  %2183 = vmatpush1.msra.mxu0 0.0
  %2184 = vmatprep.subr.mxu0 0.0
  %2185 = vmatpush1.msra.mxu0 0.0
  %2186 = vmatprep.subr.mxu0 0.0
  %2187 = vmatpush1.msra.mxu0 0.0
  %2188 = vmatprep.subr.mxu0 0.0
  %2189 = vmatpush1.msra.mxu0 0.0
  %2190 = vmatprep.subr.mxu0 0.0
  %2191 = vmatpush1.msra.mxu0 0.0
  %2192 = vmatprep.subr.mxu0 0.0
  %2193 = vmatpush1.msra.mxu0 0.0
  %2194 = vmatprep.subr.mxu0 0.0
  %2195 = vmatpush1.msra.mxu0 0.0
  %2196 = vmatprep.subr.mxu0 0.0
  %2197 = vmatpush1.msra.mxu0 0.0
  %2198 = vmatprep.subr.mxu0 0.0
  %2199 = vmatpush1.msra.mxu0 0.0
  %2200 = vmatprep.subr.mxu0 0.0
  %2201 = vmatpush1.msra.mxu0 0.0
  %2202 = vmatprep.subr.mxu0 0.0
  %2203 = vmatpush1.msra.mxu0 0.0
  %2204 = vmatprep.subr.mxu0 0.0
  %2205 = vmatpush1.msra.mxu0 0.0
  %2206 = vmatprep.subr.mxu0 0.0
  %2207 = vmatpush1.msra.mxu0 0.0
  %2208 = vmatprep.subr.mxu0 0.0
  %2209 = vmatpush1.msra.mxu0 0.0
  %2210 = vmatprep.subr.mxu0 0.0
  %2211 = vmatpush1.msra.mxu0 0.0
  %2212 = vmatprep.subr.mxu0 0.0
  %2213 = vmatpush1.msra.mxu0 0.0
  %2214 = vmatprep.subr.mxu0 0.0
  %2215 = vmatpush1.msra.mxu0 0.0
  %2216 = vmatprep.subr.mxu0 0.0
  %2217 = vmatpush1.msra.mxu0 0.0
  %2218 = vmatprep.subr.mxu0 0.0
  %2219 = vmatpush1.msra.mxu0 0.0
  %2220 = vmatprep.subr.mxu0 0.0
  %2221 = vmatpush1.msra.mxu0 0.0
  %2222 = vmatprep.subr.mxu0 0.0
  %2223 = vmatpush1.msra.mxu0 0.0
  %2224 = vmatprep.subr.mxu0 0.0
  %2225 = vmatpush1.msra.mxu0 0.0
  %2226 = vmatprep.subr.mxu0 0.0
  %2227 = vmatpush1.msra.mxu0 0.0
  %2228 = vmatprep.subr.mxu0 0.0
  %2229 = vmatpush1.msra.mxu0 0.0
  %2230 = vmatprep.subr.mxu0 0.0
  %2231 = vmatpush1.msra.mxu0 0.0
  %2232 = vmatprep.subr.mxu0 0.0
  %2233 = vmatpush1.msra.mxu0 0.0
  %2234 = vmatprep.subr.mxu0 0.0
  %2235 = vmatpush1.msra.mxu0 0.0
  %2236 = vmatprep.subr.mxu0 0.0
  %2237 = vmatpush1.msra.mxu0 0.0
  %2238 = vmatprep.subr.mxu0 0.0
  %2239 = vmatpush1.msra.mxu0 0.0
  %2240 = vmatprep.subr.mxu0 0.0
  %2241 = vmatpush1.msra.mxu0 0.0
  %2242 = vmatprep.mubr.f32.mxu0 0.0
  %2243 = vmatmul.mubr.f32.gmra.mrb[0].mxu0 %v2173
  %v2244 = vpop.f32.mrb[0].mxu0
  %v2245 = vadd.f32 0.0, %v2244
  %v2246 = vpop.f32.mrb[0].mxu0
  %2247 = vmatprep.mubr.f32.mxu0 0.0
  %2248 = vmatmul.mubr.f32.gmra.mrb[0].mxu0 %v2176
  %v2249 = vpop.f32.mrb[0].mxu0
  %v2250 = vadd.f32 0.0, %v2249
  %v2251 = vpop.f32.mrb[0].mxu0
  %2252 = vdwg.mxu0
  %2253 = vrot.lane.b32.xlu0 %v1826, 112
  %v2254 = vpop.permute.xlu0 %2253
  %2255 = vrot.lane.b32.xlu0 %v1831, 112
  %v2256 = vpop.permute.xlu0 %2255
  %2257 = vrot.lane.b32.xlu0 %v1826, 80
  %v2258 = vpop.permute.xlu0 %2257
  %2259 = vrot.lane.b32.xlu0 %v1831, 80
  %v2260 = vpop.permute.xlu0 %2259
  %v2261 = vsel %vm35, %v2254, 0
  %v2263 = vsel %vm35, %v2256, 0
  %v2265 = vsel %vm35, %v2258, 0
  %v2267 = vsel %vm35, %v2260, 0
  %2269 = vmatprep.subr.mxu0 0.0
  %2270 = vmatpush1.xpose.msra.mxu0 %v2265
  %2271 = vmatprep.subr.mxu0 0.0
  %2272 = vmatpush1.xpose.msra.mxu0 %v2267
  %2273 = vmatprep.subr.mxu0 0.0
  %2274 = vmatpush1.xpose.msra.mxu0 0.0
  %2275 = vmatprep.subr.mxu0 0.0
  %2276 = vmatpush1.xpose.msra.mxu0 0.0
  %2277 = vmatprep.subr.mxu0 0.0
  %2278 = vmatpush1.xpose.msra.mxu0 0.0
  %2279 = vmatprep.subr.mxu0 0.0
  %2280 = vmatpush1.xpose.msra.mxu0 0.0
  %2281 = vmatprep.subr.mxu0 0.0
  %2282 = vmatpush1.xpose.msra.mxu0 0.0
  %2283 = vmatprep.subr.mxu0 0.0
  %2284 = vmatpush1.xpose.msra.mxu0 0.0
  %2285 = vmatprep.subr.mxu0 0.0
  %2286 = vmatpush1.xpose.msra.mxu0 0.0
  %2287 = vmatprep.subr.mxu0 0.0
  %2288 = vmatpush1.xpose.msra.mxu0 0.0
  %2289 = vmatprep.subr.mxu0 0.0
  %2290 = vmatpush1.xpose.msra.mxu0 0.0
  %2291 = vmatprep.subr.mxu0 0.0
  %2292 = vmatpush1.xpose.msra.mxu0 0.0
  %2293 = vmatprep.subr.mxu0 0.0
  %2294 = vmatpush1.xpose.msra.mxu0 0.0
  %2295 = vmatprep.subr.mxu0 0.0
  %2296 = vmatpush1.xpose.msra.mxu0 0.0
  %2297 = vmatprep.subr.mxu0 0.0
  %2298 = vmatpush1.xpose.msra.mxu0 0.0
  %2299 = vmatprep.subr.mxu0 0.0
  %2300 = vmatpush1.xpose.msra.mxu0 0.0
  %2301 = vmatprep.subr.mxu0 0.0
  %2302 = vmatpush1.xpose.msra.mxu0 0.0
  %2303 = vmatprep.subr.mxu0 0.0
  %2304 = vmatpush1.xpose.msra.mxu0 0.0
  %2305 = vmatprep.subr.mxu0 0.0
  %2306 = vmatpush1.xpose.msra.mxu0 0.0
  %2307 = vmatprep.subr.mxu0 0.0
  %2308 = vmatpush1.xpose.msra.mxu0 0.0
  %2309 = vmatprep.subr.mxu0 0.0
  %2310 = vmatpush1.xpose.msra.mxu0 0.0
  %2311 = vmatprep.subr.mxu0 0.0
  %2312 = vmatpush1.xpose.msra.mxu0 0.0
  %2313 = vmatprep.subr.mxu0 0.0
  %2314 = vmatpush1.xpose.msra.mxu0 0.0
  %2315 = vmatprep.subr.mxu0 0.0
  %2316 = vmatpush1.xpose.msra.mxu0 0.0
  %2317 = vmatprep.subr.mxu0 0.0
  %2318 = vmatpush1.xpose.msra.mxu0 0.0
  %2319 = vmatprep.subr.mxu0 0.0
  %2320 = vmatpush1.xpose.msra.mxu0 0.0
  %2321 = vmatprep.subr.mxu0 0.0
  %2322 = vmatpush1.xpose.msra.mxu0 0.0
  %2323 = vmatprep.subr.mxu0 0.0
  %2324 = vmatpush1.xpose.msra.mxu0 0.0
  %2325 = vmatprep.subr.mxu0 0.0
  %2326 = vmatpush1.xpose.msra.mxu0 0.0
  %2327 = vmatprep.subr.mxu0 0.0
  %2328 = vmatpush1.xpose.msra.mxu0 0.0
  %2329 = vmatprep.subr.mxu0 0.0
  %2330 = vmatpush1.xpose.msra.mxu0 0.0
  %2331 = vmatprep.subr.mxu0 0.0
  %2332 = vmatpush1.xpose.msra.mxu0 0.0
  %2333 = vmatprep.mubr.f32.mxu0 0.0
  %2334 = vmatmul.mubr.f32.gmra.mrb[0].mxu0 %v2261
  %v2335 = vpop.f32.mrb[0].mxu0
  %v2336 = vadd.f32 0.0, %v2335
  %v2337 = vpop.f32.mrb[0].mxu0
  %2338 = vmatprep.mubr.f32.mxu0 0.0
  %2339 = vmatmul.mubr.f32.gmra.mrb[0].mxu0 %v2263
  %v2340 = vpop.f32.mrb[0].mxu0
  %v2341 = vadd.f32 0.0, %v2340
  %v2342 = vpop.f32.mrb[0].mxu0
  %2343 = vdwg.mxu0
  %2344 = vrot.lane.b32.xlu0 %v1836, 112
  %v2345 = vpop.permute.xlu0 %2344
  %2346 = vrot.lane.b32.xlu0 %v1841, 112
  %v2347 = vpop.permute.xlu0 %2346
  %2348 = vrot.lane.b32.xlu0 %v1836, 80
  %v2349 = vpop.permute.xlu0 %2348
  %2350 = vrot.lane.b32.xlu0 %v1841, 80
  %v2351 = vpop.permute.xlu0 %2350
  %v2352 = vsel %vm35, %v2345, 0
  %v2354 = vsel %vm35, %v2347, 0
  %v2356 = vsel %vm35, %v2349, 0
  %v2358 = vsel %vm35, %v2351, 0
  %2360 = vmatprep.subr.mxu0 0.0
  %2361 = vmatpush1.xpose.msra.mxu0 %v2356
  %2362 = vmatprep.subr.mxu0 0.0
  %2363 = vmatpush1.xpose.msra.mxu0 %v2358
  %2364 = vmatprep.subr.mxu0 0.0
  %2365 = vmatpush1.xpose.msra.mxu0 0.0
  %2366 = vmatprep.subr.mxu0 0.0
  %2367 = vmatpush1.xpose.msra.mxu0 0.0
  %2368 = vmatprep.subr.mxu0 0.0
  %2369 = vmatpush1.xpose.msra.mxu0 0.0
  %2370 = vmatprep.subr.mxu0 0.0
  %2371 = vmatpush1.xpose.msra.mxu0 0.0
  %2372 = vmatprep.subr.mxu0 0.0
  %2373 = vmatpush1.xpose.msra.mxu0 0.0
  %2374 = vmatprep.subr.mxu0 0.0
  %2375 = vmatpush1.xpose.msra.mxu0 0.0
  %2376 = vmatprep.subr.mxu0 0.0
  %2377 = vmatpush1.xpose.msra.mxu0 0.0
  %2378 = vmatprep.subr.mxu0 0.0
  %2379 = vmatpush1.xpose.msra.mxu0 0.0
  %2380 = vmatprep.subr.mxu0 0.0
  %2381 = vmatpush1.xpose.msra.mxu0 0.0
  %2382 = vmatprep.subr.mxu0 0.0
  %2383 = vmatpush1.xpose.msra.mxu0 0.0
  %2384 = vmatprep.subr.mxu0 0.0
  %2385 = vmatpush1.xpose.msra.mxu0 0.0
  %2386 = vmatprep.subr.mxu0 0.0
  %2387 = vmatpush1.xpose.msra.mxu0 0.0
  %2388 = vmatprep.subr.mxu0 0.0
  %2389 = vmatpush1.xpose.msra.mxu0 0.0
  %2390 = vmatprep.subr.mxu0 0.0
  %2391 = vmatpush1.xpose.msra.mxu0 0.0
  %2392 = vmatprep.subr.mxu0 0.0
  %2393 = vmatpush1.xpose.msra.mxu0 0.0
  %2394 = vmatprep.subr.mxu0 0.0
  %2395 = vmatpush1.xpose.msra.mxu0 0.0
  %2396 = vmatprep.subr.mxu0 0.0
  %2397 = vmatpush1.xpose.msra.mxu0 0.0
  %2398 = vmatprep.subr.mxu0 0.0
  %2399 = vmatpush1.xpose.msra.mxu0 0.0
  %2400 = vmatprep.subr.mxu0 0.0
  %2401 = vmatpush1.xpose.msra.mxu0 0.0
  %2402 = vmatprep.subr.mxu0 0.0
  %2403 = vmatpush1.xpose.msra.mxu0 0.0
  %2404 = vmatprep.subr.mxu0 0.0
  %2405 = vmatpush1.xpose.msra.mxu0 0.0
  %2406 = vmatprep.subr.mxu0 0.0
  %2407 = vmatpush1.xpose.msra.mxu0 0.0
  %2408 = vmatprep.subr.mxu0 0.0
  %2409 = vmatpush1.xpose.msra.mxu0 0.0
  %2410 = vmatprep.subr.mxu0 0.0
  %2411 = vmatpush1.xpose.msra.mxu0 0.0
  %2412 = vmatprep.subr.mxu0 0.0
  %2413 = vmatpush1.xpose.msra.mxu0 0.0
  %2414 = vmatprep.subr.mxu0 0.0
  %2415 = vmatpush1.xpose.msra.mxu0 0.0
  %2416 = vmatprep.subr.mxu0 0.0
  %2417 = vmatpush1.xpose.msra.mxu0 0.0
  %2418 = vmatprep.subr.mxu0 0.0
  %2419 = vmatpush1.xpose.msra.mxu0 0.0
  %2420 = vmatprep.subr.mxu0 0.0
  %2421 = vmatpush1.xpose.msra.mxu0 0.0
  %2422 = vmatprep.subr.mxu0 0.0
  %2423 = vmatpush1.xpose.msra.mxu0 0.0
  %2424 = vmatprep.mubr.f32.mxu0 0.0
  %2425 = vmatmul.mubr.f32.gmra.mrb[0].mxu0 %v2352
  %v2426 = vpop.f32.mrb[0].mxu0
  %v2427 = vadd.f32 0.0, %v2426
  %v2428 = vpop.f32.mrb[0].mxu0
  %2429 = vmatprep.mubr.f32.mxu0 0.0
  %2430 = vmatmul.mubr.f32.gmra.mrb[0].mxu0 %v2354
  %v2431 = vpop.f32.mrb[0].mxu0
  %v2432 = vadd.f32 0.0, %v2431
  %v2433 = vpop.f32.mrb[0].mxu0
  %2434 = vdwg.mxu0
  %v2435 = vmul.f32 %v2336, 0.25
  %v2436 = vmul.f32 %v2341, 0.25
  %v2437 = vmul.f32 %v2427, 0.25
  %v2438 = vmul.f32 %v2432, 0.25
  %v2439 = vadd.f32 %v2435, %v170
  %v2440 = vadd.f32 %v2436, %v170
  %v2441 = vadd.f32 %v2437, %v170
  %v2442 = vadd.f32 %v2438, %v170
  %v2443 = vsel %vm35, %v2439, -inf
  %2444 = vmax.xlane.f32.xlu0 %v2443
  %v2445 = vpop.xlane.xlu0 %2444
  %v2446 = vsel %vm35, %v2440, -inf
  %2447 = vmax.xlane.f32.xlu0 %v2446
  %v2448 = vpop.xlane.xlu0 %2447
  %v2449 = vsel %vm35, %v2441, -inf
  %2450 = vmax.xlane.f32.xlu0 %v2449
  %v2451 = vpop.xlane.xlu0 %2450
  %v2452 = vsel %vm35, %v2442, -inf
  %2453 = vmax.xlane.f32.xlu0 %v2452
  %v2454 = vpop.xlane.xlu0 %2453
  %v2455 = vsub.f32 %v2439, %v2445
  %v2456 = vsub.f32 %v2440, %v2448
  %v2457 = vsub.f32 %v2441, %v2451
  %v2458 = vsub.f32 %v2442, %v2454
  %v2459 = vmul.f32 %v2455, 1.442695
  %v2460 = vpow.pop %v2459
  %v2461 = vmul.f32 %v2456, 1.442695
  %v2462 = vpow.pop %v2461
  %v2463 = vmul.f32 %v2457, 1.442695
  %v2464 = vpow.pop %v2463
  %v2465 = vmul.f32 %v2458, 1.442695
  %v2466 = vpow.pop %v2465
  %v2467 = vsel %vm35, %v2460, 0.0
  %2468 = vadd.xlane.f32.xlu0 %v2467
  %v2469 = vpop.xlane.xlu0 %2468
  %v2470 = vsel %vm35, %v2462, 0.0
  %2471 = vadd.xlane.f32.xlu0 %v2470
  %v2472 = vpop.xlane.xlu0 %2471
  %v2473 = vsel %vm35, %v2464, 0.0
  %2474 = vadd.xlane.f32.xlu0 %v2473
  %v2475 = vpop.xlane.xlu0 %2474
  %v2476 = vsel %vm35, %v2466, 0.0
  %2477 = vadd.xlane.f32.xlu0 %v2476
  %v2478 = vpop.xlane.xlu0 %2477
  %v2479 = vrcp.pop %v2469
  %v2480 = vmul.f32 %v2460, %v2479
  %v2481 = vrcp.pop %v2472
  %v2482 = vmul.f32 %v2462, %v2481
  %v2483 = vrcp.pop %v2475
  %v2484 = vmul.f32 %v2464, %v2483
  %v2485 = vrcp.pop %v2478
  %v2486 = vmul.f32 %v2466, %v2485
  %2487 = vrot.lane.b32.xlu0 %v1826, 48
  %v2488 = vpop.permute.xlu0 %2487
  %2489 = vrot.lane.b32.xlu0 %v1831, 48
  %v2490 = vpop.permute.xlu0 %2489
  %v2494 = vsel %vm35, %v2480, 0
  %v2497 = vsel %vm35, %v2482, 0
  %2499 = vmatprep.subr.mxu0 0.0
  %2500 = vmatpush1.msra.mxu0 %v2488
  %2501 = vmatprep.subr.mxu0 0.0
  %2502 = vmatpush1.msra.mxu0 %v2490
  %2503 = vmatprep.subr.mxu0 0.0
  %2504 = vmatpush1.msra.mxu0 0.0
  %2505 = vmatprep.subr.mxu0 0.0
  %2506 = vmatpush1.msra.mxu0 0.0
  %2507 = vmatprep.subr.mxu0 0.0
  %2508 = vmatpush1.msra.mxu0 0.0
  %2509 = vmatprep.subr.mxu0 0.0
  %2510 = vmatpush1.msra.mxu0 0.0
  %2511 = vmatprep.subr.mxu0 0.0
  %2512 = vmatpush1.msra.mxu0 0.0
  %2513 = vmatprep.subr.mxu0 0.0
  %2514 = vmatpush1.msra.mxu0 0.0
  %2515 = vmatprep.subr.mxu0 0.0
  %2516 = vmatpush1.msra.mxu0 0.0
  %2517 = vmatprep.subr.mxu0 0.0
  %2518 = vmatpush1.msra.mxu0 0.0
  %2519 = vmatprep.subr.mxu0 0.0
  %2520 = vmatpush1.msra.mxu0 0.0
  %2521 = vmatprep.subr.mxu0 0.0
  %2522 = vmatpush1.msra.mxu0 0.0
  %2523 = vmatprep.subr.mxu0 0.0
  %2524 = vmatpush1.msra.mxu0 0.0
  %2525 = vmatprep.subr.mxu0 0.0
  %2526 = vmatpush1.msra.mxu0 0.0
  %2527 = vmatprep.subr.mxu0 0.0
  %2528 = vmatpush1.msra.mxu0 0.0
  %2529 = vmatprep.subr.mxu0 0.0
  %2530 = vmatpush1.msra.mxu0 0.0
  %2531 = vmatprep.subr.mxu0 0.0
  %2532 = vmatpush1.msra.mxu0 0.0
  %2533 = vmatprep.subr.mxu0 0.0
  %2534 = vmatpush1.msra.mxu0 0.0
  %2535 = vmatprep.subr.mxu0 0.0
  %2536 = vmatpush1.msra.mxu0 0.0
  %2537 = vmatprep.subr.mxu0 0.0
  %2538 = vmatpush1.msra.mxu0 0.0
  %2539 = vmatprep.subr.mxu0 0.0
  %2540 = vmatpush1.msra.mxu0 0.0
  %2541 = vmatprep.subr.mxu0 0.0
  %2542 = vmatpush1.msra.mxu0 0.0
  %2543 = vmatprep.subr.mxu0 0.0
  %2544 = vmatpush1.msra.mxu0 0.0
  %2545 = vmatprep.subr.mxu0 0.0
  %2546 = vmatpush1.msra.mxu0 0.0
  %2547 = vmatprep.subr.mxu0 0.0
  %2548 = vmatpush1.msra.mxu0 0.0
  %2549 = vmatprep.subr.mxu0 0.0
  %2550 = vmatpush1.msra.mxu0 0.0
  %2551 = vmatprep.subr.mxu0 0.0
  %2552 = vmatpush1.msra.mxu0 0.0
  %2553 = vmatprep.subr.mxu0 0.0
  %2554 = vmatpush1.msra.mxu0 0.0
  %2555 = vmatprep.subr.mxu0 0.0
  %2556 = vmatpush1.msra.mxu0 0.0
  %2557 = vmatprep.subr.mxu0 0.0
  %2558 = vmatpush1.msra.mxu0 0.0
  %2559 = vmatprep.subr.mxu0 0.0
  %2560 = vmatpush1.msra.mxu0 0.0
  %2561 = vmatprep.subr.mxu0 0.0
  %2562 = vmatpush1.msra.mxu0 0.0
  %2563 = vmatprep.mubr.f32.mxu0 0.0
  %2564 = vmatmul.mubr.f32.gmra.mrb[0].mxu0 %v2494
  %v2565 = vpop.f32.mrb[0].mxu0
  %v2566 = vadd.f32 0.0, %v2565
  %v2567 = vpop.f32.mrb[0].mxu0
  %2568 = vmatprep.mubr.f32.mxu0 0.0
  %2569 = vmatmul.mubr.f32.gmra.mrb[0].mxu0 %v2497
  %v2570 = vpop.f32.mrb[0].mxu0
  %v2571 = vadd.f32 0.0, %v2570
  %v2572 = vpop.f32.mrb[0].mxu0
  %2573 = vdwg.mxu0
  %2574 = vrot.lane.b32.xlu0 %v1836, 48
  %v2575 = vpop.permute.xlu0 %2574
  %2576 = vrot.lane.b32.xlu0 %v1841, 48
  %v2577 = vpop.permute.xlu0 %2576
  %v2581 = vsel %vm35, %v2484, 0
  %v2584 = vsel %vm35, %v2486, 0
  %2586 = vmatprep.subr.mxu0 0.0
  %2587 = vmatpush1.msra.mxu0 %v2575
  %2588 = vmatprep.subr.mxu0 0.0
  %2589 = vmatpush1.msra.mxu0 %v2577
  %2590 = vmatprep.subr.mxu0 0.0
  %2591 = vmatpush1.msra.mxu0 0.0
  %2592 = vmatprep.subr.mxu0 0.0
  %2593 = vmatpush1.msra.mxu0 0.0
  %2594 = vmatprep.subr.mxu0 0.0
  %2595 = vmatpush1.msra.mxu0 0.0
  %2596 = vmatprep.subr.mxu0 0.0
  %2597 = vmatpush1.msra.mxu0 0.0
  %2598 = vmatprep.subr.mxu0 0.0
  %2599 = vmatpush1.msra.mxu0 0.0
  %2600 = vmatprep.subr.mxu0 0.0
  %2601 = vmatpush1.msra.mxu0 0.0
  %2602 = vmatprep.subr.mxu0 0.0
  %2603 = vmatpush1.msra.mxu0 0.0
  %2604 = vmatprep.subr.mxu0 0.0
  %2605 = vmatpush1.msra.mxu0 0.0
  %2606 = vmatprep.subr.mxu0 0.0
  %2607 = vmatpush1.msra.mxu0 0.0
  %2608 = vmatprep.subr.mxu0 0.0
  %2609 = vmatpush1.msra.mxu0 0.0
  %2610 = vmatprep.subr.mxu0 0.0
  %2611 = vmatpush1.msra.mxu0 0.0
  %2612 = vmatprep.subr.mxu0 0.0
  %2613 = vmatpush1.msra.mxu0 0.0
  %2614 = vmatprep.subr.mxu0 0.0
  %2615 = vmatpush1.msra.mxu0 0.0
  %2616 = vmatprep.subr.mxu0 0.0
  %2617 = vmatpush1.msra.mxu0 0.0
  %2618 = vmatprep.subr.mxu0 0.0
  %2619 = vmatpush1.msra.mxu0 0.0
  %2620 = vmatprep.subr.mxu0 0.0
  %2621 = vmatpush1.msra.mxu0 0.0
  %2622 = vmatprep.subr.mxu0 0.0
  %2623 = vmatpush1.msra.mxu0 0.0
  %2624 = vmatprep.subr.mxu0 0.0
  %2625 = vmatpush1.msra.mxu0 0.0
  %2626 = vmatprep.subr.mxu0 0.0
  %2627 = vmatpush1.msra.mxu0 0.0
  %2628 = vmatprep.subr.mxu0 0.0
  %2629 = vmatpush1.msra.mxu0 0.0
  %2630 = vmatprep.subr.mxu0 0.0
  %2631 = vmatpush1.msra.mxu0 0.0
  %2632 = vmatprep.subr.mxu0 0.0
  %2633 = vmatpush1.msra.mxu0 0.0
  %2634 = vmatprep.subr.mxu0 0.0
  %2635 = vmatpush1.msra.mxu0 0.0
  %2636 = vmatprep.subr.mxu0 0.0
  %2637 = vmatpush1.msra.mxu0 0.0
  %2638 = vmatprep.subr.mxu0 0.0
  %2639 = vmatpush1.msra.mxu0 0.0
  %2640 = vmatprep.subr.mxu0 0.0
  %2641 = vmatpush1.msra.mxu0 0.0
  %2642 = vmatprep.subr.mxu0 0.0
  %2643 = vmatpush1.msra.mxu0 0.0
  %2644 = vmatprep.subr.mxu0 0.0
  %2645 = vmatpush1.msra.mxu0 0.0
  %2646 = vmatprep.subr.mxu0 0.0
  %2647 = vmatpush1.msra.mxu0 0.0
  %2648 = vmatprep.subr.mxu0 0.0
  %2649 = vmatpush1.msra.mxu0 0.0
  %2650 = vmatprep.mubr.f32.mxu0 0.0
  %2651 = vmatmul.mubr.f32.gmra.mrb[0].mxu0 %v2581
  %v2652 = vpop.f32.mrb[0].mxu0
  %v2653 = vadd.f32 0.0, %v2652
  %v2654 = vpop.f32.mrb[0].mxu0
  %2655 = vmatprep.mubr.f32.mxu0 0.0
  %2656 = vmatmul.mubr.f32.gmra.mrb[0].mxu0 %v2584
  %v2657 = vpop.f32.mrb[0].mxu0
  %v2658 = vadd.f32 0.0, %v2657
  %v2659 = vpop.f32.mrb[0].mxu0
  %2660 = vdwg.mxu0
  %v2662 = vsel %vm35, %v2566, 0
  %v2665 = vsel %vm35, %v2571, 0
  %v2668 = vsel %vm35, %v2653, 0
  %v2671 = vsel %vm35, %v2658, 0
  %2673 = vmatprep.subr.mxu0 0.0
  %2674 = vmatpush1.msra.mxu0 %v1847
  %2675 = vmatprep.subr.mxu0 0.0
  %2676 = vmatpush1.msra.mxu0 %v1848
  %2677 = vmatprep.subr.mxu0 0.0
  %2678 = vmatpush1.msra.mxu0 0.0
  %2679 = vmatprep.subr.mxu0 0.0
  %2680 = vmatpush1.msra.mxu0 0.0
  %2681 = vmatprep.subr.mxu0 0.0
  %2682 = vmatpush1.msra.mxu0 0.0
  %2683 = vmatprep.subr.mxu0 0.0
  %2684 = vmatpush1.msra.mxu0 0.0
  %2685 = vmatprep.subr.mxu0 0.0
  %2686 = vmatpush1.msra.mxu0 0.0
  %2687 = vmatprep.subr.mxu0 0.0
  %2688 = vmatpush1.msra.mxu0 0.0
  %2689 = vmatprep.subr.mxu0 0.0
  %2690 = vmatpush1.msra.mxu0 0.0
  %2691 = vmatprep.subr.mxu0 0.0
  %2692 = vmatpush1.msra.mxu0 0.0
  %2693 = vmatprep.subr.mxu0 0.0
  %2694 = vmatpush1.msra.mxu0 0.0
  %2695 = vmatprep.subr.mxu0 0.0
  %2696 = vmatpush1.msra.mxu0 0.0
  %2697 = vmatprep.subr.mxu0 0.0
  %2698 = vmatpush1.msra.mxu0 0.0
  %2699 = vmatprep.subr.mxu0 0.0
  %2700 = vmatpush1.msra.mxu0 0.0
  %2701 = vmatprep.subr.mxu0 0.0
  %2702 = vmatpush1.msra.mxu0 0.0
  %2703 = vmatprep.subr.mxu0 0.0
  %2704 = vmatpush1.msra.mxu0 0.0
  %2705 = vmatprep.subr.mxu0 0.0
  %2706 = vmatpush1.msra.mxu0 0.0
  %2707 = vmatprep.subr.mxu0 0.0
  %2708 = vmatpush1.msra.mxu0 0.0
  %2709 = vmatprep.subr.mxu0 0.0
  %2710 = vmatpush1.msra.mxu0 0.0
  %2711 = vmatprep.subr.mxu0 0.0
  %2712 = vmatpush1.msra.mxu0 0.0
  %2713 = vmatprep.subr.mxu0 0.0
  %2714 = vmatpush1.msra.mxu0 0.0
  %2715 = vmatprep.subr.mxu0 0.0
  %2716 = vmatpush1.msra.mxu0 0.0
  %2717 = vmatprep.subr.mxu0 0.0
  %2718 = vmatpush1.msra.mxu0 0.0
  %2719 = vmatprep.subr.mxu0 0.0
  %2720 = vmatpush1.msra.mxu0 0.0
  %2721 = vmatprep.subr.mxu0 0.0
  %2722 = vmatpush1.msra.mxu0 0.0
  %2723 = vmatprep.subr.mxu0 0.0
  %2724 = vmatpush1.msra.mxu0 0.0
  %2725 = vmatprep.subr.mxu0 0.0
  %2726 = vmatpush1.msra.mxu0 0.0
  %2727 = vmatprep.subr.mxu0 0.0
  %2728 = vmatpush1.msra.mxu0 0.0
  %2729 = vmatprep.subr.mxu0 0.0
  %2730 = vmatpush1.msra.mxu0 0.0
  %2731 = vmatprep.subr.mxu0 0.0
  %2732 = vmatpush1.msra.mxu0 0.0
  %2733 = vmatprep.subr.mxu0 0.0
  %2734 = vmatpush1.msra.mxu0 0.0
  %2735 = vmatprep.subr.mxu0 0.0
  %2736 = vmatpush1.msra.mxu0 0.0
  %2737 = vmatprep.mubr.f32.mxu0 0.0
  %2738 = vmatmul.mubr.f32.gmra.mrb[0].mxu0 %v2662
  %v2739 = vpop.f32.mrb[0].mxu0
  %v2740 = vadd.f32 0.0, %v2739
  %v2741 = vpop.f32.mrb[0].mxu0
  %2742 = vmatprep.mubr.f32.mxu0 0.0
  %2743 = vmatmul.mubr.f32.gmra.mrb[0].mxu0 %v2665
  %v2744 = vpop.f32.mrb[0].mxu0
  %v2745 = vadd.f32 0.0, %v2744
  %v2746 = vpop.f32.mrb[0].mxu0
  %2747 = vmatprep.mubr.f32.mxu0 0.0
  %2748 = vmatmul.mubr.f32.gmra.mrb[0].mxu0 %v2668
  %v2749 = vpop.f32.mrb[0].mxu0
  %v2750 = vadd.f32 0.0, %v2749
  %v2751 = vpop.f32.mrb[0].mxu0
  %2752 = vmatprep.mubr.f32.mxu0 0.0
  %2753 = vmatmul.mubr.f32.gmra.mrb[0].mxu0 %v2671
  %v2754 = vpop.f32.mrb[0].mxu0
  %v2755 = vadd.f32 0.0, %v2754
  %v2756 = vpop.f32.mrb[0].mxu0
  %2757 = vdwg.mxu0
  %v2759 = vsel %vm35, %v2158, 0
  %v2762 = vsel %vm35, %v2163, 0
  %v2765 = vsel %vm35, %v2245, 0
  %v2768 = vsel %vm35, %v2250, 0
  %2770 = vmatprep.subr.mxu0 0.0
  %2771 = vmatpush1.msra.mxu0 %v1845
  %2772 = vmatprep.subr.mxu0 0.0
  %2773 = vmatpush1.msra.mxu0 %v1846
  %2774 = vmatprep.subr.mxu0 0.0
  %2775 = vmatpush1.msra.mxu0 0.0
  %2776 = vmatprep.subr.mxu0 0.0
  %2777 = vmatpush1.msra.mxu0 0.0
  %2778 = vmatprep.subr.mxu0 0.0
  %2779 = vmatpush1.msra.mxu0 0.0
  %2780 = vmatprep.subr.mxu0 0.0
  %2781 = vmatpush1.msra.mxu0 0.0
  %2782 = vmatprep.subr.mxu0 0.0
  %2783 = vmatpush1.msra.mxu0 0.0
  %2784 = vmatprep.subr.mxu0 0.0
  %2785 = vmatpush1.msra.mxu0 0.0
  %2786 = vmatprep.subr.mxu0 0.0
  %2787 = vmatpush1.msra.mxu0 0.0
  %2788 = vmatprep.subr.mxu0 0.0
  %2789 = vmatpush1.msra.mxu0 0.0
  %2790 = vmatprep.subr.mxu0 0.0
  %2791 = vmatpush1.msra.mxu0 0.0
  %2792 = vmatprep.subr.mxu0 0.0
  %2793 = vmatpush1.msra.mxu0 0.0
  %2794 = vmatprep.subr.mxu0 0.0
  %2795 = vmatpush1.msra.mxu0 0.0
  %2796 = vmatprep.subr.mxu0 0.0
  %2797 = vmatpush1.msra.mxu0 0.0
  %2798 = vmatprep.subr.mxu0 0.0
  %2799 = vmatpush1.msra.mxu0 0.0
  %2800 = vmatprep.subr.mxu0 0.0
  %2801 = vmatpush1.msra.mxu0 0.0
  %2802 = vmatprep.subr.mxu0 0.0
  %2803 = vmatpush1.msra.mxu0 0.0
  %2804 = vmatprep.subr.mxu0 0.0
  %2805 = vmatpush1.msra.mxu0 0.0
  %2806 = vmatprep.subr.mxu0 0.0
  %2807 = vmatpush1.msra.mxu0 0.0
  %2808 = vmatprep.subr.mxu0 0.0
  %2809 = vmatpush1.msra.mxu0 0.0
  %2810 = vmatprep.subr.mxu0 0.0
  %2811 = vmatpush1.msra.mxu0 0.0
  %2812 = vmatprep.subr.mxu0 0.0
  %2813 = vmatpush1.msra.mxu0 0.0
  %2814 = vmatprep.subr.mxu0 0.0
  %2815 = vmatpush1.msra.mxu0 0.0
  %2816 = vmatprep.subr.mxu0 0.0
  %2817 = vmatpush1.msra.mxu0 0.0
  %2818 = vmatprep.subr.mxu0 0.0
  %2819 = vmatpush1.msra.mxu0 0.0
  %2820 = vmatprep.subr.mxu0 0.0
  %2821 = vmatpush1.msra.mxu0 0.0
  %2822 = vmatprep.subr.mxu0 0.0
  %2823 = vmatpush1.msra.mxu0 0.0
  %2824 = vmatprep.subr.mxu0 0.0
  %2825 = vmatpush1.msra.mxu0 0.0
  %2826 = vmatprep.subr.mxu0 0.0
  %2827 = vmatpush1.msra.mxu0 0.0
  %2828 = vmatprep.subr.mxu0 0.0
  %2829 = vmatpush1.msra.mxu0 0.0
  %2830 = vmatprep.subr.mxu0 0.0
  %2831 = vmatpush1.msra.mxu0 0.0
  %2832 = vmatprep.subr.mxu0 0.0
  %2833 = vmatpush1.msra.mxu0 0.0
  %2834 = vmatprep.mubr.f32.mxu0 0.0
  %2835 = vmatmul.mubr.f32.gmra.mrb[0].mxu0 %v2759
  %v2836 = vpop.f32.mrb[0].mxu0
  %v2837 = vadd.f32 %v2740, %v2836
  %v2838 = vpop.f32.mrb[0].mxu0
  %2839 = vmatprep.mubr.f32.mxu0 0.0
  %2840 = vmatmul.mubr.f32.gmra.mrb[0].mxu0 %v2762
  %v2841 = vpop.f32.mrb[0].mxu0
  %v2842 = vadd.f32 %v2745, %v2841
  %v2843 = vpop.f32.mrb[0].mxu0
  %2844 = vmatprep.mubr.f32.mxu0 0.0
  %2845 = vmatmul.mubr.f32.gmra.mrb[0].mxu0 %v2765
  %v2846 = vpop.f32.mrb[0].mxu0
  %v2847 = vadd.f32 %v2750, %v2846
  %v2848 = vpop.f32.mrb[0].mxu0
  %2849 = vmatprep.mubr.f32.mxu0 0.0
  %2850 = vmatmul.mubr.f32.gmra.mrb[0].mxu0 %v2768
  %v2851 = vpop.f32.mrb[0].mxu0
  %v2852 = vadd.f32 %v2755, %v2851
  %v2853 = vpop.f32.mrb[0].mxu0
  %2854 = vdwg.mxu0
  %v2855 = vld [vmem:[%s2 + $0xc] sm:$0x1]
  %v2856 = vlaneseq
  %v2857 = vshrl.u32 %v2856, 7
  %v2858 = vsub.s32 0, %v2857
  %v2859 = vrot.slane %v2855, %v2858
  %v2860 = vadd.f32 %v2837, %v2859
  %v2861 = vadd.f32 %v2842, %v2859
  %v2862 = vadd.f32 %v2847, %v2859
  %v2863 = vadd.f32 %v2852, %v2859
  %v2864 = vadd.f32 %v1738, %v2860
  %v2865 = vadd.f32 %v1739, %v2861
  %v2866 = vadd.f32 %v1740, %v2862
  %v2867 = vadd.f32 %v1741, %v2863
  %v2868 = vld [vmem:[%s2 + $0xd] sm:$0x1]
  %v2869 = vld [vmem:[%s2 + $0xe] sm:$0x1]
  %v2870 = vsel %vm152, %v2864, 0.0
  %2871 = vadd.xlane.f32.xlu0 %v2870
  %v2872 = vpop.xlane.xlu0 %2871
  %v2873 = vsel %vm152, %v2865, 0.0
  %2874 = vadd.xlane.f32.xlu0 %v2873
  %v2875 = vpop.xlane.xlu0 %2874
  %v2876 = vsel %vm152, %v2866, 0.0
  %2877 = vadd.xlane.f32.xlu0 %v2876
  %v2878 = vpop.xlane.xlu0 %2877
  %v2879 = vsel %vm152, %v2867, 0.0
  %2880 = vadd.xlane.f32.xlu0 %v2879
  %v2881 = vpop.xlane.xlu0 %2880
  %v2882 = vmul.f32 %v2872, %v185
  %v2883 = vmul.f32 %v2875, %v185
  %v2884 = vmul.f32 %v2878, %v185
  %v2885 = vmul.f32 %v2881, %v185
  %v2886 = vsub.f32 %v2864, %v2882
  %v2887 = vsub.f32 %v2865, %v2883
  %v2888 = vsub.f32 %v2866, %v2884
  %v2889 = vsub.f32 %v2867, %v2885
  %v2890 = vmul.f32 %v2886, %v2886
  %v2891 = vmul.f32 %v2887, %v2887
  %v2892 = vmul.f32 %v2888, %v2888
  %v2893 = vmul.f32 %v2889, %v2889
  %v2894 = vsel %vm152, %v2890, 0.0
  %2895 = vadd.xlane.f32.xlu0 %v2894
  %v2896 = vpop.xlane.xlu0 %2895
  %v2897 = vsel %vm152, %v2891, 0.0
  %2898 = vadd.xlane.f32.xlu0 %v2897
  %v2899 = vpop.xlane.xlu0 %2898
  %v2900 = vsel %vm152, %v2892, 0.0
  %2901 = vadd.xlane.f32.xlu0 %v2900
  %v2902 = vpop.xlane.xlu0 %2901
  %v2903 = vsel %vm152, %v2893, 0.0
  %2904 = vadd.xlane.f32.xlu0 %v2903
  %v2905 = vpop.xlane.xlu0 %2904
  %v2906 = vmul.f32 %v2896, %v185
  %v2907 = vmul.f32 %v2899, %v185
  %v2908 = vmul.f32 %v2902, %v185
  %v2909 = vmul.f32 %v2905, %v185
  %v2910 = vadd.f32 %v2906, 1e-05
  %v2911 = vadd.f32 %v2907, 1e-05
  %v2912 = vadd.f32 %v2908, 1e-05
  %v2913 = vadd.f32 %v2909, 1e-05
  %v2914 = vrsqrt.pop %v2910
  %v2915 = vrsqrt.pop %v2911
  %v2916 = vrsqrt.pop %v2912
  %v2917 = vrsqrt.pop %v2913
  %v2918 = vmul.f32 %v2886, %v2914
  %v2919 = vmul.f32 %v2887, %v2915
  %v2920 = vmul.f32 %v2888, %v2916
  %v2921 = vmul.f32 %v2889, %v2917
  %v2922 = vlaneseq
  %v2923 = vshrl.u32 %v2922, 7
  %v2924 = vsub.s32 0, %v2923
  %v2925 = vrot.slane %v2868, %v2924
  %v2926 = vmul.f32 %v2918, %v2925
  %v2927 = vmul.f32 %v2919, %v2925
  %v2928 = vmul.f32 %v2920, %v2925
  %v2929 = vmul.f32 %v2921, %v2925
  %v2930 = vlaneseq
  %v2931 = vshrl.u32 %v2930, 7
  %v2932 = vsub.s32 0, %v2931
  %v2933 = vrot.slane %v2869, %v2932
  %v2934 = vadd.f32 %v2926, %v2933
  %v2935 = vadd.f32 %v2927, %v2933
  %v2936 = vadd.f32 %v2928, %v2933
  %v2937 = vadd.f32 %v2929, %v2933
  %s2938 = scalar_lea.vmem %s5, 40
  %v2939 = vld [vmem:[%s2938] sm:$0xff]
  %v2940 = vld [vmem:[%s2938 + $0x8] sm:$0xff]
  %v2941 = vld [vmem:[%s2938 + $0x10] sm:$0xff]
  %v2942 = vld [vmem:[%s2938 + $0x18] sm:$0xff]
  %v2943 = vld [vmem:[%s2938 + $0x20] sm:$0xff]
  %v2944 = vlaneseq
  %v2945 = vshrl.u32 %v2944, 7
  %v2946 = vsub.s32 0, %v2945
  %v2947 = vrot.slane %v2943, %v2946
  %v2949 = vsel %vm152, %v2934, 0
  %v2952 = vsel %vm152, %v2935, 0
  %v2955 = vsel %vm152, %v2936, 0
  %v2958 = vsel %vm152, %v2937, 0
  %2960 = vmatprep.subr.mxu0 0.0
  %2961 = vmatpush1.msra.mxu0 %v2939
  %2962 = vmatprep.subr.mxu0 0.0
  %2963 = vmatpush1.msra.mxu0 %v2940
  %2964 = vmatprep.subr.mxu0 0.0
  %2965 = vmatpush1.msra.mxu0 %v2941
  %2966 = vmatprep.subr.mxu0 0.0
  %2967 = vmatpush1.msra.mxu0 %v2942
  %2968 = vmatprep.subr.mxu0 0.0
  %2969 = vmatpush1.msra.mxu0 0.0
  %2970 = vmatprep.subr.mxu0 0.0
  %2971 = vmatpush1.msra.mxu0 0.0
  %2972 = vmatprep.subr.mxu0 0.0
  %2973 = vmatpush1.msra.mxu0 0.0
  %2974 = vmatprep.subr.mxu0 0.0
  %2975 = vmatpush1.msra.mxu0 0.0
  %2976 = vmatprep.subr.mxu0 0.0
  %2977 = vmatpush1.msra.mxu0 0.0
  %2978 = vmatprep.subr.mxu0 0.0
  %2979 = vmatpush1.msra.mxu0 0.0
  %2980 = vmatprep.subr.mxu0 0.0
  %2981 = vmatpush1.msra.mxu0 0.0
  %2982 = vmatprep.subr.mxu0 0.0
  %2983 = vmatpush1.msra.mxu0 0.0
  %2984 = vmatprep.subr.mxu0 0.0
  %2985 = vmatpush1.msra.mxu0 0.0
  %2986 = vmatprep.subr.mxu0 0.0
  %2987 = vmatpush1.msra.mxu0 0.0
  %2988 = vmatprep.subr.mxu0 0.0
  %2989 = vmatpush1.msra.mxu0 0.0
  %2990 = vmatprep.subr.mxu0 0.0
  %2991 = vmatpush1.msra.mxu0 0.0
  %2992 = vmatprep.subr.mxu0 0.0
  %2993 = vmatpush1.msra.mxu0 0.0
  %2994 = vmatprep.subr.mxu0 0.0
  %2995 = vmatpush1.msra.mxu0 0.0
  %2996 = vmatprep.subr.mxu0 0.0
  %2997 = vmatpush1.msra.mxu0 0.0
  %2998 = vmatprep.subr.mxu0 0.0
  %2999 = vmatpush1.msra.mxu0 0.0
  %3000 = vmatprep.subr.mxu0 0.0
  %3001 = vmatpush1.msra.mxu0 0.0
  %3002 = vmatprep.subr.mxu0 0.0
  %3003 = vmatpush1.msra.mxu0 0.0
  %3004 = vmatprep.subr.mxu0 0.0
  %3005 = vmatpush1.msra.mxu0 0.0
  %3006 = vmatprep.subr.mxu0 0.0
  %3007 = vmatpush1.msra.mxu0 0.0
  %3008 = vmatprep.subr.mxu0 0.0
  %3009 = vmatpush1.msra.mxu0 0.0
  %3010 = vmatprep.subr.mxu0 0.0
  %3011 = vmatpush1.msra.mxu0 0.0
  %3012 = vmatprep.subr.mxu0 0.0
  %3013 = vmatpush1.msra.mxu0 0.0
  %3014 = vmatprep.subr.mxu0 0.0
  %3015 = vmatpush1.msra.mxu0 0.0
  %3016 = vmatprep.subr.mxu0 0.0
  %3017 = vmatpush1.msra.mxu0 0.0
  %3018 = vmatprep.subr.mxu0 0.0
  %3019 = vmatpush1.msra.mxu0 0.0
  %3020 = vmatprep.subr.mxu0 0.0
  %3021 = vmatpush1.msra.mxu0 0.0
  %3022 = vmatprep.subr.mxu0 0.0
  %3023 = vmatpush1.msra.mxu0 0.0
  %3024 = vmatprep.mubr.f32.mxu0 0.0
  %3025 = vmatmul.mubr.f32.gmra.mrb[0].mxu0 %v2949
  %v3026 = vpop.f32.mrb[0].mxu0
  %v3027 = vadd.f32 %v2947, %v3026
  %v3028 = vpop.f32.mrb[0].mxu0
  %3029 = vmatprep.mubr.f32.mxu0 0.0
  %3030 = vmatmul.mubr.f32.gmra.mrb[0].mxu0 %v2952
  %v3031 = vpop.f32.mrb[0].mxu0
  %v3032 = vadd.f32 %v2947, %v3031
  %v3033 = vpop.f32.mrb[0].mxu0
  %3034 = vmatprep.mubr.f32.mxu0 0.0
  %3035 = vmatmul.mubr.f32.gmra.mrb[0].mxu0 %v2955
  %v3036 = vpop.f32.mrb[0].mxu0
  %v3037 = vadd.f32 %v2947, %v3036
  %v3038 = vpop.f32.mrb[0].mxu0
  %3039 = vmatprep.mubr.f32.mxu0 0.0
  %3040 = vmatmul.mubr.f32.gmra.mrb[0].mxu0 %v2958
  %v3041 = vpop.f32.mrb[0].mxu0
  %v3042 = vadd.f32 %v2947, %v3041
  %v3043 = vpop.f32.mrb[0].mxu0
  %3044 = vdwg.mxu0
  %v3045 = vmul.f32 %v3027, 0.5
  %v3046 = vmul.f32 %v3032, 0.5
  %v3047 = vmul.f32 %v3037, 0.5
  %v3048 = vmul.f32 %v3042, 0.5
  %v3049 = vmul.f32 %v3027, 0.70710677
  %v3050 = vmul.f32 %v3032, 0.70710677
  %v3051 = vmul.f32 %v3037, 0.70710677
  %v3052 = vmul.f32 %v3042, 0.70710677
  %v3053 = verf.f32.pop %v3049
  %v3054 = verf.f32.pop %v3050
  %v3055 = verf.f32.pop %v3051
  %v3056 = verf.f32.pop %v3052
  %v3057 = vadd.f32 %v3053, 1.0
  %v3058 = vadd.f32 %v3054, 1.0
  %v3059 = vadd.f32 %v3055, 1.0
  %v3060 = vadd.f32 %v3056, 1.0
  %v3061 = vmul.f32 %v3045, %v3057
  %v3062 = vmul.f32 %v3046, %v3058
  %v3063 = vmul.f32 %v3047, %v3059
  %v3064 = vmul.f32 %v3048, %v3060
  %s3065 = scalar_lea.vmem %s6, 128
  %v3066 = vld [vmem:[%s3065] sm:$0xff]
  %v3067 = vld [vmem:[%s3065 + $0x8] sm:$0xff]
  %v3068 = vld [vmem:[%s3065 + $0x10] sm:$0xff]
  %v3069 = vld [vmem:[%s3065 + $0x18] sm:$0xff]
  %v3070 = vld [vmem:[%s3065 + $0x20] sm:$0xff]
  %v3071 = vld [vmem:[%s3065 + $0x28] sm:$0xff]
  %v3072 = vld [vmem:[%s3065 + $0x30] sm:$0xff]
  %v3073 = vld [vmem:[%s3065 + $0x38] sm:$0xff]
  %v3074 = vld [vmem:[%s3065 + $0x40] sm:$0xff]
  %v3075 = vld [vmem:[%s3065 + $0x48] sm:$0xff]
  %v3076 = vld [vmem:[%s3065 + $0x50] sm:$0xff]
  %v3077 = vld [vmem:[%s3065 + $0x58] sm:$0xff]
  %v3078 = vld [vmem:[%s3065 + $0x60] sm:$0xff]
  %v3079 = vld [vmem:[%s3065 + $0x68] sm:$0xff]
  %v3080 = vld [vmem:[%s3065 + $0x70] sm:$0xff]
  %v3081 = vld [vmem:[%s3065 + $0x78] sm:$0xff]
  %v3082 = vld [vmem:[%s2 + $0xf] sm:$0x1]
  %v3083 = vlaneseq
  %v3084 = vshrl.u32 %v3083, 7
  %v3085 = vsub.s32 0, %v3084
  %v3086 = vrot.slane %v3082, %v3085
  %3087 = vmatprep.subr.mxu0 0.0
  %3088 = vmatpush1.msra.mxu0 %v3066
  %3089 = vmatprep.subr.mxu0 0.0
  %3090 = vmatpush1.msra.mxu0 %v3067
  %3091 = vmatprep.subr.mxu0 0.0
  %3092 = vmatpush1.msra.mxu0 %v3068
  %3093 = vmatprep.subr.mxu0 0.0
  %3094 = vmatpush1.msra.mxu0 %v3069
  %3095 = vmatprep.subr.mxu0 0.0
  %3096 = vmatpush1.msra.mxu0 %v3070
  %3097 = vmatprep.subr.mxu0 0.0
  %3098 = vmatpush1.msra.mxu0 %v3071
  %3099 = vmatprep.subr.mxu0 0.0
  %3100 = vmatpush1.msra.mxu0 %v3072
  %3101 = vmatprep.subr.mxu0 0.0
  %3102 = vmatpush1.msra.mxu0 %v3073
  %3103 = vmatprep.subr.mxu0 0.0
  %3104 = vmatpush1.msra.mxu0 %v3074
  %3105 = vmatprep.subr.mxu0 0.0
  %3106 = vmatpush1.msra.mxu0 %v3075
  %3107 = vmatprep.subr.mxu0 0.0
  %3108 = vmatpush1.msra.mxu0 %v3076
  %3109 = vmatprep.subr.mxu0 0.0
  %3110 = vmatpush1.msra.mxu0 %v3077
  %3111 = vmatprep.subr.mxu0 0.0
  %3112 = vmatpush1.msra.mxu0 %v3078
  %3113 = vmatprep.subr.mxu0 0.0
  %3114 = vmatpush1.msra.mxu0 %v3079
  %3115 = vmatprep.subr.mxu0 0.0
  %3116 = vmatpush1.msra.mxu0 %v3080
  %3117 = vmatprep.subr.mxu0 0.0
  %3118 = vmatpush1.msra.mxu0 %v3081
  %3119 = vmatprep.subr.mxu0 0.0
  %3120 = vmatpush1.msra.mxu0 0.0
  %3121 = vmatprep.subr.mxu0 0.0
  %3122 = vmatpush1.msra.mxu0 0.0
  %3123 = vmatprep.subr.mxu0 0.0
  %3124 = vmatpush1.msra.mxu0 0.0
  %3125 = vmatprep.subr.mxu0 0.0
  %3126 = vmatpush1.msra.mxu0 0.0
  %3127 = vmatprep.subr.mxu0 0.0
  %3128 = vmatpush1.msra.mxu0 0.0
  %3129 = vmatprep.subr.mxu0 0.0
  %3130 = vmatpush1.msra.mxu0 0.0
  %3131 = vmatprep.subr.mxu0 0.0
  %3132 = vmatpush1.msra.mxu0 0.0
  %3133 = vmatprep.subr.mxu0 0.0
  %3134 = vmatpush1.msra.mxu0 0.0
  %3135 = vmatprep.subr.mxu0 0.0
  %3136 = vmatpush1.msra.mxu0 0.0
  %3137 = vmatprep.subr.mxu0 0.0
  %3138 = vmatpush1.msra.mxu0 0.0
  %3139 = vmatprep.subr.mxu0 0.0
  %3140 = vmatpush1.msra.mxu0 0.0
  %3141 = vmatprep.subr.mxu0 0.0
  %3142 = vmatpush1.msra.mxu0 0.0
  %3143 = vmatprep.subr.mxu0 0.0
  %3144 = vmatpush1.msra.mxu0 0.0
  %3145 = vmatprep.subr.mxu0 0.0
  %3146 = vmatpush1.msra.mxu0 0.0
  %3147 = vmatprep.subr.mxu0 0.0
  %3148 = vmatpush1.msra.mxu0 0.0
  %3149 = vmatprep.subr.mxu0 0.0
  %3150 = vmatpush1.msra.mxu0 0.0
  %3151 = vmatprep.mubr.f32.mxu0 0.0
  %3152 = vmatmul.mubr.f32.gmra.mrb[0].mxu0 %v3061
  %v3153 = vpop.f32.mrb[0].mxu0
  %v3154 = vadd.f32 %v3086, %v3153
  %v3155 = vpop.f32.mrb[0].mxu0
  %3156 = vmatprep.mubr.f32.mxu0 0.0
  %3157 = vmatmul.mubr.f32.gmra.mrb[0].mxu0 %v3062
  %v3158 = vpop.f32.mrb[0].mxu0
  %v3159 = vadd.f32 %v3086, %v3158
  %v3160 = vpop.f32.mrb[0].mxu0
  %3161 = vmatprep.mubr.f32.mxu0 0.0
  %3162 = vmatmul.mubr.f32.gmra.mrb[0].mxu0 %v3063
  %v3163 = vpop.f32.mrb[0].mxu0
  %v3164 = vadd.f32 %v3086, %v3163
  %v3165 = vpop.f32.mrb[0].mxu0
  %3166 = vmatprep.mubr.f32.mxu0 0.0
  %3167 = vmatmul.mubr.f32.gmra.mrb[0].mxu0 %v3064
  %v3168 = vpop.f32.mrb[0].mxu0
  %v3169 = vadd.f32 %v3086, %v3168
  %v3170 = vpop.f32.mrb[0].mxu0
  %3171 = vdwg.mxu0
  %v3172 = vadd.f32 %v2934, %v3154
  %v3173 = vadd.f32 %v2935, %v3159
  %v3174 = vadd.f32 %v2936, %v3164
  %v3175 = vadd.f32 %v2937, %v3169
  %v3176 = vld [vmem:[%s2 + $0x2] sm:$0x1]
  %v3177 = vld [vmem:[%s2 + $0x3] sm:$0x1]
  %v3178 = vsel %vm152, %v3172, 0.0
  %3179 = vadd.xlane.f32.xlu0 %v3178
  %v3180 = vpop.xlane.xlu0 %3179
  %v3181 = vsel %vm152, %v3173, 0.0
  %3182 = vadd.xlane.f32.xlu0 %v3181
  %v3183 = vpop.xlane.xlu0 %3182
  %v3184 = vsel %vm152, %v3174, 0.0
  %3185 = vadd.xlane.f32.xlu0 %v3184
  %v3186 = vpop.xlane.xlu0 %3185
  %v3187 = vsel %vm152, %v3175, 0.0
  %3188 = vadd.xlane.f32.xlu0 %v3187
  %v3189 = vpop.xlane.xlu0 %3188
  %v3190 = vmul.f32 %v3180, %v185
  %v3191 = vmul.f32 %v3183, %v185
  %v3192 = vmul.f32 %v3186, %v185
  %v3193 = vmul.f32 %v3189, %v185
  %v3194 = vsub.f32 %v3172, %v3190
  %v3195 = vsub.f32 %v3173, %v3191
  %v3196 = vsub.f32 %v3174, %v3192
  %v3197 = vsub.f32 %v3175, %v3193
  %v3198 = vmul.f32 %v3194, %v3194
  %v3199 = vmul.f32 %v3195, %v3195
  %v3200 = vmul.f32 %v3196, %v3196
  %v3201 = vmul.f32 %v3197, %v3197
  %v3202 = vsel %vm152, %v3198, 0.0
  %3203 = vadd.xlane.f32.xlu0 %v3202
  %v3204 = vpop.xlane.xlu0 %3203
  %v3205 = vsel %vm152, %v3199, 0.0
  %3206 = vadd.xlane.f32.xlu0 %v3205
  %v3207 = vpop.xlane.xlu0 %3206
  %v3208 = vsel %vm152, %v3200, 0.0
  %3209 = vadd.xlane.f32.xlu0 %v3208
  %v3210 = vpop.xlane.xlu0 %3209
  %v3211 = vsel %vm152, %v3201, 0.0
  %3212 = vadd.xlane.f32.xlu0 %v3211
  %v3213 = vpop.xlane.xlu0 %3212
  %v3214 = vmul.f32 %v3204, %v185
  %v3215 = vmul.f32 %v3207, %v185
  %v3216 = vmul.f32 %v3210, %v185
  %v3217 = vmul.f32 %v3213, %v185
  %v3218 = vadd.f32 %v3214, 1e-05
  %v3219 = vadd.f32 %v3215, 1e-05
  %v3220 = vadd.f32 %v3216, 1e-05
  %v3221 = vadd.f32 %v3217, 1e-05
  %v3222 = vrsqrt.pop %v3218
  %v3223 = vrsqrt.pop %v3219
  %v3224 = vrsqrt.pop %v3220
  %v3225 = vrsqrt.pop %v3221
  %v3226 = vmul.f32 %v3194, %v3222
  %v3227 = vmul.f32 %v3195, %v3223
  %v3228 = vmul.f32 %v3196, %v3224
  %v3229 = vmul.f32 %v3197, %v3225
  %v3230 = vlaneseq
  %v3231 = vshrl.u32 %v3230, 7
  %v3232 = vsub.s32 0, %v3231
  %v3233 = vrot.slane %v3176, %v3232
  %v3234 = vmul.f32 %v3226, %v3233
  %v3235 = vmul.f32 %v3227, %v3233
  %v3236 = vmul.f32 %v3228, %v3233
  %v3237 = vmul.f32 %v3229, %v3233
  %v3238 = vlaneseq
  %v3239 = vshrl.u32 %v3238, 7
  %v3240 = vsub.s32 0, %v3239
  %v3241 = vrot.slane %v3177, %v3240
  %v3242 = vadd.f32 %v3234, %v3241
  %v3243 = vadd.f32 %v3235, %v3241
  %v3244 = vadd.f32 %v3236, %v3241
  %v3245 = vadd.f32 %v3237, %v3241
  %3246 = vst.msk [vmem:[%s7] sm:$0xff] %vm152, %v3242
  %3247 = vst.msk [vmem:[%s7 + $0x8] sm:$0xff] %vm152, %v3243
  %3248 = vst.msk [vmem:[%s7 + $0x10] sm:$0xff] %vm152, %v3244
  %3249 = vst.msk [vmem:[%s7 + $0x18] sm:$0xff] %vm152, %v3245
  // Predicated region
  $region30: #{dtransformer_for_spatial_forward.1} parent=0 // pred_check
    _
  $region31: #{dtransformer_for_spatial_forward.1} parent=0 // pred_check_branch
    %3251 = sbr.rel (0) target = $region33
  $region32: #{dtransformer_for_spatial_forward.1} parent=0 // pred_region
    _
  $region33: #{dtransformer_for_spatial_forward.1} parent=0 // pred_fallthru
    _
  // Predicated region
  $region34: #{dtransformer_for_spatial_forward.1} parent=0 // pred_check
    _
  $region35: #{dtransformer_for_spatial_forward.1} parent=0 // pred_check_branch
    %3253 = sbr.rel (0) target = $region37
  $region36: #{dtransformer_for_spatial_forward.1} parent=0 // pred_region
    _
  $region37: #{dtransformer_for_spatial_forward.1} parent=0 // pred_fallthru
    _

</llo_original>
